<compile_context>
chip_gen: v5e
topology: v5e:2x2
jax: 0.10.0
libtpu: 0.0.40
codegen_flags: <defaults>
</compile_context>

<pallas_src>
import jax
import jax.numpy as jnp
import numpy as np
from jax.experimental import pallas as pl
from jax.experimental.pallas import tpu as pltpu

GROUPS = 8      # token groups after the reshape
K_IN = 196      # Linear in_features (contraction axis, sublanes)
D = 768         # hidden width (lanes)
REP = 2         # repeat_interleave factor
D_SPLIT = 2     # lane-axis grid split
D_TILE = D // D_SPLIT   # 384 = 3 * 128 (lane-aligned)


def _classifier_kernel(wt_ref, b_ref, x_ref, o_ref):
    # wt_ref: (196, 1)        linear weight, transposed (aligned with x's k axis)
    # b_ref : (1, 1)          bias
    # x_ref : (8, 196, D_TILE) one (batch, lane-chunk) tile
    # o_ref : (8, D_TILE)     lane-dense output slab (full sublanes -> unmasked vst)
    x = x_ref[...].astype(jnp.float32)                       # compute in f32
    w = wt_ref[...]                                          # (196, 1)
    # Weighted reduction over k: VPU multiply + sublane reduce (free under DMA).
    # Deliberately NOT an MXU matmul -- it would be an M=1 matmul and the
    # kernel stays memory-bound either way.
    y = jnp.sum(x * w[None, :, :], axis=1) + b_ref[...]      # (8, D_TILE)
    o_ref[...] = y.astype(o_ref.dtype)


def custom_network_forward(x, weight, bias):
    """x: any float array reshapeable to (-1, 8, 196, 768) (f32 or bf16).
    weight: (1, 196), bias: (1,)  (nn.Linear(196, 1) parameters).
    Returns (B, 16, 768) with out[:, 2h] == out[:, 2h+1]."""
    x = x.reshape(-1, GROUPS, K_IN, D)
    B = x.shape[0]
    wt = weight.reshape(1, K_IN).astype(jnp.float32).T       # (196, 1)
    b2 = bias.reshape(1, 1).astype(jnp.float32)              # (1, 1)

    y = pl.pallas_call(
        _classifier_kernel,
        out_shape=jax.ShapeDtypeStruct((B, GROUPS, D), x.dtype),
        grid=(B, D_SPLIT),
        in_specs=[
            pl.BlockSpec((K_IN, 1), lambda b, d: (0, 0)),                    # weight (shared)
            pl.BlockSpec((1, 1), lambda b, d: (0, 0)),                       # bias (shared)
            pl.BlockSpec((None, GROUPS, K_IN, D_TILE), lambda b, d: (b, 0, 0, d)),  # x tile
        ],
        out_specs=pl.BlockSpec((None, GROUPS, D_TILE), lambda b, d: (b, 0, d)),
        compiler_params=pltpu.CompilerParams(
            dimension_semantics=("parallel", "parallel"),
        ),
    )(wt, b2, x)

    # torch.repeat_interleave(., 2, dim=1): tiny broadcast done by XLA outside
    # the kernel (output is ~1% of total traffic).
    return jnp.repeat(y, REP, axis=1)                        # (B, 16, 768)


def _reference_forward(x, weight, bias):
    x = x.reshape(-1, GROUPS, K_IN, D).astype(jnp.float32)
    x = jnp.transpose(x, (0, 3, 1, 2))                       # (B, 768, 8, 196)
    y = jnp.einsum("bdhk,k->bdh", x, weight[0]) + bias[0]    # (B, 768, 8)
    y = jnp.transpose(y, (0, 2, 1))                          # (B, 8, 768)
    return jnp.repeat(y, REP, axis=1)                        # (B, 16, 768)


if __name__ == "__main__":
    key = jax.random.PRNGKey(0)
    kx, kw, kb = jax.random.split(key, 3)

    B = 2
    # Input consistent with the module's hard-coded reshape(-1, 8, 196, 768).
    x = jax.random.normal(kx, (B, GROUPS, K_IN, D), dtype=jnp.float32)
    # Deterministic nn.Linear(196, 1)-shaped parameters.
    weight = jax.random.normal(kw, (1, K_IN), dtype=jnp.float32) * 0.02
    bias = jax.random.normal(kb, (1,), dtype=jnp.float32) * 0.02

    ref = jax.block_until_ready(_reference_forward(x, weight, bias))

    # f32 path
    out = jax.block_until_ready(custom_network_forward(x, weight, bias))
    assert out.shape == (B, GROUPS * REP, D), out.shape
    np.testing.assert_allclose(np.asarray(out), np.asarray(ref), rtol=1e-4, atol=1e-4)

    # bf16 input path (halves HBM traffic on the only tensor that matters).
    out_bf16 = jax.block_until_ready(
        custom_network_forward(x.astype(jnp.bfloat16), weight, bias))
    assert out_bf16.shape == (B, GROUPS * REP, D), out_bf16.shape
    np.testing.assert_allclose(np.asarray(out_bf16, dtype=np.float32),
                               np.asarray(ref), rtol=5e-2, atol=5e-2)

    print("KERNEL_OK")
</pallas_src>

<mosaic_0001>
module attributes {stable_mosaic.version = 11 : i64} {
  func.func @_classifier_kernel(%arg0: i32, %arg1: i32, %arg2: memref<196x1xf32, #tpu.memory_space<vmem>>, %arg3: memref<1x1xf32, #tpu.memory_space<vmem>>, %arg4: memref<1x8x196x384xf32, #tpu.memory_space<vmem>>, %arg5: memref<1x8x384xf32, #tpu.memory_space<vmem>>) attributes {dimension_semantics = [#tpu.dimension_semantics<parallel>, #tpu.dimension_semantics<parallel>], iteration_bounds = array<i64: 2, 2>, scalar_prefetch = 0 : i64, scratch_operands = 0 : i64, tpu.core_type = #tpu.core_type<tc>, window_params = [{pipeline_mode = #tpu.pipeline_mode<synchronous>, transform_indices = @transform_0, window_bounds = array<i64: 196, 1>}, {pipeline_mode = #tpu.pipeline_mode<synchronous>, transform_indices = @transform_1, window_bounds = array<i64: 1, 1>}, {transform_indices = @transform_2, window_bounds = array<i64: 1, 8, 196, 384>}, {transform_indices = @transform_3, window_bounds = array<i64: 1, 8, 384>}]} {
    %c0 = arith.constant 0 : index
    %c0_0 = arith.constant 0 : index
    %c0_1 = arith.constant 0 : index
    %c0_2 = arith.constant 0 : index
    %0 = vector.load %arg4[%c0, %c0_0, %c0_1, %c0_2] : memref<1x8x196x384xf32, #tpu.memory_space<vmem>>, vector<1x8x196x384xf32>
    %1 = vector.shape_cast %0 : vector<1x8x196x384xf32> to vector<8x196x384xf32>
    %c0_3 = arith.constant 0 : index
    %c0_4 = arith.constant 0 : index
    %2 = vector.load %arg2[%c0_3, %c0_4] : memref<196x1xf32, #tpu.memory_space<vmem>>, vector<196x1xf32>
    %3 = vector.shape_cast %2 : vector<196x1xf32> to vector<1x196x1xf32>
    %4 = vector.broadcast %3 : vector<1x196x1xf32> to vector<8x196x384xf32>
    %5 = arith.mulf %1, %4 : vector<8x196x384xf32>
    %cst = arith.constant dense<0.000000e+00> : vector<8x384xf32>
    %6 = vector.multi_reduction <add>, %5, %cst [1] : vector<8x196x384xf32> to vector<8x384xf32>
    %c0_5 = arith.constant 0 : index
    %c0_6 = arith.constant 0 : index
    %7 = vector.load %arg3[%c0_5, %c0_6] : memref<1x1xf32, #tpu.memory_space<vmem>>, vector<1x1xf32>
    %8 = vector.broadcast %7 : vector<1x1xf32> to vector<8x384xf32>
    %9 = arith.addf %6, %8 : vector<8x384xf32>
    %c0_7 = arith.constant 0 : index
    %c0_8 = arith.constant 0 : index
    %c0_9 = arith.constant 0 : index
    %10 = vector.load %arg5[%c0_7, %c0_8, %c0_9] : memref<1x8x384xf32, #tpu.memory_space<vmem>>, vector<1x8x384xf32>
    %11 = vector.shape_cast %10 : vector<1x8x384xf32> to vector<8x384xf32>
    %12 = vector.shape_cast %9 : vector<8x384xf32> to vector<1x8x384xf32>
    tpu.vector_store %arg5[%c0_7, %c0_8, %c0_9], %12 {strides = array<i32>} : memref<1x8x384xf32, #tpu.memory_space<vmem>>, vector<1x8x384xf32>,
    return
  }
  func.func @transform_0(%arg0: i32, %arg1: i32) -> (i32, i32) {
    %c0_i32 = arith.constant 0 : i32
    %c0_i32_0 = arith.constant 0 : i32
    %c0_i32_1 = arith.constant 0 : i32
    return %c0_i32, %c0_i32_0 : i32, i32
  }
  func.func @transform_1(%arg0: i32, %arg1: i32) -> (i32, i32) {
    %c0_i32 = arith.constant 0 : i32
    %c0_i32_0 = arith.constant 0 : i32
    %c0_i32_1 = arith.constant 0 : i32
    return %c0_i32, %c0_i32_0 : i32, i32
  }
  func.func @transform_2(%arg0: i32, %arg1: i32) -> (i32, i32, i32, i32) {
    %c0_i32 = arith.constant 0 : i32
    %c0_i32_0 = arith.constant 0 : i32
    %c0_i32_1 = arith.constant 0 : i32
    return %arg0, %c0_i32, %c0_i32_0, %arg1 : i32, i32, i32, i32
  }
  func.func @transform_3(%arg0: i32, %arg1: i32) -> (i32, i32, i32) {
    %c0_i32 = arith.constant 0 : i32
    %c0_i32_0 = arith.constant 0 : i32
    return %arg0, %c0_i32, %arg1 : i32, i32, i32
  }
}

</mosaic_0001>

<llo_original>
// kernel: tpu_custom_call.1
$region0: #{tpu_custom_call.1}
  #allocation0 [shape = 'u32[]', space=smem, size = 0x4, offset = 0x4, fixed_abs, tag = 'smem constant byte address 0x4 - core index']
  #allocation1 [shape = 'u32[72,128]{1,0:T(1,128)}', space=vmem, size = 0x9000, scoped, tag = 'internal scratch']
  #allocation2 [shape = 'f32[1,1]{1,0:T(1,128)S(1)}', space=vmem, size = 0x200, scoped, tag = 'scoped memory for tpu_custom_call.1']
  %s0 = inlined_call_operand.vmem [shape: f32[196,1], index: 0, kind: input, shape index: {}]
  %s1 = inlined_call_operand.<no memory space> [shape: f32[1,1], index: 1, kind: input, shape index: {}]
  %s2 = inlined_call_operand.vmem [shape: f32[2,8,196,768], index: 2, kind: input, shape index: {}]
  %s3 = inlined_call_operand.hbm [shape: f32[2,8,768], index: 3, kind: output, shape index: {}]
  %s4 = sld [smem:[#allocation0]]
  $region68: #{tpu_custom_call.1} parent=0
    _
  %s6 = ssub.s32 1, %s4
  %s7 = scalar_select 0, %s6, %s4
  %v8 = vstv %s1
  %9 = vst [vmem:[#allocation2] sm:$0x1] %v8
  $region1: #{tpu_custom_call.1} parent=0
    #allocation3 [shape = 'u8[4915200]{0}', space=vmem, size = 0x4b0000, scoped, tag = 'input window, operand 2']
    #allocation4 [shape = 'u8[24576]{0}', space=vmem, size = 0x6000, scoped, tag = 'output window, operand 0']
    #allocation5 [shape = 's32[2]{0}', space=sflag, size = 0x8, scoped, tag = 'scoped memory for tpu_custom_call.1']
    %10 = vsyncpa [#allocation5], 0
    %s11 = scalar_lea.sflag [#allocation5], 1
    %12 = vsyncpa %s11, 0
    loop: start=0, step=1, limit=6
    $region2: #{tpu_custom_call.1} parent=1 // loop_pre_header
      _
    $region3: #{tpu_custom_call.1} parent=1 // loop_header
      %s14 = sphi 0, %s18
      %p15 = scmp.ge.s32.totalorder %s14, 6
      %s21 = sphi 0, %s33
      %s22 = sphi 0, %s29
      %s23 = sphi 0, %s21
      %s24 = sphi 0, %s22
      %s25 = sphi 0, %s23
      %s26 = sphi 0, %s24
      %s34 = sphi 0, %s34
      %s36 = sphi 0, %s34
      %s37 = sphi 0, %s36
      %s51 = sphi 0, %s37
      %s55 = sphi 0, %s55
      %s57 = sphi 0, %s55
      %s58 = sphi 0, %s57
      %s72 = sphi 0, %s58
      %s80 = sphi 0, %s82
      %s83 = sphi 0, %s80
      %s84 = sphi 0, %s83
      %s100 = sphi 0, %s84
      %s108 = sphi 0, %s110
      %s111 = sphi 0, %s108
      %s112 = sphi 0, %s111
      %s128 = sphi 0, %s112
    $region4: #{tpu_custom_call.1} parent=1 // loop_header_branch
      %17 = sbr.rel (%p15) target = $region8
    $region5: #{tpu_custom_call.1} parent=1 // loop_body
      %s19 = ssub.s32 %s14, 1
      %s20 = ssub.s32 %s14, 2
      %s27 = sadd.s32 1, %s22
      %p28 = scmp.ge.s32.totalorder %s27, 2
      %s29 = scalar_select %p28, 0, %s27
      %s30 = sadd.s32 1, %s21
      %s31 = scalar_select %p28, %s30, %s21
      %p32 = scmp.ge.s32.totalorder %s31, 2
      %s33 = scalar_select %p32, 0, %s31
      %s35 = sadd.s32 %s34, 1
      %p38 = scmp.eq.s32.totalorder %s14, 3
      %p39 = scmp.ne.s32.totalorder %s34, %s36
      %p40 = scmp.eq.s32.totalorder %s14, 0
      %p41 = por %p39, %p40
      %p42 = scmp.ne.s32.totalorder %s34, %s36
      %p43 = scmp.eq.s32.totalorder %s19, 3
      %p44 = por %p42, %p43
      %p45 = scmp.ne.s32.totalorder %s36, %s37
      %p46 = scmp.eq.s32.totalorder %s19, 0
      %p47 = por %p45, %p46
      %p48 = scmp.ne.s32.totalorder %s36, %s37
      %p49 = scmp.eq.s32.totalorder %s20, 3
      %p50 = por %p48, %p49
      %p52 = scmp.ne.s32.totalorder %s37, %s51
      %p53 = scmp.eq.s32.totalorder %s20, 0
      %p54 = por %p52, %p53
      %s56 = sadd.s32 %s55, 1
      %p59 = scmp.eq.s32.totalorder %s14, 3
      %p60 = scmp.ne.s32.totalorder %s55, %s57
      %p61 = scmp.eq.s32.totalorder %s14, 0
      %p62 = por %p60, %p61
      %p63 = scmp.ne.s32.totalorder %s55, %s57
      %p64 = scmp.eq.s32.totalorder %s19, 3
      %p65 = por %p63, %p64
      %p66 = scmp.ne.s32.totalorder %s57, %s58
      %p67 = scmp.eq.s32.totalorder %s19, 0
      %p68 = por %p66, %p67
      %p69 = scmp.ne.s32.totalorder %s57, %s58
      %p70 = scmp.eq.s32.totalorder %s20, 3
      %p71 = por %p69, %p70
      %p73 = scmp.ne.s32.totalorder %s58, %s72
      %p74 = scmp.eq.s32.totalorder %s20, 0
      %p75 = por %p73, %p74
      %s76 = ssub.s32 %s21, %s33
      %s77 = ssub.s32 %s22, %s29
      %s78 = sor.u32 %s76, %s77
      %p79 = scmp.eq.s32.totalorder %s78, 0
      %s81 = sadd.s32 %s80, 1
      %s82 = scalar_select %p79, %s80, %s81
      %p85 = pneg %p79
      %p86 = scmp.eq.s32.totalorder %s14, 3
      %p87 = por %p85, %p86
      %p88 = scmp.ne.s32.totalorder %s80, %s83
      %p89 = scmp.eq.s32.totalorder %s14, 0
      %p90 = por %p88, %p89
      %p91 = scmp.ne.s32.totalorder %s80, %s83
      %p92 = scmp.eq.s32.totalorder %s19, 3
      %p93 = por %p91, %p92
      %p94 = scmp.ne.s32.totalorder %s83, %s84
      %p95 = scmp.eq.s32.totalorder %s19, 0
      %p96 = por %p94, %p95
      %p97 = scmp.ne.s32.totalorder %s83, %s84
      %p98 = scmp.eq.s32.totalorder %s20, 3
      %p99 = por %p97, %p98
      %p101 = scmp.ne.s32.totalorder %s84, %s100
      %p102 = scmp.eq.s32.totalorder %s20, 0
      %p103 = por %p101, %p102
      %s104 = ssub.s32 %s21, %s33
      %s105 = ssub.s32 %s22, %s29
      %s106 = sor.u32 %s104, %s105
      %p107 = scmp.eq.s32.totalorder %s106, 0
      %s109 = sadd.s32 %s108, 1
      %s110 = scalar_select %p107, %s108, %s109
      %p113 = pneg %p107
      %p114 = scmp.eq.s32.totalorder %s14, 3
      %p115 = por %p113, %p114
      %p116 = scmp.ne.s32.totalorder %s108, %s111
      %p117 = scmp.eq.s32.totalorder %s14, 0
      %p118 = por %p116, %p117
      %p119 = scmp.ne.s32.totalorder %s108, %s111
      %p120 = scmp.eq.s32.totalorder %s19, 3
      %p121 = por %p119, %p120
      %p122 = scmp.ne.s32.totalorder %s111, %s112
      %p123 = scmp.eq.s32.totalorder %s19, 0
      %p124 = por %p122, %p123
      %p125 = scmp.ne.s32.totalorder %s111, %s112
      %p126 = scmp.eq.s32.totalorder %s20, 3
      %p127 = por %p125, %p126
      %p129 = scmp.ne.s32.totalorder %s112, %s128
      %p130 = scmp.eq.s32.totalorder %s20, 0
      %p131 = por %p129, %p130
      %p132 = scmp.le.s32.totalorder 1, %s14
      %p133 = scmp.lt.s32.totalorder %s14, 5
      %p134 = pnand %p132, %p133
      %p135 = pneg %p134
      // Predicated region
      $region9: #{tpu_custom_call.1} parent=5 // pred_check
        _
      $region10: #{tpu_custom_call.1} parent=5 // pred_check_branch
        %137 = sbr.rel (%p134) target = $region12
      $region11: #{tpu_custom_call.1} parent=5 // pred_region
        %s138 = ssub.s32 %s14, 1
        // Predicated region
        $region13: #{tpu_custom_call.1} parent=11 // pred_check
          %p139 = pneg %p47
        $region14: #{tpu_custom_call.1} parent=11 // pred_check_branch
          %141 = sbr.rel (%p139) target = $region16
        $region15: #{tpu_custom_call.1} parent=11 // pred_region
          _
        $region16: #{tpu_custom_call.1} parent=11 // pred_fallthru
          _
        // Predicated region
        $region17: #{tpu_custom_call.1} parent=11 // pred_check
          %p142 = pneg %p68
        $region18: #{tpu_custom_call.1} parent=11 // pred_check_branch
          %144 = sbr.rel (%p142) target = $region20
        $region19: #{tpu_custom_call.1} parent=11 // pred_region
          _
        $region20: #{tpu_custom_call.1} parent=11 // pred_fallthru
          _
      $region12: #{tpu_custom_call.1} parent=5 // pred_fallthru
        _
      %p145 = scmp.lt.s32.totalorder %s14, 4
      // Predicated region
      $region21: #{tpu_custom_call.1} parent=5 // pred_check
        %p146 = pneg %p145
      $region22: #{tpu_custom_call.1} parent=5 // pred_check_branch
        %148 = sbr.rel (%p146) target = $region24
      $region23: #{tpu_custom_call.1} parent=5 // pred_region
        // Predicated region
        $region25: #{tpu_custom_call.1} parent=23 // pred_check
          %p149 = pneg %p90
        $region26: #{tpu_custom_call.1} parent=23 // pred_check_branch
          %151 = sbr.rel (%p149) target = $region28
        $region27: #{tpu_custom_call.1} parent=23 // pred_region
          %s152 = sand.u32 %s80, 1
          %s153 = sand.u32 %s80, 1
          %s154 = smul.addr %s153, 4800
          %s155 = scalar_lea.vmem [#allocation3], %s154
          %s156 = smul.u32 3, %s22
          %s157 = smul.addr %s21, 1200
          %s158 = sadd.s32 %s156, %s157
          %s159 = smul.addr %s158, 8
          %s160 = scalar_lea.vmem %s2, %s159
          // Predicated region
          $region29: #{tpu_custom_call.1} parent=27 // pred_check
            _
          $region30: #{tpu_custom_call.1} parent=27 // pred_check_branch
            %162 = sbr.rel (0) target = $region32
          $region31: #{tpu_custom_call.1} parent=27 // pred_region
            // Predicated region
            $region33: #{tpu_custom_call.1} parent=31 // pred_check
              _
            $region34: #{tpu_custom_call.1} parent=31 // pred_check_branch
              %164 = sbr.rel (0) target = $region36
            $region35: #{tpu_custom_call.1} parent=31 // pred_region
              loop: start=0, step=1, limit=1
              $region37: #{tpu_custom_call.1} parent=35 // loop_pre_header
                _
              $region38: #{tpu_custom_call.1} parent=35 // loop_header
                %s166 = sphi 0, %s170
                %p167 = scmp.ge.s32.totalorder %s166, 1
                %s171 = sphi %s160, %s160
                %s172 = sphi %s155, %s155
              $region39: #{tpu_custom_call.1} parent=35 // loop_header_branch
                %169 = sbr.rel (%p167) target = $region43
              $region40: #{tpu_custom_call.1} parent=35 // loop_body
                %v173 = vld [vmem:[%s171] sm:$0xff]
                %174 = vst [vmem:[%s172] sm:$0xff] %v173
                %v175 = vld [vmem:[%s171 + $0x8] sm:$0xff]
                %176 = vst [vmem:[%s172 + $0x8] sm:$0xff] %v175
                %v177 = vld [vmem:[%s171 + $0x10] sm:$0xff]
                %178 = vst [vmem:[%s172 + $0x10] sm:$0xff] %v177
                %v179 = vld [vmem:[%s171 + $0x30] sm:$0xff]
                %180 = vst [vmem:[%s172 + $0x18] sm:$0xff] %v179
                %v181 = vld [vmem:[%s171 + $0x38] sm:$0xff]
                %182 = vst [vmem:[%s172 + $0x20] sm:$0xff] %v181
                %v183 = vld [vmem:[%s171 + $0x40] sm:$0xff]
                %184 = vst [vmem:[%s172 + $0x28] sm:$0xff] %v183
                %v185 = vld [vmem:[%s171 + $0x60] sm:$0xff]
                %186 = vst [vmem:[%s172 + $0x30] sm:$0xff] %v185
                %v187 = vld [vmem:[%s171 + $0x68] sm:$0xff]
                %188 = vst [vmem:[%s172 + $0x38] sm:$0xff] %v187
                %v189 = vld [vmem:[%s171 + $0x70] sm:$0xff]
                %190 = vst [vmem:[%s172 + $0x40] sm:$0xff] %v189
                %v191 = vld [vmem:[%s171 + $0x90] sm:$0xff]
                %192 = vst [vmem:[%s172 + $0x48] sm:$0xff] %v191
                %v193 = vld [vmem:[%s171 + $0x98] sm:$0xff]
                %194 = vst [vmem:[%s172 + $0x50] sm:$0xff] %v193
                %v195 = vld [vmem:[%s171 + $0xa0] sm:$0xff]
                %196 = vst [vmem:[%s172 + $0x58] sm:$0xff] %v195
                %v197 = vld [vmem:[%s171 + $0xc0] sm:$0xff]
                %198 = vst [vmem:[%s172 + $0x60] sm:$0xff] %v197
                %v199 = vld [vmem:[%s171 + $0xc8] sm:$0xff]
                %200 = vst [vmem:[%s172 + $0x68] sm:$0xff] %v199
                %v201 = vld [vmem:[%s171 + $0xd0] sm:$0xff]
                %202 = vst [vmem:[%s172 + $0x70] sm:$0xff] %v201
                %v203 = vld [vmem:[%s171 + $0xf0] sm:$0xff]
                %204 = vst [vmem:[%s172 + $0x78] sm:$0xff] %v203
                %v205 = vld [vmem:[%s171 + $0xf8] sm:$0xff]
                %206 = vst [vmem:[%s172 + $0x80] sm:$0xff] %v205
                %v207 = vld [vmem:[%s171 + $0x100] sm:$0xff]
                %208 = vst [vmem:[%s172 + $0x88] sm:$0xff] %v207
                %v209 = vld [vmem:[%s171 + $0x120] sm:$0xff]
                %210 = vst [vmem:[%s172 + $0x90] sm:$0xff] %v209
                %v211 = vld [vmem:[%s171 + $0x128] sm:$0xff]
                %212 = vst [vmem:[%s172 + $0x98] sm:$0xff] %v211
                %v213 = vld [vmem:[%s171 + $0x130] sm:$0xff]
                %214 = vst [vmem:[%s172 + $0xa0] sm:$0xff] %v213
                %v215 = vld [vmem:[%s171 + $0x150] sm:$0xff]
                %216 = vst [vmem:[%s172 + $0xa8] sm:$0xff] %v215
                %v217 = vld [vmem:[%s171 + $0x158] sm:$0xff]
                %218 = vst [vmem:[%s172 + $0xb0] sm:$0xff] %v217
                %v219 = vld [vmem:[%s171 + $0x160] sm:$0xff]
                %220 = vst [vmem:[%s172 + $0xb8] sm:$0xff] %v219
                %v221 = vld [vmem:[%s171 + $0x180] sm:$0xff]
                %222 = vst [vmem:[%s172 + $0xc0] sm:$0xff] %v221
                %v223 = vld [vmem:[%s171 + $0x188] sm:$0xff]
                %224 = vst [vmem:[%s172 + $0xc8] sm:$0xff] %v223
                %v225 = vld [vmem:[%s171 + $0x190] sm:$0xff]
                %226 = vst [vmem:[%s172 + $0xd0] sm:$0xff] %v225
                %v227 = vld [vmem:[%s171 + $0x1b0] sm:$0xff]
                %228 = vst [vmem:[%s172 + $0xd8] sm:$0xff] %v227
                %v229 = vld [vmem:[%s171 + $0x1b8] sm:$0xff]
                %230 = vst [vmem:[%s172 + $0xe0] sm:$0xff] %v229
                %v231 = vld [vmem:[%s171 + $0x1c0] sm:$0xff]
                %232 = vst [vmem:[%s172 + $0xe8] sm:$0xff] %v231
                %v233 = vld [vmem:[%s171 + $0x1e0] sm:$0xff]
                %234 = vst [vmem:[%s172 + $0xf0] sm:$0xff] %v233
                %v235 = vld [vmem:[%s171 + $0x1e8] sm:$0xff]
                %236 = vst [vmem:[%s172 + $0xf8] sm:$0xff] %v235
                %v237 = vld [vmem:[%s171 + $0x1f0] sm:$0xff]
                %238 = vst [vmem:[%s172 + $0x100] sm:$0xff] %v237
                %v239 = vld [vmem:[%s171 + $0x210] sm:$0xff]
                %240 = vst [vmem:[%s172 + $0x108] sm:$0xff] %v239
                %v241 = vld [vmem:[%s171 + $0x218] sm:$0xff]
                %242 = vst [vmem:[%s172 + $0x110] sm:$0xff] %v241
                %v243 = vld [vmem:[%s171 + $0x220] sm:$0xff]
                %244 = vst [vmem:[%s172 + $0x118] sm:$0xff] %v243
                %v245 = vld [vmem:[%s171 + $0x240] sm:$0xff]
                %246 = vst [vmem:[%s172 + $0x120] sm:$0xff] %v245
                %v247 = vld [vmem:[%s171 + $0x248] sm:$0xff]
                %248 = vst [vmem:[%s172 + $0x128] sm:$0xff] %v247
                %v249 = vld [vmem:[%s171 + $0x250] sm:$0xff]
                %250 = vst [vmem:[%s172 + $0x130] sm:$0xff] %v249
                %v251 = vld [vmem:[%s171 + $0x270] sm:$0xff]
                %252 = vst [vmem:[%s172 + $0x138] sm:$0xff] %v251
                %v253 = vld [vmem:[%s171 + $0x278] sm:$0xff]
                %254 = vst [vmem:[%s172 + $0x140] sm:$0xff] %v253
                %v255 = vld [vmem:[%s171 + $0x280] sm:$0xff]
                %256 = vst [vmem:[%s172 + $0x148] sm:$0xff] %v255
                %v257 = vld [vmem:[%s171 + $0x2a0] sm:$0xff]
                %258 = vst [vmem:[%s172 + $0x150] sm:$0xff] %v257
                %v259 = vld [vmem:[%s171 + $0x2a8] sm:$0xff]
                %260 = vst [vmem:[%s172 + $0x158] sm:$0xff] %v259
                %v261 = vld [vmem:[%s171 + $0x2b0] sm:$0xff]
                %262 = vst [vmem:[%s172 + $0x160] sm:$0xff] %v261
                %v263 = vld [vmem:[%s171 + $0x2d0] sm:$0xff]
                %264 = vst [vmem:[%s172 + $0x168] sm:$0xff] %v263
                %v265 = vld [vmem:[%s171 + $0x2d8] sm:$0xff]
                %266 = vst [vmem:[%s172 + $0x170] sm:$0xff] %v265
                %v267 = vld [vmem:[%s171 + $0x2e0] sm:$0xff]
                %268 = vst [vmem:[%s172 + $0x178] sm:$0xff] %v267
                %v269 = vld [vmem:[%s171 + $0x300] sm:$0xff]
                %270 = vst [vmem:[%s172 + $0x180] sm:$0xff] %v269
                %v271 = vld [vmem:[%s171 + $0x308] sm:$0xff]
                %272 = vst [vmem:[%s172 + $0x188] sm:$0xff] %v271
                %v273 = vld [vmem:[%s171 + $0x310] sm:$0xff]
                %274 = vst [vmem:[%s172 + $0x190] sm:$0xff] %v273
                %v275 = vld [vmem:[%s171 + $0x330] sm:$0xff]
                %276 = vst [vmem:[%s172 + $0x198] sm:$0xff] %v275
                %v277 = vld [vmem:[%s171 + $0x338] sm:$0xff]
                %278 = vst [vmem:[%s172 + $0x1a0] sm:$0xff] %v277
                %v279 = vld [vmem:[%s171 + $0x340] sm:$0xff]
                %280 = vst [vmem:[%s172 + $0x1a8] sm:$0xff] %v279
                %v281 = vld [vmem:[%s171 + $0x360] sm:$0xff]
                %282 = vst [vmem:[%s172 + $0x1b0] sm:$0xff] %v281
                %v283 = vld [vmem:[%s171 + $0x368] sm:$0xff]
                %284 = vst [vmem:[%s172 + $0x1b8] sm:$0xff] %v283
                %v285 = vld [vmem:[%s171 + $0x370] sm:$0xff]
                %286 = vst [vmem:[%s172 + $0x1c0] sm:$0xff] %v285
                %v287 = vld [vmem:[%s171 + $0x390] sm:$0xff]
                %288 = vst [vmem:[%s172 + $0x1c8] sm:$0xff] %v287
                %v289 = vld [vmem:[%s171 + $0x398] sm:$0xff]
                %290 = vst [vmem:[%s172 + $0x1d0] sm:$0xff] %v289
                %v291 = vld [vmem:[%s171 + $0x3a0] sm:$0xff]
                %292 = vst [vmem:[%s172 + $0x1d8] sm:$0xff] %v291
                %v293 = vld [vmem:[%s171 + $0x3c0] sm:$0xff]
                %294 = vst [vmem:[%s172 + $0x1e0] sm:$0xff] %v293
                %v295 = vld [vmem:[%s171 + $0x3c8] sm:$0xff]
                %296 = vst [vmem:[%s172 + $0x1e8] sm:$0xff] %v295
                %v297 = vld [vmem:[%s171 + $0x3d0] sm:$0xff]
                %298 = vst [vmem:[%s172 + $0x1f0] sm:$0xff] %v297
                %v299 = vld [vmem:[%s171 + $0x3f0] sm:$0xff]
                %300 = vst [vmem:[%s172 + $0x1f8] sm:$0xff] %v299
                %v301 = vld [vmem:[%s171 + $0x3f8] sm:$0xff]
                %302 = vst [vmem:[%s172 + $0x200] sm:$0xff] %v301
                %v303 = vld [vmem:[%s171 + $0x400] sm:$0xff]
                %304 = vst [vmem:[%s172 + $0x208] sm:$0xff] %v303
                %v305 = vld [vmem:[%s171 + $0x420] sm:$0xff]
                %306 = vst [vmem:[%s172 + $0x210] sm:$0xff] %v305
                %v307 = vld [vmem:[%s171 + $0x428] sm:$0xff]
                %308 = vst [vmem:[%s172 + $0x218] sm:$0xff] %v307
                %v309 = vld [vmem:[%s171 + $0x430] sm:$0xff]
                %310 = vst [vmem:[%s172 + $0x220] sm:$0xff] %v309
                %v311 = vld [vmem:[%s171 + $0x450] sm:$0xff]
                %312 = vst [vmem:[%s172 + $0x228] sm:$0xff] %v311
                %v313 = vld [vmem:[%s171 + $0x458] sm:$0xff]
                %314 = vst [vmem:[%s172 + $0x230] sm:$0xff] %v313
                %v315 = vld [vmem:[%s171 + $0x460] sm:$0xff]
                %316 = vst [vmem:[%s172 + $0x238] sm:$0xff] %v315
                %v317 = vld [vmem:[%s171 + $0x480] sm:$0xff]
                %318 = vst [vmem:[%s172 + $0x240] sm:$0xff] %v317
                %v319 = vld [vmem:[%s171 + $0x488] sm:$0xff]
                %320 = vst [vmem:[%s172 + $0x248] sm:$0xff] %v319
                %v321 = vld [vmem:[%s171 + $0x490] sm:$0xff]
                %322 = vst [vmem:[%s172 + $0x250] sm:$0xff] %v321
                %v323 = vld [vmem:[%s171 + $0x4b0] sm:$0xff]
                %324 = vst [vmem:[%s172 + $0x258] sm:$0xff] %v323
                %v325 = vld [vmem:[%s171 + $0x4b8] sm:$0xff]
                %326 = vst [vmem:[%s172 + $0x260] sm:$0xff] %v325
                %v327 = vld [vmem:[%s171 + $0x4c0] sm:$0xff]
                %328 = vst [vmem:[%s172 + $0x268] sm:$0xff] %v327
                %v329 = vld [vmem:[%s171 + $0x4e0] sm:$0xff]
                %330 = vst [vmem:[%s172 + $0x270] sm:$0xff] %v329
                %v331 = vld [vmem:[%s171 + $0x4e8] sm:$0xff]
                %332 = vst [vmem:[%s172 + $0x278] sm:$0xff] %v331
                %v333 = vld [vmem:[%s171 + $0x4f0] sm:$0xff]
                %334 = vst [vmem:[%s172 + $0x280] sm:$0xff] %v333
                %v335 = vld [vmem:[%s171 + $0x510] sm:$0xff]
                %336 = vst [vmem:[%s172 + $0x288] sm:$0xff] %v335
                %v337 = vld [vmem:[%s171 + $0x518] sm:$0xff]
                %338 = vst [vmem:[%s172 + $0x290] sm:$0xff] %v337
                %v339 = vld [vmem:[%s171 + $0x520] sm:$0xff]
                %340 = vst [vmem:[%s172 + $0x298] sm:$0xff] %v339
                %v341 = vld [vmem:[%s171 + $0x540] sm:$0xff]
                %342 = vst [vmem:[%s172 + $0x2a0] sm:$0xff] %v341
                %v343 = vld [vmem:[%s171 + $0x548] sm:$0xff]
                %344 = vst [vmem:[%s172 + $0x2a8] sm:$0xff] %v343
                %v345 = vld [vmem:[%s171 + $0x550] sm:$0xff]
                %346 = vst [vmem:[%s172 + $0x2b0] sm:$0xff] %v345
                %v347 = vld [vmem:[%s171 + $0x570] sm:$0xff]
                %348 = vst [vmem:[%s172 + $0x2b8] sm:$0xff] %v347
                %v349 = vld [vmem:[%s171 + $0x578] sm:$0xff]
                %350 = vst [vmem:[%s172 + $0x2c0] sm:$0xff] %v349
                %v351 = vld [vmem:[%s171 + $0x580] sm:$0xff]
                %352 = vst [vmem:[%s172 + $0x2c8] sm:$0xff] %v351
                %v353 = vld [vmem:[%s171 + $0x5a0] sm:$0xff]
                %354 = vst [vmem:[%s172 + $0x2d0] sm:$0xff] %v353
                %v355 = vld [vmem:[%s171 + $0x5a8] sm:$0xff]
                %356 = vst [vmem:[%s172 + $0x2d8] sm:$0xff] %v355
                %v357 = vld [vmem:[%s171 + $0x5b0] sm:$0xff]
                %358 = vst [vmem:[%s172 + $0x2e0] sm:$0xff] %v357
                %v359 = vld [vmem:[%s171 + $0x5d0] sm:$0xff]
                %360 = vst [vmem:[%s172 + $0x2e8] sm:$0xff] %v359
                %v361 = vld [vmem:[%s171 + $0x5d8] sm:$0xff]
                %362 = vst [vmem:[%s172 + $0x2f0] sm:$0xff] %v361
                %v363 = vld [vmem:[%s171 + $0x5e0] sm:$0xff]
                %364 = vst [vmem:[%s172 + $0x2f8] sm:$0xff] %v363
                %v365 = vld [vmem:[%s171 + $0x600] sm:$0xff]
                %366 = vst [vmem:[%s172 + $0x300] sm:$0xff] %v365
                %v367 = vld [vmem:[%s171 + $0x608] sm:$0xff]
                %368 = vst [vmem:[%s172 + $0x308] sm:$0xff] %v367
                %v369 = vld [vmem:[%s171 + $0x610] sm:$0xff]
                %370 = vst [vmem:[%s172 + $0x310] sm:$0xff] %v369
                %v371 = vld [vmem:[%s171 + $0x630] sm:$0xff]
                %372 = vst [vmem:[%s172 + $0x318] sm:$0xff] %v371
                %v373 = vld [vmem:[%s171 + $0x638] sm:$0xff]
                %374 = vst [vmem:[%s172 + $0x320] sm:$0xff] %v373
                %v375 = vld [vmem:[%s171 + $0x640] sm:$0xff]
                %376 = vst [vmem:[%s172 + $0x328] sm:$0xff] %v375
                %v377 = vld [vmem:[%s171 + $0x660] sm:$0xff]
                %378 = vst [vmem:[%s172 + $0x330] sm:$0xff] %v377
                %v379 = vld [vmem:[%s171 + $0x668] sm:$0xff]
                %380 = vst [vmem:[%s172 + $0x338] sm:$0xff] %v379
                %v381 = vld [vmem:[%s171 + $0x670] sm:$0xff]
                %382 = vst [vmem:[%s172 + $0x340] sm:$0xff] %v381
                %v383 = vld [vmem:[%s171 + $0x690] sm:$0xff]
                %384 = vst [vmem:[%s172 + $0x348] sm:$0xff] %v383
                %v385 = vld [vmem:[%s171 + $0x698] sm:$0xff]
                %386 = vst [vmem:[%s172 + $0x350] sm:$0xff] %v385
                %v387 = vld [vmem:[%s171 + $0x6a0] sm:$0xff]
                %388 = vst [vmem:[%s172 + $0x358] sm:$0xff] %v387
                %v389 = vld [vmem:[%s171 + $0x6c0] sm:$0xff]
                %390 = vst [vmem:[%s172 + $0x360] sm:$0xff] %v389
                %v391 = vld [vmem:[%s171 + $0x6c8] sm:$0xff]
                %392 = vst [vmem:[%s172 + $0x368] sm:$0xff] %v391
                %v393 = vld [vmem:[%s171 + $0x6d0] sm:$0xff]
                %394 = vst [vmem:[%s172 + $0x370] sm:$0xff] %v393
                %v395 = vld [vmem:[%s171 + $0x6f0] sm:$0xff]
                %396 = vst [vmem:[%s172 + $0x378] sm:$0xff] %v395
                %v397 = vld [vmem:[%s171 + $0x6f8] sm:$0xff]
                %398 = vst [vmem:[%s172 + $0x380] sm:$0xff] %v397
                %v399 = vld [vmem:[%s171 + $0x700] sm:$0xff]
                %400 = vst [vmem:[%s172 + $0x388] sm:$0xff] %v399
                %v401 = vld [vmem:[%s171 + $0x720] sm:$0xff]
                %402 = vst [vmem:[%s172 + $0x390] sm:$0xff] %v401
                %v403 = vld [vmem:[%s171 + $0x728] sm:$0xff]
                %404 = vst [vmem:[%s172 + $0x398] sm:$0xff] %v403
                %v405 = vld [vmem:[%s171 + $0x730] sm:$0xff]
                %406 = vst [vmem:[%s172 + $0x3a0] sm:$0xff] %v405
                %v407 = vld [vmem:[%s171 + $0x750] sm:$0xff]
                %408 = vst [vmem:[%s172 + $0x3a8] sm:$0xff] %v407
                %v409 = vld [vmem:[%s171 + $0x758] sm:$0xff]
                %410 = vst [vmem:[%s172 + $0x3b0] sm:$0xff] %v409
                %v411 = vld [vmem:[%s171 + $0x760] sm:$0xff]
                %412 = vst [vmem:[%s172 + $0x3b8] sm:$0xff] %v411
                %v413 = vld [vmem:[%s171 + $0x780] sm:$0xff]
                %414 = vst [vmem:[%s172 + $0x3c0] sm:$0xff] %v413
                %v415 = vld [vmem:[%s171 + $0x788] sm:$0xff]
                %416 = vst [vmem:[%s172 + $0x3c8] sm:$0xff] %v415
                %v417 = vld [vmem:[%s171 + $0x790] sm:$0xff]
                %418 = vst [vmem:[%s172 + $0x3d0] sm:$0xff] %v417
                %v419 = vld [vmem:[%s171 + $0x7b0] sm:$0xff]
                %420 = vst [vmem:[%s172 + $0x3d8] sm:$0xff] %v419
                %v421 = vld [vmem:[%s171 + $0x7b8] sm:$0xff]
                %422 = vst [vmem:[%s172 + $0x3e0] sm:$0xff] %v421
                %v423 = vld [vmem:[%s171 + $0x7c0] sm:$0xff]
                %424 = vst [vmem:[%s172 + $0x3e8] sm:$0xff] %v423
                %v425 = vld [vmem:[%s171 + $0x7e0] sm:$0xff]
                %426 = vst [vmem:[%s172 + $0x3f0] sm:$0xff] %v425
                %v427 = vld [vmem:[%s171 + $0x7e8] sm:$0xff]
                %428 = vst [vmem:[%s172 + $0x3f8] sm:$0xff] %v427
                %v429 = vld [vmem:[%s171 + $0x7f0] sm:$0xff]
                %430 = vst [vmem:[%s172 + $0x400] sm:$0xff] %v429
                %v431 = vld [vmem:[%s171 + $0x810] sm:$0xff]
                %432 = vst [vmem:[%s172 + $0x408] sm:$0xff] %v431
                %v433 = vld [vmem:[%s171 + $0x818] sm:$0xff]
                %434 = vst [vmem:[%s172 + $0x410] sm:$0xff] %v433
                %v435 = vld [vmem:[%s171 + $0x820] sm:$0xff]
                %436 = vst [vmem:[%s172 + $0x418] sm:$0xff] %v435
                %v437 = vld [vmem:[%s171 + $0x840] sm:$0xff]
                %438 = vst [vmem:[%s172 + $0x420] sm:$0xff] %v437
                %v439 = vld [vmem:[%s171 + $0x848] sm:$0xff]
                %440 = vst [vmem:[%s172 + $0x428] sm:$0xff] %v439
                %v441 = vld [vmem:[%s171 + $0x850] sm:$0xff]
                %442 = vst [vmem:[%s172 + $0x430] sm:$0xff] %v441
                %v443 = vld [vmem:[%s171 + $0x870] sm:$0xff]
                %444 = vst [vmem:[%s172 + $0x438] sm:$0xff] %v443
                %v445 = vld [vmem:[%s171 + $0x878] sm:$0xff]
                %446 = vst [vmem:[%s172 + $0x440] sm:$0xff] %v445
                %v447 = vld [vmem:[%s171 + $0x880] sm:$0xff]
                %448 = vst [vmem:[%s172 + $0x448] sm:$0xff] %v447
                %v449 = vld [vmem:[%s171 + $0x8a0] sm:$0xff]
                %450 = vst [vmem:[%s172 + $0x450] sm:$0xff] %v449
                %v451 = vld [vmem:[%s171 + $0x8a8] sm:$0xff]
                %452 = vst [vmem:[%s172 + $0x458] sm:$0xff] %v451
                %v453 = vld [vmem:[%s171 + $0x8b0] sm:$0xff]
                %454 = vst [vmem:[%s172 + $0x460] sm:$0xff] %v453
                %v455 = vld [vmem:[%s171 + $0x8d0] sm:$0xff]
                %456 = vst [vmem:[%s172 + $0x468] sm:$0xff] %v455
                %v457 = vld [vmem:[%s171 + $0x8d8] sm:$0xff]
                %458 = vst [vmem:[%s172 + $0x470] sm:$0xff] %v457
                %v459 = vld [vmem:[%s171 + $0x8e0] sm:$0xff]
                %460 = vst [vmem:[%s172 + $0x478] sm:$0xff] %v459
                %v461 = vld [vmem:[%s171 + $0x900] sm:$0xff]
                %462 = vst [vmem:[%s172 + $0x480] sm:$0xff] %v461
                %v463 = vld [vmem:[%s171 + $0x908] sm:$0xff]
                %464 = vst [vmem:[%s172 + $0x488] sm:$0xff] %v463
                %v465 = vld [vmem:[%s171 + $0x910] sm:$0xff]
                %466 = vst [vmem:[%s172 + $0x490] sm:$0xff] %v465
                %v467 = vld [vmem:[%s171 + $0x930] sm:$0xff]
                %468 = vst [vmem:[%s172 + $0x498] sm:$0xff] %v467
                %v469 = vld [vmem:[%s171 + $0x938] sm:$0xff]
                %470 = vst [vmem:[%s172 + $0x4a0] sm:$0xff] %v469
                %v471 = vld [vmem:[%s171 + $0x940] sm:$0xff]
                %472 = vst [vmem:[%s172 + $0x4a8] sm:$0xff] %v471
                %v473 = vld [vmem:[%s171 + $0x960] sm:$0xff]
                %474 = vst [vmem:[%s172 + $0x4b0] sm:$0xff] %v473
                %v475 = vld [vmem:[%s171 + $0x968] sm:$0xff]
                %476 = vst [vmem:[%s172 + $0x4b8] sm:$0xff] %v475
                %v477 = vld [vmem:[%s171 + $0x970] sm:$0xff]
                %478 = vst [vmem:[%s172 + $0x4c0] sm:$0xff] %v477
                %v479 = vld [vmem:[%s171 + $0x990] sm:$0xff]
                %480 = vst [vmem:[%s172 + $0x4c8] sm:$0xff] %v479
                %v481 = vld [vmem:[%s171 + $0x998] sm:$0xff]
                %482 = vst [vmem:[%s172 + $0x4d0] sm:$0xff] %v481
                %v483 = vld [vmem:[%s171 + $0x9a0] sm:$0xff]
                %484 = vst [vmem:[%s172 + $0x4d8] sm:$0xff] %v483
                %v485 = vld [vmem:[%s171 + $0x9c0] sm:$0xff]
                %486 = vst [vmem:[%s172 + $0x4e0] sm:$0xff] %v485
                %v487 = vld [vmem:[%s171 + $0x9c8] sm:$0xff]
                %488 = vst [vmem:[%s172 + $0x4e8] sm:$0xff] %v487
                %v489 = vld [vmem:[%s171 + $0x9d0] sm:$0xff]
                %490 = vst [vmem:[%s172 + $0x4f0] sm:$0xff] %v489
                %v491 = vld [vmem:[%s171 + $0x9f0] sm:$0xff]
                %492 = vst [vmem:[%s172 + $0x4f8] sm:$0xff] %v491
                %v493 = vld [vmem:[%s171 + $0x9f8] sm:$0xff]
                %494 = vst [vmem:[%s172 + $0x500] sm:$0xff] %v493
                %v495 = vld [vmem:[%s171 + $0xa00] sm:$0xff]
                %496 = vst [vmem:[%s172 + $0x508] sm:$0xff] %v495
                %v497 = vld [vmem:[%s171 + $0xa20] sm:$0xff]
                %498 = vst [vmem:[%s172 + $0x510] sm:$0xff] %v497
                %v499 = vld [vmem:[%s171 + $0xa28] sm:$0xff]
                %500 = vst [vmem:[%s172 + $0x518] sm:$0xff] %v499
                %v501 = vld [vmem:[%s171 + $0xa30] sm:$0xff]
                %502 = vst [vmem:[%s172 + $0x520] sm:$0xff] %v501
                %v503 = vld [vmem:[%s171 + $0xa50] sm:$0xff]
                %504 = vst [vmem:[%s172 + $0x528] sm:$0xff] %v503
                %v505 = vld [vmem:[%s171 + $0xa58] sm:$0xff]
                %506 = vst [vmem:[%s172 + $0x530] sm:$0xff] %v505
                %v507 = vld [vmem:[%s171 + $0xa60] sm:$0xff]
                %508 = vst [vmem:[%s172 + $0x538] sm:$0xff] %v507
                %v509 = vld [vmem:[%s171 + $0xa80] sm:$0xff]
                %510 = vst [vmem:[%s172 + $0x540] sm:$0xff] %v509
                %v511 = vld [vmem:[%s171 + $0xa88] sm:$0xff]
                %512 = vst [vmem:[%s172 + $0x548] sm:$0xff] %v511
                %v513 = vld [vmem:[%s171 + $0xa90] sm:$0xff]
                %514 = vst [vmem:[%s172 + $0x550] sm:$0xff] %v513
                %v515 = vld [vmem:[%s171 + $0xab0] sm:$0xff]
                %516 = vst [vmem:[%s172 + $0x558] sm:$0xff] %v515
                %v517 = vld [vmem:[%s171 + $0xab8] sm:$0xff]
                %518 = vst [vmem:[%s172 + $0x560] sm:$0xff] %v517
                %v519 = vld [vmem:[%s171 + $0xac0] sm:$0xff]
                %520 = vst [vmem:[%s172 + $0x568] sm:$0xff] %v519
                %v521 = vld [vmem:[%s171 + $0xae0] sm:$0xff]
                %522 = vst [vmem:[%s172 + $0x570] sm:$0xff] %v521
                %v523 = vld [vmem:[%s171 + $0xae8] sm:$0xff]
                %524 = vst [vmem:[%s172 + $0x578] sm:$0xff] %v523
                %v525 = vld [vmem:[%s171 + $0xaf0] sm:$0xff]
                %526 = vst [vmem:[%s172 + $0x580] sm:$0xff] %v525
                %v527 = vld [vmem:[%s171 + $0xb10] sm:$0xff]
                %528 = vst [vmem:[%s172 + $0x588] sm:$0xff] %v527
                %v529 = vld [vmem:[%s171 + $0xb18] sm:$0xff]
                %530 = vst [vmem:[%s172 + $0x590] sm:$0xff] %v529
                %v531 = vld [vmem:[%s171 + $0xb20] sm:$0xff]
                %532 = vst [vmem:[%s172 + $0x598] sm:$0xff] %v531
                %v533 = vld [vmem:[%s171 + $0xb40] sm:$0xff]
                %534 = vst [vmem:[%s172 + $0x5a0] sm:$0xff] %v533
                %v535 = vld [vmem:[%s171 + $0xb48] sm:$0xff]
                %536 = vst [vmem:[%s172 + $0x5a8] sm:$0xff] %v535
                %v537 = vld [vmem:[%s171 + $0xb50] sm:$0xff]
                %538 = vst [vmem:[%s172 + $0x5b0] sm:$0xff] %v537
                %v539 = vld [vmem:[%s171 + $0xb70] sm:$0xff]
                %540 = vst [vmem:[%s172 + $0x5b8] sm:$0xff] %v539
                %v541 = vld [vmem:[%s171 + $0xb78] sm:$0xff]
                %542 = vst [vmem:[%s172 + $0x5c0] sm:$0xff] %v541
                %v543 = vld [vmem:[%s171 + $0xb80] sm:$0xff]
                %544 = vst [vmem:[%s172 + $0x5c8] sm:$0xff] %v543
                %v545 = vld [vmem:[%s171 + $0xba0] sm:$0xff]
                %546 = vst [vmem:[%s172 + $0x5d0] sm:$0xff] %v545
                %v547 = vld [vmem:[%s171 + $0xba8] sm:$0xff]
                %548 = vst [vmem:[%s172 + $0x5d8] sm:$0xff] %v547
                %v549 = vld [vmem:[%s171 + $0xbb0] sm:$0xff]
                %550 = vst [vmem:[%s172 + $0x5e0] sm:$0xff] %v549
                %v551 = vld [vmem:[%s171 + $0xbd0] sm:$0xff]
                %552 = vst [vmem:[%s172 + $0x5e8] sm:$0xff] %v551
                %v553 = vld [vmem:[%s171 + $0xbd8] sm:$0xff]
                %554 = vst [vmem:[%s172 + $0x5f0] sm:$0xff] %v553
                %v555 = vld [vmem:[%s171 + $0xbe0] sm:$0xff]
                %556 = vst [vmem:[%s172 + $0x5f8] sm:$0xff] %v555
                %v557 = vld [vmem:[%s171 + $0xc00] sm:$0xff]
                %558 = vst [vmem:[%s172 + $0x600] sm:$0xff] %v557
                %v559 = vld [vmem:[%s171 + $0xc08] sm:$0xff]
                %560 = vst [vmem:[%s172 + $0x608] sm:$0xff] %v559
                %v561 = vld [vmem:[%s171 + $0xc10] sm:$0xff]
                %562 = vst [vmem:[%s172 + $0x610] sm:$0xff] %v561
                %v563 = vld [vmem:[%s171 + $0xc30] sm:$0xff]
                %564 = vst [vmem:[%s172 + $0x618] sm:$0xff] %v563
                %v565 = vld [vmem:[%s171 + $0xc38] sm:$0xff]
                %566 = vst [vmem:[%s172 + $0x620] sm:$0xff] %v565
                %v567 = vld [vmem:[%s171 + $0xc40] sm:$0xff]
                %568 = vst [vmem:[%s172 + $0x628] sm:$0xff] %v567
                %v569 = vld [vmem:[%s171 + $0xc60] sm:$0xff]
                %570 = vst [vmem:[%s172 + $0x630] sm:$0xff] %v569
                %v571 = vld [vmem:[%s171 + $0xc68] sm:$0xff]
                %572 = vst [vmem:[%s172 + $0x638] sm:$0xff] %v571
                %v573 = vld [vmem:[%s171 + $0xc70] sm:$0xff]
                %574 = vst [vmem:[%s172 + $0x640] sm:$0xff] %v573
                %v575 = vld [vmem:[%s171 + $0xc90] sm:$0xff]
                %576 = vst [vmem:[%s172 + $0x648] sm:$0xff] %v575
                %v577 = vld [vmem:[%s171 + $0xc98] sm:$0xff]
                %578 = vst [vmem:[%s172 + $0x650] sm:$0xff] %v577
                %v579 = vld [vmem:[%s171 + $0xca0] sm:$0xff]
                %580 = vst [vmem:[%s172 + $0x658] sm:$0xff] %v579
                %v581 = vld [vmem:[%s171 + $0xcc0] sm:$0xff]
                %582 = vst [vmem:[%s172 + $0x660] sm:$0xff] %v581
                %v583 = vld [vmem:[%s171 + $0xcc8] sm:$0xff]
                %584 = vst [vmem:[%s172 + $0x668] sm:$0xff] %v583
                %v585 = vld [vmem:[%s171 + $0xcd0] sm:$0xff]
                %586 = vst [vmem:[%s172 + $0x670] sm:$0xff] %v585
                %v587 = vld [vmem:[%s171 + $0xcf0] sm:$0xff]
                %588 = vst [vmem:[%s172 + $0x678] sm:$0xff] %v587
                %v589 = vld [vmem:[%s171 + $0xcf8] sm:$0xff]
                %590 = vst [vmem:[%s172 + $0x680] sm:$0xff] %v589
                %v591 = vld [vmem:[%s171 + $0xd00] sm:$0xff]
                %592 = vst [vmem:[%s172 + $0x688] sm:$0xff] %v591
                %v593 = vld [vmem:[%s171 + $0xd20] sm:$0xff]
                %594 = vst [vmem:[%s172 + $0x690] sm:$0xff] %v593
                %v595 = vld [vmem:[%s171 + $0xd28] sm:$0xff]
                %596 = vst [vmem:[%s172 + $0x698] sm:$0xff] %v595
                %v597 = vld [vmem:[%s171 + $0xd30] sm:$0xff]
                %598 = vst [vmem:[%s172 + $0x6a0] sm:$0xff] %v597
                %v599 = vld [vmem:[%s171 + $0xd50] sm:$0xff]
                %600 = vst [vmem:[%s172 + $0x6a8] sm:$0xff] %v599
                %v601 = vld [vmem:[%s171 + $0xd58] sm:$0xff]
                %602 = vst [vmem:[%s172 + $0x6b0] sm:$0xff] %v601
                %v603 = vld [vmem:[%s171 + $0xd60] sm:$0xff]
                %604 = vst [vmem:[%s172 + $0x6b8] sm:$0xff] %v603
                %v605 = vld [vmem:[%s171 + $0xd80] sm:$0xff]
                %606 = vst [vmem:[%s172 + $0x6c0] sm:$0xff] %v605
                %v607 = vld [vmem:[%s171 + $0xd88] sm:$0xff]
                %608 = vst [vmem:[%s172 + $0x6c8] sm:$0xff] %v607
                %v609 = vld [vmem:[%s171 + $0xd90] sm:$0xff]
                %610 = vst [vmem:[%s172 + $0x6d0] sm:$0xff] %v609
                %v611 = vld [vmem:[%s171 + $0xdb0] sm:$0xff]
                %612 = vst [vmem:[%s172 + $0x6d8] sm:$0xff] %v611
                %v613 = vld [vmem:[%s171 + $0xdb8] sm:$0xff]
                %614 = vst [vmem:[%s172 + $0x6e0] sm:$0xff] %v613
                %v615 = vld [vmem:[%s171 + $0xdc0] sm:$0xff]
                %616 = vst [vmem:[%s172 + $0x6e8] sm:$0xff] %v615
                %v617 = vld [vmem:[%s171 + $0xde0] sm:$0xff]
                %618 = vst [vmem:[%s172 + $0x6f0] sm:$0xff] %v617
                %v619 = vld [vmem:[%s171 + $0xde8] sm:$0xff]
                %620 = vst [vmem:[%s172 + $0x6f8] sm:$0xff] %v619
                %v621 = vld [vmem:[%s171 + $0xdf0] sm:$0xff]
                %622 = vst [vmem:[%s172 + $0x700] sm:$0xff] %v621
                %v623 = vld [vmem:[%s171 + $0xe10] sm:$0xff]
                %624 = vst [vmem:[%s172 + $0x708] sm:$0xff] %v623
                %v625 = vld [vmem:[%s171 + $0xe18] sm:$0xff]
                %626 = vst [vmem:[%s172 + $0x710] sm:$0xff] %v625
                %v627 = vld [vmem:[%s171 + $0xe20] sm:$0xff]
                %628 = vst [vmem:[%s172 + $0x718] sm:$0xff] %v627
                %v629 = vld [vmem:[%s171 + $0xe40] sm:$0xff]
                %630 = vst [vmem:[%s172 + $0x720] sm:$0xff] %v629
                %v631 = vld [vmem:[%s171 + $0xe48] sm:$0xff]
                %632 = vst [vmem:[%s172 + $0x728] sm:$0xff] %v631
                %v633 = vld [vmem:[%s171 + $0xe50] sm:$0xff]
                %634 = vst [vmem:[%s172 + $0x730] sm:$0xff] %v633
                %v635 = vld [vmem:[%s171 + $0xe70] sm:$0xff]
                %636 = vst [vmem:[%s172 + $0x738] sm:$0xff] %v635
                %v637 = vld [vmem:[%s171 + $0xe78] sm:$0xff]
                %638 = vst [vmem:[%s172 + $0x740] sm:$0xff] %v637
                %v639 = vld [vmem:[%s171 + $0xe80] sm:$0xff]
                %640 = vst [vmem:[%s172 + $0x748] sm:$0xff] %v639
                %v641 = vld [vmem:[%s171 + $0xea0] sm:$0xff]
                %642 = vst [vmem:[%s172 + $0x750] sm:$0xff] %v641
                %v643 = vld [vmem:[%s171 + $0xea8] sm:$0xff]
                %644 = vst [vmem:[%s172 + $0x758] sm:$0xff] %v643
                %v645 = vld [vmem:[%s171 + $0xeb0] sm:$0xff]
                %646 = vst [vmem:[%s172 + $0x760] sm:$0xff] %v645
                %v647 = vld [vmem:[%s171 + $0xed0] sm:$0xff]
                %648 = vst [vmem:[%s172 + $0x768] sm:$0xff] %v647
                %v649 = vld [vmem:[%s171 + $0xed8] sm:$0xff]
                %650 = vst [vmem:[%s172 + $0x770] sm:$0xff] %v649
                %v651 = vld [vmem:[%s171 + $0xee0] sm:$0xff]
                %652 = vst [vmem:[%s172 + $0x778] sm:$0xff] %v651
                %v653 = vld [vmem:[%s171 + $0xf00] sm:$0xff]
                %654 = vst [vmem:[%s172 + $0x780] sm:$0xff] %v653
                %v655 = vld [vmem:[%s171 + $0xf08] sm:$0xff]
                %656 = vst [vmem:[%s172 + $0x788] sm:$0xff] %v655
                %v657 = vld [vmem:[%s171 + $0xf10] sm:$0xff]
                %658 = vst [vmem:[%s172 + $0x790] sm:$0xff] %v657
                %v659 = vld [vmem:[%s171 + $0xf30] sm:$0xff]
                %660 = vst [vmem:[%s172 + $0x798] sm:$0xff] %v659
                %v661 = vld [vmem:[%s171 + $0xf38] sm:$0xff]
                %662 = vst [vmem:[%s172 + $0x7a0] sm:$0xff] %v661
                %v663 = vld [vmem:[%s171 + $0xf40] sm:$0xff]
                %664 = vst [vmem:[%s172 + $0x7a8] sm:$0xff] %v663
                %v665 = vld [vmem:[%s171 + $0xf60] sm:$0xff]
                %666 = vst [vmem:[%s172 + $0x7b0] sm:$0xff] %v665
                %v667 = vld [vmem:[%s171 + $0xf68] sm:$0xff]
                %668 = vst [vmem:[%s172 + $0x7b8] sm:$0xff] %v667
                %v669 = vld [vmem:[%s171 + $0xf70] sm:$0xff]
                %670 = vst [vmem:[%s172 + $0x7c0] sm:$0xff] %v669
                %v671 = vld [vmem:[%s171 + $0xf90] sm:$0xff]
                %672 = vst [vmem:[%s172 + $0x7c8] sm:$0xff] %v671
                %v673 = vld [vmem:[%s171 + $0xf98] sm:$0xff]
                %674 = vst [vmem:[%s172 + $0x7d0] sm:$0xff] %v673
                %v675 = vld [vmem:[%s171 + $0xfa0] sm:$0xff]
                %676 = vst [vmem:[%s172 + $0x7d8] sm:$0xff] %v675
                %v677 = vld [vmem:[%s171 + $0xfc0] sm:$0xff]
                %678 = vst [vmem:[%s172 + $0x7e0] sm:$0xff] %v677
                %v679 = vld [vmem:[%s171 + $0xfc8] sm:$0xff]
                %680 = vst [vmem:[%s172 + $0x7e8] sm:$0xff] %v679
                %v681 = vld [vmem:[%s171 + $0xfd0] sm:$0xff]
                %682 = vst [vmem:[%s172 + $0x7f0] sm:$0xff] %v681
                %v683 = vld [vmem:[%s171 + $0xff0] sm:$0xff]
                %684 = vst [vmem:[%s172 + $0x7f8] sm:$0xff] %v683
                %v685 = vld [vmem:[%s171 + $0xff8] sm:$0xff]
                %686 = vst [vmem:[%s172 + $0x800] sm:$0xff] %v685
                %v687 = vld [vmem:[%s171 + $0x1000] sm:$0xff]
                %688 = vst [vmem:[%s172 + $0x808] sm:$0xff] %v687
                %v689 = vld [vmem:[%s171 + $0x1020] sm:$0xff]
                %690 = vst [vmem:[%s172 + $0x810] sm:$0xff] %v689
                %v691 = vld [vmem:[%s171 + $0x1028] sm:$0xff]
                %692 = vst [vmem:[%s172 + $0x818] sm:$0xff] %v691
                %v693 = vld [vmem:[%s171 + $0x1030] sm:$0xff]
                %694 = vst [vmem:[%s172 + $0x820] sm:$0xff] %v693
                %v695 = vld [vmem:[%s171 + $0x1050] sm:$0xff]
                %696 = vst [vmem:[%s172 + $0x828] sm:$0xff] %v695
                %v697 = vld [vmem:[%s171 + $0x1058] sm:$0xff]
                %698 = vst [vmem:[%s172 + $0x830] sm:$0xff] %v697
                %v699 = vld [vmem:[%s171 + $0x1060] sm:$0xff]
                %700 = vst [vmem:[%s172 + $0x838] sm:$0xff] %v699
                %v701 = vld [vmem:[%s171 + $0x1080] sm:$0xff]
                %702 = vst [vmem:[%s172 + $0x840] sm:$0xff] %v701
                %v703 = vld [vmem:[%s171 + $0x1088] sm:$0xff]
                %704 = vst [vmem:[%s172 + $0x848] sm:$0xff] %v703
                %v705 = vld [vmem:[%s171 + $0x1090] sm:$0xff]
                %706 = vst [vmem:[%s172 + $0x850] sm:$0xff] %v705
                %v707 = vld [vmem:[%s171 + $0x10b0] sm:$0xff]
                %708 = vst [vmem:[%s172 + $0x858] sm:$0xff] %v707
                %v709 = vld [vmem:[%s171 + $0x10b8] sm:$0xff]
                %710 = vst [vmem:[%s172 + $0x860] sm:$0xff] %v709
                %v711 = vld [vmem:[%s171 + $0x10c0] sm:$0xff]
                %712 = vst [vmem:[%s172 + $0x868] sm:$0xff] %v711
                %v713 = vld [vmem:[%s171 + $0x10e0] sm:$0xff]
                %714 = vst [vmem:[%s172 + $0x870] sm:$0xff] %v713
                %v715 = vld [vmem:[%s171 + $0x10e8] sm:$0xff]
                %716 = vst [vmem:[%s172 + $0x878] sm:$0xff] %v715
                %v717 = vld [vmem:[%s171 + $0x10f0] sm:$0xff]
                %718 = vst [vmem:[%s172 + $0x880] sm:$0xff] %v717
                %v719 = vld [vmem:[%s171 + $0x1110] sm:$0xff]
                %720 = vst [vmem:[%s172 + $0x888] sm:$0xff] %v719
                %v721 = vld [vmem:[%s171 + $0x1118] sm:$0xff]
                %722 = vst [vmem:[%s172 + $0x890] sm:$0xff] %v721
                %v723 = vld [vmem:[%s171 + $0x1120] sm:$0xff]
                %724 = vst [vmem:[%s172 + $0x898] sm:$0xff] %v723
                %v725 = vld [vmem:[%s171 + $0x1140] sm:$0xff]
                %726 = vst [vmem:[%s172 + $0x8a0] sm:$0xff] %v725
                %v727 = vld [vmem:[%s171 + $0x1148] sm:$0xff]
                %728 = vst [vmem:[%s172 + $0x8a8] sm:$0xff] %v727
                %v729 = vld [vmem:[%s171 + $0x1150] sm:$0xff]
                %730 = vst [vmem:[%s172 + $0x8b0] sm:$0xff] %v729
                %v731 = vld [vmem:[%s171 + $0x1170] sm:$0xff]
                %732 = vst [vmem:[%s172 + $0x8b8] sm:$0xff] %v731
                %v733 = vld [vmem:[%s171 + $0x1178] sm:$0xff]
                %734 = vst [vmem:[%s172 + $0x8c0] sm:$0xff] %v733
                %v735 = vld [vmem:[%s171 + $0x1180] sm:$0xff]
                %736 = vst [vmem:[%s172 + $0x8c8] sm:$0xff] %v735
                %v737 = vld [vmem:[%s171 + $0x11a0] sm:$0xff]
                %738 = vst [vmem:[%s172 + $0x8d0] sm:$0xff] %v737
                %v739 = vld [vmem:[%s171 + $0x11a8] sm:$0xff]
                %740 = vst [vmem:[%s172 + $0x8d8] sm:$0xff] %v739
                %v741 = vld [vmem:[%s171 + $0x11b0] sm:$0xff]
                %742 = vst [vmem:[%s172 + $0x8e0] sm:$0xff] %v741
                %v743 = vld [vmem:[%s171 + $0x11d0] sm:$0xff]
                %744 = vst [vmem:[%s172 + $0x8e8] sm:$0xff] %v743
                %v745 = vld [vmem:[%s171 + $0x11d8] sm:$0xff]
                %746 = vst [vmem:[%s172 + $0x8f0] sm:$0xff] %v745
                %v747 = vld [vmem:[%s171 + $0x11e0] sm:$0xff]
                %748 = vst [vmem:[%s172 + $0x8f8] sm:$0xff] %v747
                %v749 = vld [vmem:[%s171 + $0x1200] sm:$0xff]
                %750 = vst [vmem:[%s172 + $0x900] sm:$0xff] %v749
                %v751 = vld [vmem:[%s171 + $0x1208] sm:$0xff]
                %752 = vst [vmem:[%s172 + $0x908] sm:$0xff] %v751
                %v753 = vld [vmem:[%s171 + $0x1210] sm:$0xff]
                %754 = vst [vmem:[%s172 + $0x910] sm:$0xff] %v753
                %v755 = vld [vmem:[%s171 + $0x1230] sm:$0xff]
                %756 = vst [vmem:[%s172 + $0x918] sm:$0xff] %v755
                %v757 = vld [vmem:[%s171 + $0x1238] sm:$0xff]
                %758 = vst [vmem:[%s172 + $0x920] sm:$0xff] %v757
                %v759 = vld [vmem:[%s171 + $0x1240] sm:$0xff]
                %760 = vst [vmem:[%s172 + $0x928] sm:$0xff] %v759
                %v761 = vld [vmem:[%s171 + $0x1260] sm:$0xff]
                %762 = vst [vmem:[%s172 + $0x930] sm:$0xff] %v761
                %v763 = vld [vmem:[%s171 + $0x1268] sm:$0xff]
                %764 = vst [vmem:[%s172 + $0x938] sm:$0xff] %v763
                %v765 = vld [vmem:[%s171 + $0x1270] sm:$0xff]
                %766 = vst [vmem:[%s172 + $0x940] sm:$0xff] %v765
                %v767 = vld [vmem:[%s171 + $0x1290] sm:$0xff]
                %768 = vst [vmem:[%s172 + $0x948] sm:$0xff] %v767
                %v769 = vld [vmem:[%s171 + $0x1298] sm:$0xff]
                %770 = vst [vmem:[%s172 + $0x950] sm:$0xff] %v769
                %v771 = vld [vmem:[%s171 + $0x12a0] sm:$0xff]
                %772 = vst [vmem:[%s172 + $0x958] sm:$0xff] %v771
                %v773 = vld [vmem:[%s171 + $0x12c0] sm:$0xff]
                %774 = vst [vmem:[%s172 + $0x960] sm:$0xff] %v773
                %v775 = vld [vmem:[%s171 + $0x12c8] sm:$0xff]
                %776 = vst [vmem:[%s172 + $0x968] sm:$0xff] %v775
                %v777 = vld [vmem:[%s171 + $0x12d0] sm:$0xff]
                %778 = vst [vmem:[%s172 + $0x970] sm:$0xff] %v777
                %v779 = vld [vmem:[%s171 + $0x12f0] sm:$0xff]
                %780 = vst [vmem:[%s172 + $0x978] sm:$0xff] %v779
                %v781 = vld [vmem:[%s171 + $0x12f8] sm:$0xff]
                %782 = vst [vmem:[%s172 + $0x980] sm:$0xff] %v781
                %v783 = vld [vmem:[%s171 + $0x1300] sm:$0xff]
                %784 = vst [vmem:[%s172 + $0x988] sm:$0xff] %v783
                %v785 = vld [vmem:[%s171 + $0x1320] sm:$0xff]
                %786 = vst [vmem:[%s172 + $0x990] sm:$0xff] %v785
                %v787 = vld [vmem:[%s171 + $0x1328] sm:$0xff]
                %788 = vst [vmem:[%s172 + $0x998] sm:$0xff] %v787
                %v789 = vld [vmem:[%s171 + $0x1330] sm:$0xff]
                %790 = vst [vmem:[%s172 + $0x9a0] sm:$0xff] %v789
                %v791 = vld [vmem:[%s171 + $0x1350] sm:$0xff]
                %792 = vst [vmem:[%s172 + $0x9a8] sm:$0xff] %v791
                %v793 = vld [vmem:[%s171 + $0x1358] sm:$0xff]
                %794 = vst [vmem:[%s172 + $0x9b0] sm:$0xff] %v793
                %v795 = vld [vmem:[%s171 + $0x1360] sm:$0xff]
                %796 = vst [vmem:[%s172 + $0x9b8] sm:$0xff] %v795
                %v797 = vld [vmem:[%s171 + $0x1380] sm:$0xff]
                %798 = vst [vmem:[%s172 + $0x9c0] sm:$0xff] %v797
                %v799 = vld [vmem:[%s171 + $0x1388] sm:$0xff]
                %800 = vst [vmem:[%s172 + $0x9c8] sm:$0xff] %v799
                %v801 = vld [vmem:[%s171 + $0x1390] sm:$0xff]
                %802 = vst [vmem:[%s172 + $0x9d0] sm:$0xff] %v801
                %v803 = vld [vmem:[%s171 + $0x13b0] sm:$0xff]
                %804 = vst [vmem:[%s172 + $0x9d8] sm:$0xff] %v803
                %v805 = vld [vmem:[%s171 + $0x13b8] sm:$0xff]
                %806 = vst [vmem:[%s172 + $0x9e0] sm:$0xff] %v805
                %v807 = vld [vmem:[%s171 + $0x13c0] sm:$0xff]
                %808 = vst [vmem:[%s172 + $0x9e8] sm:$0xff] %v807
                %v809 = vld [vmem:[%s171 + $0x13e0] sm:$0xff]
                %810 = vst [vmem:[%s172 + $0x9f0] sm:$0xff] %v809
                %v811 = vld [vmem:[%s171 + $0x13e8] sm:$0xff]
                %812 = vst [vmem:[%s172 + $0x9f8] sm:$0xff] %v811
                %v813 = vld [vmem:[%s171 + $0x13f0] sm:$0xff]
                %814 = vst [vmem:[%s172 + $0xa00] sm:$0xff] %v813
                %v815 = vld [vmem:[%s171 + $0x1410] sm:$0xff]
                %816 = vst [vmem:[%s172 + $0xa08] sm:$0xff] %v815
                %v817 = vld [vmem:[%s171 + $0x1418] sm:$0xff]
                %818 = vst [vmem:[%s172 + $0xa10] sm:$0xff] %v817
                %v819 = vld [vmem:[%s171 + $0x1420] sm:$0xff]
                %820 = vst [vmem:[%s172 + $0xa18] sm:$0xff] %v819
                %v821 = vld [vmem:[%s171 + $0x1440] sm:$0xff]
                %822 = vst [vmem:[%s172 + $0xa20] sm:$0xff] %v821
                %v823 = vld [vmem:[%s171 + $0x1448] sm:$0xff]
                %824 = vst [vmem:[%s172 + $0xa28] sm:$0xff] %v823
                %v825 = vld [vmem:[%s171 + $0x1450] sm:$0xff]
                %826 = vst [vmem:[%s172 + $0xa30] sm:$0xff] %v825
                %v827 = vld [vmem:[%s171 + $0x1470] sm:$0xff]
                %828 = vst [vmem:[%s172 + $0xa38] sm:$0xff] %v827
                %v829 = vld [vmem:[%s171 + $0x1478] sm:$0xff]
                %830 = vst [vmem:[%s172 + $0xa40] sm:$0xff] %v829
                %v831 = vld [vmem:[%s171 + $0x1480] sm:$0xff]
                %832 = vst [vmem:[%s172 + $0xa48] sm:$0xff] %v831
                %v833 = vld [vmem:[%s171 + $0x14a0] sm:$0xff]
                %834 = vst [vmem:[%s172 + $0xa50] sm:$0xff] %v833
                %v835 = vld [vmem:[%s171 + $0x14a8] sm:$0xff]
                %836 = vst [vmem:[%s172 + $0xa58] sm:$0xff] %v835
                %v837 = vld [vmem:[%s171 + $0x14b0] sm:$0xff]
                %838 = vst [vmem:[%s172 + $0xa60] sm:$0xff] %v837
                %v839 = vld [vmem:[%s171 + $0x14d0] sm:$0xff]
                %840 = vst [vmem:[%s172 + $0xa68] sm:$0xff] %v839
                %v841 = vld [vmem:[%s171 + $0x14d8] sm:$0xff]
                %842 = vst [vmem:[%s172 + $0xa70] sm:$0xff] %v841
                %v843 = vld [vmem:[%s171 + $0x14e0] sm:$0xff]
                %844 = vst [vmem:[%s172 + $0xa78] sm:$0xff] %v843
                %v845 = vld [vmem:[%s171 + $0x1500] sm:$0xff]
                %846 = vst [vmem:[%s172 + $0xa80] sm:$0xff] %v845
                %v847 = vld [vmem:[%s171 + $0x1508] sm:$0xff]
                %848 = vst [vmem:[%s172 + $0xa88] sm:$0xff] %v847
                %v849 = vld [vmem:[%s171 + $0x1510] sm:$0xff]
                %850 = vst [vmem:[%s172 + $0xa90] sm:$0xff] %v849
                %v851 = vld [vmem:[%s171 + $0x1530] sm:$0xff]
                %852 = vst [vmem:[%s172 + $0xa98] sm:$0xff] %v851
                %v853 = vld [vmem:[%s171 + $0x1538] sm:$0xff]
                %854 = vst [vmem:[%s172 + $0xaa0] sm:$0xff] %v853
                %v855 = vld [vmem:[%s171 + $0x1540] sm:$0xff]
                %856 = vst [vmem:[%s172 + $0xaa8] sm:$0xff] %v855
                %v857 = vld [vmem:[%s171 + $0x1560] sm:$0xff]
                %858 = vst [vmem:[%s172 + $0xab0] sm:$0xff] %v857
                %v859 = vld [vmem:[%s171 + $0x1568] sm:$0xff]
                %860 = vst [vmem:[%s172 + $0xab8] sm:$0xff] %v859
                %v861 = vld [vmem:[%s171 + $0x1570] sm:$0xff]
                %862 = vst [vmem:[%s172 + $0xac0] sm:$0xff] %v861
                %v863 = vld [vmem:[%s171 + $0x1590] sm:$0xff]
                %864 = vst [vmem:[%s172 + $0xac8] sm:$0xff] %v863
                %v865 = vld [vmem:[%s171 + $0x1598] sm:$0xff]
                %866 = vst [vmem:[%s172 + $0xad0] sm:$0xff] %v865
                %v867 = vld [vmem:[%s171 + $0x15a0] sm:$0xff]
                %868 = vst [vmem:[%s172 + $0xad8] sm:$0xff] %v867
                %v869 = vld [vmem:[%s171 + $0x15c0] sm:$0xff]
                %870 = vst [vmem:[%s172 + $0xae0] sm:$0xff] %v869
                %v871 = vld [vmem:[%s171 + $0x15c8] sm:$0xff]
                %872 = vst [vmem:[%s172 + $0xae8] sm:$0xff] %v871
                %v873 = vld [vmem:[%s171 + $0x15d0] sm:$0xff]
                %874 = vst [vmem:[%s172 + $0xaf0] sm:$0xff] %v873
                %v875 = vld [vmem:[%s171 + $0x15f0] sm:$0xff]
                %876 = vst [vmem:[%s172 + $0xaf8] sm:$0xff] %v875
                %v877 = vld [vmem:[%s171 + $0x15f8] sm:$0xff]
                %878 = vst [vmem:[%s172 + $0xb00] sm:$0xff] %v877
                %v879 = vld [vmem:[%s171 + $0x1600] sm:$0xff]
                %880 = vst [vmem:[%s172 + $0xb08] sm:$0xff] %v879
                %v881 = vld [vmem:[%s171 + $0x1620] sm:$0xff]
                %882 = vst [vmem:[%s172 + $0xb10] sm:$0xff] %v881
                %v883 = vld [vmem:[%s171 + $0x1628] sm:$0xff]
                %884 = vst [vmem:[%s172 + $0xb18] sm:$0xff] %v883
                %v885 = vld [vmem:[%s171 + $0x1630] sm:$0xff]
                %886 = vst [vmem:[%s172 + $0xb20] sm:$0xff] %v885
                %v887 = vld [vmem:[%s171 + $0x1650] sm:$0xff]
                %888 = vst [vmem:[%s172 + $0xb28] sm:$0xff] %v887
                %v889 = vld [vmem:[%s171 + $0x1658] sm:$0xff]
                %890 = vst [vmem:[%s172 + $0xb30] sm:$0xff] %v889
                %v891 = vld [vmem:[%s171 + $0x1660] sm:$0xff]
                %892 = vst [vmem:[%s172 + $0xb38] sm:$0xff] %v891
                %v893 = vld [vmem:[%s171 + $0x1680] sm:$0xff]
                %894 = vst [vmem:[%s172 + $0xb40] sm:$0xff] %v893
                %v895 = vld [vmem:[%s171 + $0x1688] sm:$0xff]
                %896 = vst [vmem:[%s172 + $0xb48] sm:$0xff] %v895
                %v897 = vld [vmem:[%s171 + $0x1690] sm:$0xff]
                %898 = vst [vmem:[%s172 + $0xb50] sm:$0xff] %v897
                %v899 = vld [vmem:[%s171 + $0x16b0] sm:$0xff]
                %900 = vst [vmem:[%s172 + $0xb58] sm:$0xff] %v899
                %v901 = vld [vmem:[%s171 + $0x16b8] sm:$0xff]
                %902 = vst [vmem:[%s172 + $0xb60] sm:$0xff] %v901
                %v903 = vld [vmem:[%s171 + $0x16c0] sm:$0xff]
                %904 = vst [vmem:[%s172 + $0xb68] sm:$0xff] %v903
                %v905 = vld [vmem:[%s171 + $0x16e0] sm:$0xff]
                %906 = vst [vmem:[%s172 + $0xb70] sm:$0xff] %v905
                %v907 = vld [vmem:[%s171 + $0x16e8] sm:$0xff]
                %908 = vst [vmem:[%s172 + $0xb78] sm:$0xff] %v907
                %v909 = vld [vmem:[%s171 + $0x16f0] sm:$0xff]
                %910 = vst [vmem:[%s172 + $0xb80] sm:$0xff] %v909
                %v911 = vld [vmem:[%s171 + $0x1710] sm:$0xff]
                %912 = vst [vmem:[%s172 + $0xb88] sm:$0xff] %v911
                %v913 = vld [vmem:[%s171 + $0x1718] sm:$0xff]
                %914 = vst [vmem:[%s172 + $0xb90] sm:$0xff] %v913
                %v915 = vld [vmem:[%s171 + $0x1720] sm:$0xff]
                %916 = vst [vmem:[%s172 + $0xb98] sm:$0xff] %v915
                %v917 = vld [vmem:[%s171 + $0x1740] sm:$0xff]
                %918 = vst [vmem:[%s172 + $0xba0] sm:$0xff] %v917
                %v919 = vld [vmem:[%s171 + $0x1748] sm:$0xff]
                %920 = vst [vmem:[%s172 + $0xba8] sm:$0xff] %v919
                %v921 = vld [vmem:[%s171 + $0x1750] sm:$0xff]
                %922 = vst [vmem:[%s172 + $0xbb0] sm:$0xff] %v921
                %v923 = vld [vmem:[%s171 + $0x1770] sm:$0xff]
                %924 = vst [vmem:[%s172 + $0xbb8] sm:$0xff] %v923
                %v925 = vld [vmem:[%s171 + $0x1778] sm:$0xff]
                %926 = vst [vmem:[%s172 + $0xbc0] sm:$0xff] %v925
                %v927 = vld [vmem:[%s171 + $0x1780] sm:$0xff]
                %928 = vst [vmem:[%s172 + $0xbc8] sm:$0xff] %v927
                %v929 = vld [vmem:[%s171 + $0x17a0] sm:$0xff]
                %930 = vst [vmem:[%s172 + $0xbd0] sm:$0xff] %v929
                %v931 = vld [vmem:[%s171 + $0x17a8] sm:$0xff]
                %932 = vst [vmem:[%s172 + $0xbd8] sm:$0xff] %v931
                %v933 = vld [vmem:[%s171 + $0x17b0] sm:$0xff]
                %934 = vst [vmem:[%s172 + $0xbe0] sm:$0xff] %v933
                %v935 = vld [vmem:[%s171 + $0x17d0] sm:$0xff]
                %936 = vst [vmem:[%s172 + $0xbe8] sm:$0xff] %v935
                %v937 = vld [vmem:[%s171 + $0x17d8] sm:$0xff]
                %938 = vst [vmem:[%s172 + $0xbf0] sm:$0xff] %v937
                %v939 = vld [vmem:[%s171 + $0x17e0] sm:$0xff]
                %940 = vst [vmem:[%s172 + $0xbf8] sm:$0xff] %v939
                %v941 = vld [vmem:[%s171 + $0x1800] sm:$0xff]
                %942 = vst [vmem:[%s172 + $0xc00] sm:$0xff] %v941
                %v943 = vld [vmem:[%s171 + $0x1808] sm:$0xff]
                %944 = vst [vmem:[%s172 + $0xc08] sm:$0xff] %v943
                %v945 = vld [vmem:[%s171 + $0x1810] sm:$0xff]
                %946 = vst [vmem:[%s172 + $0xc10] sm:$0xff] %v945
                %v947 = vld [vmem:[%s171 + $0x1830] sm:$0xff]
                %948 = vst [vmem:[%s172 + $0xc18] sm:$0xff] %v947
                %v949 = vld [vmem:[%s171 + $0x1838] sm:$0xff]
                %950 = vst [vmem:[%s172 + $0xc20] sm:$0xff] %v949
                %v951 = vld [vmem:[%s171 + $0x1840] sm:$0xff]
                %952 = vst [vmem:[%s172 + $0xc28] sm:$0xff] %v951
                %v953 = vld [vmem:[%s171 + $0x1860] sm:$0xff]
                %954 = vst [vmem:[%s172 + $0xc30] sm:$0xff] %v953
                %v955 = vld [vmem:[%s171 + $0x1868] sm:$0xff]
                %956 = vst [vmem:[%s172 + $0xc38] sm:$0xff] %v955
                %v957 = vld [vmem:[%s171 + $0x1870] sm:$0xff]
                %958 = vst [vmem:[%s172 + $0xc40] sm:$0xff] %v957
                %v959 = vld [vmem:[%s171 + $0x1890] sm:$0xff]
                %960 = vst [vmem:[%s172 + $0xc48] sm:$0xff] %v959
                %v961 = vld [vmem:[%s171 + $0x1898] sm:$0xff]
                %962 = vst [vmem:[%s172 + $0xc50] sm:$0xff] %v961
                %v963 = vld [vmem:[%s171 + $0x18a0] sm:$0xff]
                %964 = vst [vmem:[%s172 + $0xc58] sm:$0xff] %v963
                %v965 = vld [vmem:[%s171 + $0x18c0] sm:$0xff]
                %966 = vst [vmem:[%s172 + $0xc60] sm:$0xff] %v965
                %v967 = vld [vmem:[%s171 + $0x18c8] sm:$0xff]
                %968 = vst [vmem:[%s172 + $0xc68] sm:$0xff] %v967
                %v969 = vld [vmem:[%s171 + $0x18d0] sm:$0xff]
                %970 = vst [vmem:[%s172 + $0xc70] sm:$0xff] %v969
                %v971 = vld [vmem:[%s171 + $0x18f0] sm:$0xff]
                %972 = vst [vmem:[%s172 + $0xc78] sm:$0xff] %v971
                %v973 = vld [vmem:[%s171 + $0x18f8] sm:$0xff]
                %974 = vst [vmem:[%s172 + $0xc80] sm:$0xff] %v973
                %v975 = vld [vmem:[%s171 + $0x1900] sm:$0xff]
                %976 = vst [vmem:[%s172 + $0xc88] sm:$0xff] %v975
                %v977 = vld [vmem:[%s171 + $0x1920] sm:$0xff]
                %978 = vst [vmem:[%s172 + $0xc90] sm:$0xff] %v977
                %v979 = vld [vmem:[%s171 + $0x1928] sm:$0xff]
                %980 = vst [vmem:[%s172 + $0xc98] sm:$0xff] %v979
                %v981 = vld [vmem:[%s171 + $0x1930] sm:$0xff]
                %982 = vst [vmem:[%s172 + $0xca0] sm:$0xff] %v981
                %v983 = vld [vmem:[%s171 + $0x1950] sm:$0xff]
                %984 = vst [vmem:[%s172 + $0xca8] sm:$0xff] %v983
                %v985 = vld [vmem:[%s171 + $0x1958] sm:$0xff]
                %986 = vst [vmem:[%s172 + $0xcb0] sm:$0xff] %v985
                %v987 = vld [vmem:[%s171 + $0x1960] sm:$0xff]
                %988 = vst [vmem:[%s172 + $0xcb8] sm:$0xff] %v987
                %v989 = vld [vmem:[%s171 + $0x1980] sm:$0xff]
                %990 = vst [vmem:[%s172 + $0xcc0] sm:$0xff] %v989
                %v991 = vld [vmem:[%s171 + $0x1988] sm:$0xff]
                %992 = vst [vmem:[%s172 + $0xcc8] sm:$0xff] %v991
                %v993 = vld [vmem:[%s171 + $0x1990] sm:$0xff]
                %994 = vst [vmem:[%s172 + $0xcd0] sm:$0xff] %v993
                %v995 = vld [vmem:[%s171 + $0x19b0] sm:$0xff]
                %996 = vst [vmem:[%s172 + $0xcd8] sm:$0xff] %v995
                %v997 = vld [vmem:[%s171 + $0x19b8] sm:$0xff]
                %998 = vst [vmem:[%s172 + $0xce0] sm:$0xff] %v997
                %v999 = vld [vmem:[%s171 + $0x19c0] sm:$0xff]
                %1000 = vst [vmem:[%s172 + $0xce8] sm:$0xff] %v999
                %v1001 = vld [vmem:[%s171 + $0x19e0] sm:$0xff]
                %1002 = vst [vmem:[%s172 + $0xcf0] sm:$0xff] %v1001
                %v1003 = vld [vmem:[%s171 + $0x19e8] sm:$0xff]
                %1004 = vst [vmem:[%s172 + $0xcf8] sm:$0xff] %v1003
                %v1005 = vld [vmem:[%s171 + $0x19f0] sm:$0xff]
                %1006 = vst [vmem:[%s172 + $0xd00] sm:$0xff] %v1005
                %v1007 = vld [vmem:[%s171 + $0x1a10] sm:$0xff]
                %1008 = vst [vmem:[%s172 + $0xd08] sm:$0xff] %v1007
                %v1009 = vld [vmem:[%s171 + $0x1a18] sm:$0xff]
                %1010 = vst [vmem:[%s172 + $0xd10] sm:$0xff] %v1009
                %v1011 = vld [vmem:[%s171 + $0x1a20] sm:$0xff]
                %1012 = vst [vmem:[%s172 + $0xd18] sm:$0xff] %v1011
                %v1013 = vld [vmem:[%s171 + $0x1a40] sm:$0xff]
                %1014 = vst [vmem:[%s172 + $0xd20] sm:$0xff] %v1013
                %v1015 = vld [vmem:[%s171 + $0x1a48] sm:$0xff]
                %1016 = vst [vmem:[%s172 + $0xd28] sm:$0xff] %v1015
                %v1017 = vld [vmem:[%s171 + $0x1a50] sm:$0xff]
                %1018 = vst [vmem:[%s172 + $0xd30] sm:$0xff] %v1017
                %v1019 = vld [vmem:[%s171 + $0x1a70] sm:$0xff]
                %1020 = vst [vmem:[%s172 + $0xd38] sm:$0xff] %v1019
                %v1021 = vld [vmem:[%s171 + $0x1a78] sm:$0xff]
                %1022 = vst [vmem:[%s172 + $0xd40] sm:$0xff] %v1021
                %v1023 = vld [vmem:[%s171 + $0x1a80] sm:$0xff]
                %1024 = vst [vmem:[%s172 + $0xd48] sm:$0xff] %v1023
                %v1025 = vld [vmem:[%s171 + $0x1aa0] sm:$0xff]
                %1026 = vst [vmem:[%s172 + $0xd50] sm:$0xff] %v1025
                %v1027 = vld [vmem:[%s171 + $0x1aa8] sm:$0xff]
                %1028 = vst [vmem:[%s172 + $0xd58] sm:$0xff] %v1027
                %v1029 = vld [vmem:[%s171 + $0x1ab0] sm:$0xff]
                %1030 = vst [vmem:[%s172 + $0xd60] sm:$0xff] %v1029
                %v1031 = vld [vmem:[%s171 + $0x1ad0] sm:$0xff]
                %1032 = vst [vmem:[%s172 + $0xd68] sm:$0xff] %v1031
                %v1033 = vld [vmem:[%s171 + $0x1ad8] sm:$0xff]
                %1034 = vst [vmem:[%s172 + $0xd70] sm:$0xff] %v1033
                %v1035 = vld [vmem:[%s171 + $0x1ae0] sm:$0xff]
                %1036 = vst [vmem:[%s172 + $0xd78] sm:$0xff] %v1035
                %v1037 = vld [vmem:[%s171 + $0x1b00] sm:$0xff]
                %1038 = vst [vmem:[%s172 + $0xd80] sm:$0xff] %v1037
                %v1039 = vld [vmem:[%s171 + $0x1b08] sm:$0xff]
                %1040 = vst [vmem:[%s172 + $0xd88] sm:$0xff] %v1039
                %v1041 = vld [vmem:[%s171 + $0x1b10] sm:$0xff]
                %1042 = vst [vmem:[%s172 + $0xd90] sm:$0xff] %v1041
                %v1043 = vld [vmem:[%s171 + $0x1b30] sm:$0xff]
                %1044 = vst [vmem:[%s172 + $0xd98] sm:$0xff] %v1043
                %v1045 = vld [vmem:[%s171 + $0x1b38] sm:$0xff]
                %1046 = vst [vmem:[%s172 + $0xda0] sm:$0xff] %v1045
                %v1047 = vld [vmem:[%s171 + $0x1b40] sm:$0xff]
                %1048 = vst [vmem:[%s172 + $0xda8] sm:$0xff] %v1047
                %v1049 = vld [vmem:[%s171 + $0x1b60] sm:$0xff]
                %1050 = vst [vmem:[%s172 + $0xdb0] sm:$0xff] %v1049
                %v1051 = vld [vmem:[%s171 + $0x1b68] sm:$0xff]
                %1052 = vst [vmem:[%s172 + $0xdb8] sm:$0xff] %v1051
                %v1053 = vld [vmem:[%s171 + $0x1b70] sm:$0xff]
                %1054 = vst [vmem:[%s172 + $0xdc0] sm:$0xff] %v1053
                %v1055 = vld [vmem:[%s171 + $0x1b90] sm:$0xff]
                %1056 = vst [vmem:[%s172 + $0xdc8] sm:$0xff] %v1055
                %v1057 = vld [vmem:[%s171 + $0x1b98] sm:$0xff]
                %1058 = vst [vmem:[%s172 + $0xdd0] sm:$0xff] %v1057
                %v1059 = vld [vmem:[%s171 + $0x1ba0] sm:$0xff]
                %1060 = vst [vmem:[%s172 + $0xdd8] sm:$0xff] %v1059
                %v1061 = vld [vmem:[%s171 + $0x1bc0] sm:$0xff]
                %1062 = vst [vmem:[%s172 + $0xde0] sm:$0xff] %v1061
                %v1063 = vld [vmem:[%s171 + $0x1bc8] sm:$0xff]
                %1064 = vst [vmem:[%s172 + $0xde8] sm:$0xff] %v1063
                %v1065 = vld [vmem:[%s171 + $0x1bd0] sm:$0xff]
                %1066 = vst [vmem:[%s172 + $0xdf0] sm:$0xff] %v1065
                %v1067 = vld [vmem:[%s171 + $0x1bf0] sm:$0xff]
                %1068 = vst [vmem:[%s172 + $0xdf8] sm:$0xff] %v1067
                %v1069 = vld [vmem:[%s171 + $0x1bf8] sm:$0xff]
                %1070 = vst [vmem:[%s172 + $0xe00] sm:$0xff] %v1069
                %v1071 = vld [vmem:[%s171 + $0x1c00] sm:$0xff]
                %1072 = vst [vmem:[%s172 + $0xe08] sm:$0xff] %v1071
                %v1073 = vld [vmem:[%s171 + $0x1c20] sm:$0xff]
                %1074 = vst [vmem:[%s172 + $0xe10] sm:$0xff] %v1073
                %v1075 = vld [vmem:[%s171 + $0x1c28] sm:$0xff]
                %1076 = vst [vmem:[%s172 + $0xe18] sm:$0xff] %v1075
                %v1077 = vld [vmem:[%s171 + $0x1c30] sm:$0xff]
                %1078 = vst [vmem:[%s172 + $0xe20] sm:$0xff] %v1077
                %v1079 = vld [vmem:[%s171 + $0x1c50] sm:$0xff]
                %1080 = vst [vmem:[%s172 + $0xe28] sm:$0xff] %v1079
                %v1081 = vld [vmem:[%s171 + $0x1c58] sm:$0xff]
                %1082 = vst [vmem:[%s172 + $0xe30] sm:$0xff] %v1081
                %v1083 = vld [vmem:[%s171 + $0x1c60] sm:$0xff]
                %1084 = vst [vmem:[%s172 + $0xe38] sm:$0xff] %v1083
                %v1085 = vld [vmem:[%s171 + $0x1c80] sm:$0xff]
                %1086 = vst [vmem:[%s172 + $0xe40] sm:$0xff] %v1085
                %v1087 = vld [vmem:[%s171 + $0x1c88] sm:$0xff]
                %1088 = vst [vmem:[%s172 + $0xe48] sm:$0xff] %v1087
                %v1089 = vld [vmem:[%s171 + $0x1c90] sm:$0xff]
                %1090 = vst [vmem:[%s172 + $0xe50] sm:$0xff] %v1089
                %v1091 = vld [vmem:[%s171 + $0x1cb0] sm:$0xff]
                %1092 = vst [vmem:[%s172 + $0xe58] sm:$0xff] %v1091
                %v1093 = vld [vmem:[%s171 + $0x1cb8] sm:$0xff]
                %1094 = vst [vmem:[%s172 + $0xe60] sm:$0xff] %v1093
                %v1095 = vld [vmem:[%s171 + $0x1cc0] sm:$0xff]
                %1096 = vst [vmem:[%s172 + $0xe68] sm:$0xff] %v1095
                %v1097 = vld [vmem:[%s171 + $0x1ce0] sm:$0xff]
                %1098 = vst [vmem:[%s172 + $0xe70] sm:$0xff] %v1097
                %v1099 = vld [vmem:[%s171 + $0x1ce8] sm:$0xff]
                %1100 = vst [vmem:[%s172 + $0xe78] sm:$0xff] %v1099
                %v1101 = vld [vmem:[%s171 + $0x1cf0] sm:$0xff]
                %1102 = vst [vmem:[%s172 + $0xe80] sm:$0xff] %v1101
                %v1103 = vld [vmem:[%s171 + $0x1d10] sm:$0xff]
                %1104 = vst [vmem:[%s172 + $0xe88] sm:$0xff] %v1103
                %v1105 = vld [vmem:[%s171 + $0x1d18] sm:$0xff]
                %1106 = vst [vmem:[%s172 + $0xe90] sm:$0xff] %v1105
                %v1107 = vld [vmem:[%s171 + $0x1d20] sm:$0xff]
                %1108 = vst [vmem:[%s172 + $0xe98] sm:$0xff] %v1107
                %v1109 = vld [vmem:[%s171 + $0x1d40] sm:$0xff]
                %1110 = vst [vmem:[%s172 + $0xea0] sm:$0xff] %v1109
                %v1111 = vld [vmem:[%s171 + $0x1d48] sm:$0xff]
                %1112 = vst [vmem:[%s172 + $0xea8] sm:$0xff] %v1111
                %v1113 = vld [vmem:[%s171 + $0x1d50] sm:$0xff]
                %1114 = vst [vmem:[%s172 + $0xeb0] sm:$0xff] %v1113
                %v1115 = vld [vmem:[%s171 + $0x1d70] sm:$0xff]
                %1116 = vst [vmem:[%s172 + $0xeb8] sm:$0xff] %v1115
                %v1117 = vld [vmem:[%s171 + $0x1d78] sm:$0xff]
                %1118 = vst [vmem:[%s172 + $0xec0] sm:$0xff] %v1117
                %v1119 = vld [vmem:[%s171 + $0x1d80] sm:$0xff]
                %1120 = vst [vmem:[%s172 + $0xec8] sm:$0xff] %v1119
                %v1121 = vld [vmem:[%s171 + $0x1da0] sm:$0xff]
                %1122 = vst [vmem:[%s172 + $0xed0] sm:$0xff] %v1121
                %v1123 = vld [vmem:[%s171 + $0x1da8] sm:$0xff]
                %1124 = vst [vmem:[%s172 + $0xed8] sm:$0xff] %v1123
                %v1125 = vld [vmem:[%s171 + $0x1db0] sm:$0xff]
                %1126 = vst [vmem:[%s172 + $0xee0] sm:$0xff] %v1125
                %v1127 = vld [vmem:[%s171 + $0x1dd0] sm:$0xff]
                %1128 = vst [vmem:[%s172 + $0xee8] sm:$0xff] %v1127
                %v1129 = vld [vmem:[%s171 + $0x1dd8] sm:$0xff]
                %1130 = vst [vmem:[%s172 + $0xef0] sm:$0xff] %v1129
                %v1131 = vld [vmem:[%s171 + $0x1de0] sm:$0xff]
                %1132 = vst [vmem:[%s172 + $0xef8] sm:$0xff] %v1131
                %v1133 = vld [vmem:[%s171 + $0x1e00] sm:$0xff]
                %1134 = vst [vmem:[%s172 + $0xf00] sm:$0xff] %v1133
                %v1135 = vld [vmem:[%s171 + $0x1e08] sm:$0xff]
                %1136 = vst [vmem:[%s172 + $0xf08] sm:$0xff] %v1135
                %v1137 = vld [vmem:[%s171 + $0x1e10] sm:$0xff]
                %1138 = vst [vmem:[%s172 + $0xf10] sm:$0xff] %v1137
                %v1139 = vld [vmem:[%s171 + $0x1e30] sm:$0xff]
                %1140 = vst [vmem:[%s172 + $0xf18] sm:$0xff] %v1139
                %v1141 = vld [vmem:[%s171 + $0x1e38] sm:$0xff]
                %1142 = vst [vmem:[%s172 + $0xf20] sm:$0xff] %v1141
                %v1143 = vld [vmem:[%s171 + $0x1e40] sm:$0xff]
                %1144 = vst [vmem:[%s172 + $0xf28] sm:$0xff] %v1143
                %v1145 = vld [vmem:[%s171 + $0x1e60] sm:$0xff]
                %1146 = vst [vmem:[%s172 + $0xf30] sm:$0xff] %v1145
                %v1147 = vld [vmem:[%s171 + $0x1e68] sm:$0xff]
                %1148 = vst [vmem:[%s172 + $0xf38] sm:$0xff] %v1147
                %v1149 = vld [vmem:[%s171 + $0x1e70] sm:$0xff]
                %1150 = vst [vmem:[%s172 + $0xf40] sm:$0xff] %v1149
                %v1151 = vld [vmem:[%s171 + $0x1e90] sm:$0xff]
                %1152 = vst [vmem:[%s172 + $0xf48] sm:$0xff] %v1151
                %v1153 = vld [vmem:[%s171 + $0x1e98] sm:$0xff]
                %1154 = vst [vmem:[%s172 + $0xf50] sm:$0xff] %v1153
                %v1155 = vld [vmem:[%s171 + $0x1ea0] sm:$0xff]
                %1156 = vst [vmem:[%s172 + $0xf58] sm:$0xff] %v1155
                %v1157 = vld [vmem:[%s171 + $0x1ec0] sm:$0xff]
                %1158 = vst [vmem:[%s172 + $0xf60] sm:$0xff] %v1157
                %v1159 = vld [vmem:[%s171 + $0x1ec8] sm:$0xff]
                %1160 = vst [vmem:[%s172 + $0xf68] sm:$0xff] %v1159
                %v1161 = vld [vmem:[%s171 + $0x1ed0] sm:$0xff]
                %1162 = vst [vmem:[%s172 + $0xf70] sm:$0xff] %v1161
                %v1163 = vld [vmem:[%s171 + $0x1ef0] sm:$0xff]
                %1164 = vst [vmem:[%s172 + $0xf78] sm:$0xff] %v1163
                %v1165 = vld [vmem:[%s171 + $0x1ef8] sm:$0xff]
                %1166 = vst [vmem:[%s172 + $0xf80] sm:$0xff] %v1165
                %v1167 = vld [vmem:[%s171 + $0x1f00] sm:$0xff]
                %1168 = vst [vmem:[%s172 + $0xf88] sm:$0xff] %v1167
                %v1169 = vld [vmem:[%s171 + $0x1f20] sm:$0xff]
                %1170 = vst [vmem:[%s172 + $0xf90] sm:$0xff] %v1169
                %v1171 = vld [vmem:[%s171 + $0x1f28] sm:$0xff]
                %1172 = vst [vmem:[%s172 + $0xf98] sm:$0xff] %v1171
                %v1173 = vld [vmem:[%s171 + $0x1f30] sm:$0xff]
                %1174 = vst [vmem:[%s172 + $0xfa0] sm:$0xff] %v1173
                %v1175 = vld [vmem:[%s171 + $0x1f50] sm:$0xff]
                %1176 = vst [vmem:[%s172 + $0xfa8] sm:$0xff] %v1175
                %v1177 = vld [vmem:[%s171 + $0x1f58] sm:$0xff]
                %1178 = vst [vmem:[%s172 + $0xfb0] sm:$0xff] %v1177
                %v1179 = vld [vmem:[%s171 + $0x1f60] sm:$0xff]
                %1180 = vst [vmem:[%s172 + $0xfb8] sm:$0xff] %v1179
                %v1181 = vld [vmem:[%s171 + $0x1f80] sm:$0xff]
                %1182 = vst [vmem:[%s172 + $0xfc0] sm:$0xff] %v1181
                %v1183 = vld [vmem:[%s171 + $0x1f88] sm:$0xff]
                %1184 = vst [vmem:[%s172 + $0xfc8] sm:$0xff] %v1183
                %v1185 = vld [vmem:[%s171 + $0x1f90] sm:$0xff]
                %1186 = vst [vmem:[%s172 + $0xfd0] sm:$0xff] %v1185
                %v1187 = vld [vmem:[%s171 + $0x1fb0] sm:$0xff]
                %1188 = vst [vmem:[%s172 + $0xfd8] sm:$0xff] %v1187
                %v1189 = vld [vmem:[%s171 + $0x1fb8] sm:$0xff]
                %1190 = vst [vmem:[%s172 + $0xfe0] sm:$0xff] %v1189
                %v1191 = vld [vmem:[%s171 + $0x1fc0] sm:$0xff]
                %1192 = vst [vmem:[%s172 + $0xfe8] sm:$0xff] %v1191
                %v1193 = vld [vmem:[%s171 + $0x1fe0] sm:$0xff]
                %1194 = vst [vmem:[%s172 + $0xff0] sm:$0xff] %v1193
                %v1195 = vld [vmem:[%s171 + $0x1fe8] sm:$0xff]
                %1196 = vst [vmem:[%s172 + $0xff8] sm:$0xff] %v1195
                %v1197 = vld [vmem:[%s171 + $0x1ff0] sm:$0xff]
                %1198 = vst [vmem:[%s172 + $0x1000] sm:$0xff] %v1197
                %v1199 = vld [vmem:[%s171 + $0x2010] sm:$0xff]
                %1200 = vst [vmem:[%s172 + $0x1008] sm:$0xff] %v1199
                %v1201 = vld [vmem:[%s171 + $0x2018] sm:$0xff]
                %1202 = vst [vmem:[%s172 + $0x1010] sm:$0xff] %v1201
                %v1203 = vld [vmem:[%s171 + $0x2020] sm:$0xff]
                %1204 = vst [vmem:[%s172 + $0x1018] sm:$0xff] %v1203
                %v1205 = vld [vmem:[%s171 + $0x2040] sm:$0xff]
                %1206 = vst [vmem:[%s172 + $0x1020] sm:$0xff] %v1205
                %v1207 = vld [vmem:[%s171 + $0x2048] sm:$0xff]
                %1208 = vst [vmem:[%s172 + $0x1028] sm:$0xff] %v1207
                %v1209 = vld [vmem:[%s171 + $0x2050] sm:$0xff]
                %1210 = vst [vmem:[%s172 + $0x1030] sm:$0xff] %v1209
                %v1211 = vld [vmem:[%s171 + $0x2070] sm:$0xff]
                %1212 = vst [vmem:[%s172 + $0x1038] sm:$0xff] %v1211
                %v1213 = vld [vmem:[%s171 + $0x2078] sm:$0xff]
                %1214 = vst [vmem:[%s172 + $0x1040] sm:$0xff] %v1213
                %v1215 = vld [vmem:[%s171 + $0x2080] sm:$0xff]
                %1216 = vst [vmem:[%s172 + $0x1048] sm:$0xff] %v1215
                %v1217 = vld [vmem:[%s171 + $0x20a0] sm:$0xff]
                %1218 = vst [vmem:[%s172 + $0x1050] sm:$0xff] %v1217
                %v1219 = vld [vmem:[%s171 + $0x20a8] sm:$0xff]
                %1220 = vst [vmem:[%s172 + $0x1058] sm:$0xff] %v1219
                %v1221 = vld [vmem:[%s171 + $0x20b0] sm:$0xff]
                %1222 = vst [vmem:[%s172 + $0x1060] sm:$0xff] %v1221
                %v1223 = vld [vmem:[%s171 + $0x20d0] sm:$0xff]
                %1224 = vst [vmem:[%s172 + $0x1068] sm:$0xff] %v1223
                %v1225 = vld [vmem:[%s171 + $0x20d8] sm:$0xff]
                %1226 = vst [vmem:[%s172 + $0x1070] sm:$0xff] %v1225
                %v1227 = vld [vmem:[%s171 + $0x20e0] sm:$0xff]
                %1228 = vst [vmem:[%s172 + $0x1078] sm:$0xff] %v1227
                %v1229 = vld [vmem:[%s171 + $0x2100] sm:$0xff]
                %1230 = vst [vmem:[%s172 + $0x1080] sm:$0xff] %v1229
                %v1231 = vld [vmem:[%s171 + $0x2108] sm:$0xff]
                %1232 = vst [vmem:[%s172 + $0x1088] sm:$0xff] %v1231
                %v1233 = vld [vmem:[%s171 + $0x2110] sm:$0xff]
                %1234 = vst [vmem:[%s172 + $0x1090] sm:$0xff] %v1233
                %v1235 = vld [vmem:[%s171 + $0x2130] sm:$0xff]
                %1236 = vst [vmem:[%s172 + $0x1098] sm:$0xff] %v1235
                %v1237 = vld [vmem:[%s171 + $0x2138] sm:$0xff]
                %1238 = vst [vmem:[%s172 + $0x10a0] sm:$0xff] %v1237
                %v1239 = vld [vmem:[%s171 + $0x2140] sm:$0xff]
                %1240 = vst [vmem:[%s172 + $0x10a8] sm:$0xff] %v1239
                %v1241 = vld [vmem:[%s171 + $0x2160] sm:$0xff]
                %1242 = vst [vmem:[%s172 + $0x10b0] sm:$0xff] %v1241
                %v1243 = vld [vmem:[%s171 + $0x2168] sm:$0xff]
                %1244 = vst [vmem:[%s172 + $0x10b8] sm:$0xff] %v1243
                %v1245 = vld [vmem:[%s171 + $0x2170] sm:$0xff]
                %1246 = vst [vmem:[%s172 + $0x10c0] sm:$0xff] %v1245
                %v1247 = vld [vmem:[%s171 + $0x2190] sm:$0xff]
                %1248 = vst [vmem:[%s172 + $0x10c8] sm:$0xff] %v1247
                %v1249 = vld [vmem:[%s171 + $0x2198] sm:$0xff]
                %1250 = vst [vmem:[%s172 + $0x10d0] sm:$0xff] %v1249
                %v1251 = vld [vmem:[%s171 + $0x21a0] sm:$0xff]
                %1252 = vst [vmem:[%s172 + $0x10d8] sm:$0xff] %v1251
                %v1253 = vld [vmem:[%s171 + $0x21c0] sm:$0xff]
                %1254 = vst [vmem:[%s172 + $0x10e0] sm:$0xff] %v1253
                %v1255 = vld [vmem:[%s171 + $0x21c8] sm:$0xff]
                %1256 = vst [vmem:[%s172 + $0x10e8] sm:$0xff] %v1255
                %v1257 = vld [vmem:[%s171 + $0x21d0] sm:$0xff]
                %1258 = vst [vmem:[%s172 + $0x10f0] sm:$0xff] %v1257
                %v1259 = vld [vmem:[%s171 + $0x21f0] sm:$0xff]
                %1260 = vst [vmem:[%s172 + $0x10f8] sm:$0xff] %v1259
                %v1261 = vld [vmem:[%s171 + $0x21f8] sm:$0xff]
                %1262 = vst [vmem:[%s172 + $0x1100] sm:$0xff] %v1261
                %v1263 = vld [vmem:[%s171 + $0x2200] sm:$0xff]
                %1264 = vst [vmem:[%s172 + $0x1108] sm:$0xff] %v1263
                %v1265 = vld [vmem:[%s171 + $0x2220] sm:$0xff]
                %1266 = vst [vmem:[%s172 + $0x1110] sm:$0xff] %v1265
                %v1267 = vld [vmem:[%s171 + $0x2228] sm:$0xff]
                %1268 = vst [vmem:[%s172 + $0x1118] sm:$0xff] %v1267
                %v1269 = vld [vmem:[%s171 + $0x2230] sm:$0xff]
                %1270 = vst [vmem:[%s172 + $0x1120] sm:$0xff] %v1269
                %v1271 = vld [vmem:[%s171 + $0x2250] sm:$0xff]
                %1272 = vst [vmem:[%s172 + $0x1128] sm:$0xff] %v1271
                %v1273 = vld [vmem:[%s171 + $0x2258] sm:$0xff]
                %1274 = vst [vmem:[%s172 + $0x1130] sm:$0xff] %v1273
                %v1275 = vld [vmem:[%s171 + $0x2260] sm:$0xff]
                %1276 = vst [vmem:[%s172 + $0x1138] sm:$0xff] %v1275
                %v1277 = vld [vmem:[%s171 + $0x2280] sm:$0xff]
                %1278 = vst [vmem:[%s172 + $0x1140] sm:$0xff] %v1277
                %v1279 = vld [vmem:[%s171 + $0x2288] sm:$0xff]
                %1280 = vst [vmem:[%s172 + $0x1148] sm:$0xff] %v1279
                %v1281 = vld [vmem:[%s171 + $0x2290] sm:$0xff]
                %1282 = vst [vmem:[%s172 + $0x1150] sm:$0xff] %v1281
                %v1283 = vld [vmem:[%s171 + $0x22b0] sm:$0xff]
                %1284 = vst [vmem:[%s172 + $0x1158] sm:$0xff] %v1283
                %v1285 = vld [vmem:[%s171 + $0x22b8] sm:$0xff]
                %1286 = vst [vmem:[%s172 + $0x1160] sm:$0xff] %v1285
                %v1287 = vld [vmem:[%s171 + $0x22c0] sm:$0xff]
                %1288 = vst [vmem:[%s172 + $0x1168] sm:$0xff] %v1287
                %v1289 = vld [vmem:[%s171 + $0x22e0] sm:$0xff]
                %1290 = vst [vmem:[%s172 + $0x1170] sm:$0xff] %v1289
                %v1291 = vld [vmem:[%s171 + $0x22e8] sm:$0xff]
                %1292 = vst [vmem:[%s172 + $0x1178] sm:$0xff] %v1291
                %v1293 = vld [vmem:[%s171 + $0x22f0] sm:$0xff]
                %1294 = vst [vmem:[%s172 + $0x1180] sm:$0xff] %v1293
                %v1295 = vld [vmem:[%s171 + $0x2310] sm:$0xff]
                %1296 = vst [vmem:[%s172 + $0x1188] sm:$0xff] %v1295
                %v1297 = vld [vmem:[%s171 + $0x2318] sm:$0xff]
                %1298 = vst [vmem:[%s172 + $0x1190] sm:$0xff] %v1297
                %v1299 = vld [vmem:[%s171 + $0x2320] sm:$0xff]
                %1300 = vst [vmem:[%s172 + $0x1198] sm:$0xff] %v1299
                %v1301 = vld [vmem:[%s171 + $0x2340] sm:$0xff]
                %1302 = vst [vmem:[%s172 + $0x11a0] sm:$0xff] %v1301
                %v1303 = vld [vmem:[%s171 + $0x2348] sm:$0xff]
                %1304 = vst [vmem:[%s172 + $0x11a8] sm:$0xff] %v1303
                %v1305 = vld [vmem:[%s171 + $0x2350] sm:$0xff]
                %1306 = vst [vmem:[%s172 + $0x11b0] sm:$0xff] %v1305
                %v1307 = vld [vmem:[%s171 + $0x2370] sm:$0xff]
                %1308 = vst [vmem:[%s172 + $0x11b8] sm:$0xff] %v1307
                %v1309 = vld [vmem:[%s171 + $0x2378] sm:$0xff]
                %1310 = vst [vmem:[%s172 + $0x11c0] sm:$0xff] %v1309
                %v1311 = vld [vmem:[%s171 + $0x2380] sm:$0xff]
                %1312 = vst [vmem:[%s172 + $0x11c8] sm:$0xff] %v1311
                %v1313 = vld [vmem:[%s171 + $0x23a0] sm:$0xff]
                %1314 = vst [vmem:[%s172 + $0x11d0] sm:$0xff] %v1313
                %v1315 = vld [vmem:[%s171 + $0x23a8] sm:$0xff]
                %1316 = vst [vmem:[%s172 + $0x11d8] sm:$0xff] %v1315
                %v1317 = vld [vmem:[%s171 + $0x23b0] sm:$0xff]
                %1318 = vst [vmem:[%s172 + $0x11e0] sm:$0xff] %v1317
                %v1319 = vld [vmem:[%s171 + $0x23d0] sm:$0xff]
                %1320 = vst [vmem:[%s172 + $0x11e8] sm:$0xff] %v1319
                %v1321 = vld [vmem:[%s171 + $0x23d8] sm:$0xff]
                %1322 = vst [vmem:[%s172 + $0x11f0] sm:$0xff] %v1321
                %v1323 = vld [vmem:[%s171 + $0x23e0] sm:$0xff]
                %1324 = vst [vmem:[%s172 + $0x11f8] sm:$0xff] %v1323
                %v1325 = vld [vmem:[%s171 + $0x2400] sm:$0xff]
                %1326 = vst [vmem:[%s172 + $0x1200] sm:$0xff] %v1325
                %v1327 = vld [vmem:[%s171 + $0x2408] sm:$0xff]
                %1328 = vst [vmem:[%s172 + $0x1208] sm:$0xff] %v1327
                %v1329 = vld [vmem:[%s171 + $0x2410] sm:$0xff]
                %1330 = vst [vmem:[%s172 + $0x1210] sm:$0xff] %v1329
                %v1331 = vld [vmem:[%s171 + $0x2430] sm:$0xff]
                %1332 = vst [vmem:[%s172 + $0x1218] sm:$0xff] %v1331
                %v1333 = vld [vmem:[%s171 + $0x2438] sm:$0xff]
                %1334 = vst [vmem:[%s172 + $0x1220] sm:$0xff] %v1333
                %v1335 = vld [vmem:[%s171 + $0x2440] sm:$0xff]
                %1336 = vst [vmem:[%s172 + $0x1228] sm:$0xff] %v1335
                %v1337 = vld [vmem:[%s171 + $0x2460] sm:$0xff]
                %1338 = vst [vmem:[%s172 + $0x1230] sm:$0xff] %v1337
                %v1339 = vld [vmem:[%s171 + $0x2468] sm:$0xff]
                %1340 = vst [vmem:[%s172 + $0x1238] sm:$0xff] %v1339
                %v1341 = vld [vmem:[%s171 + $0x2470] sm:$0xff]
                %1342 = vst [vmem:[%s172 + $0x1240] sm:$0xff] %v1341
                %v1343 = vld [vmem:[%s171 + $0x2490] sm:$0xff]
                %1344 = vst [vmem:[%s172 + $0x1248] sm:$0xff] %v1343
                %v1345 = vld [vmem:[%s171 + $0x2498] sm:$0xff]
                %1346 = vst [vmem:[%s172 + $0x1250] sm:$0xff] %v1345
                %v1347 = vld [vmem:[%s171 + $0x24a0] sm:$0xff]
                %1348 = vst [vmem:[%s172 + $0x1258] sm:$0xff] %v1347
                %v1349 = vld [vmem:[%s171 + $0x24c0] sm:$0xff]
                %1350 = vst [vmem:[%s172 + $0x1260] sm:$0xff] %v1349
                %v1351 = vld [vmem:[%s171 + $0x24c8] sm:$0xff]
                %1352 = vst [vmem:[%s172 + $0x1268] sm:$0xff] %v1351
                %v1353 = vld [vmem:[%s171 + $0x24d0] sm:$0xff]
                %1354 = vst [vmem:[%s172 + $0x1270] sm:$0xff] %v1353
                %v1355 = vld [vmem:[%s171 + $0x24f0] sm:$0xff]
                %1356 = vst [vmem:[%s172 + $0x1278] sm:$0xff] %v1355
                %v1357 = vld [vmem:[%s171 + $0x24f8] sm:$0xff]
                %1358 = vst [vmem:[%s172 + $0x1280] sm:$0xff] %v1357
                %v1359 = vld [vmem:[%s171 + $0x2500] sm:$0xff]
                %1360 = vst [vmem:[%s172 + $0x1288] sm:$0xff] %v1359
                %v1361 = vld [vmem:[%s171 + $0x2520] sm:$0xff]
                %1362 = vst [vmem:[%s172 + $0x1290] sm:$0xff] %v1361
                %v1363 = vld [vmem:[%s171 + $0x2528] sm:$0xff]
                %1364 = vst [vmem:[%s172 + $0x1298] sm:$0xff] %v1363
                %v1365 = vld [vmem:[%s171 + $0x2530] sm:$0xff]
                %1366 = vst [vmem:[%s172 + $0x12a0] sm:$0xff] %v1365
                %v1367 = vld [vmem:[%s171 + $0x2550] sm:$0xff]
                %1368 = vst [vmem:[%s172 + $0x12a8] sm:$0xff] %v1367
                %v1369 = vld [vmem:[%s171 + $0x2558] sm:$0xff]
                %1370 = vst [vmem:[%s172 + $0x12b0] sm:$0xff] %v1369
                %v1371 = vld [vmem:[%s171 + $0x2560] sm:$0xff]
                %1372 = vst [vmem:[%s172 + $0x12b8] sm:$0xff] %v1371
              $region41: #{tpu_custom_call.1} parent=35 // loop_footer
                %s170 = sadd.s32 1, %s166
              $region42: #{tpu_custom_call.1} parent=35 // loop_footer_branch
                %165 = sbr.rel target = $region38
              $region43: #{tpu_custom_call.1} parent=35 // loop_exit
                _
            $region36: #{tpu_custom_call.1} parent=31 // pred_fallthru
              _
            // Predicated region
            $region44: #{tpu_custom_call.1} parent=31 // pred_check
              _
            $region45: #{tpu_custom_call.1} parent=31 // pred_check_branch
              %1374 = sbr.rel target = $region47
            $region46: #{tpu_custom_call.1} parent=31 // pred_region
              _
            $region47: #{tpu_custom_call.1} parent=31 // pred_fallthru
              _
          $region32: #{tpu_custom_call.1} parent=27 // pred_fallthru
            _
          %1375 = vnop
        $region28: #{tpu_custom_call.1} parent=23 // pred_fallthru
          _
      $region24: #{tpu_custom_call.1} parent=5 // pred_fallthru
        _
      %p1376 = scmp.le.s32.totalorder 1, %s14
      %p1377 = scmp.lt.s32.totalorder %s14, 5
      %p1378 = pnand %p1376, %p1377
      %p1379 = pneg %p1378
      // Predicated region
      $region48: #{tpu_custom_call.1} parent=5 // pred_check
        _
      $region49: #{tpu_custom_call.1} parent=5 // pred_check_branch
        %1381 = sbr.rel (%p1378) target = $region51
      $region50: #{tpu_custom_call.1} parent=5 // pred_region
        %s1382 = ssub.s32 %s14, 1
        %s1383 = sand.u32 %s83, 1
        %s1384 = sand.u32 %s83, 1
        %s1385 = smul.addr %s1384, 4800
        %s1386 = scalar_lea.vmem [#allocation3], %s1385
        // Predicated region
        $region52: #{tpu_custom_call.1} parent=50 // pred_check
          %p1387 = pneg %p96
        $region53: #{tpu_custom_call.1} parent=50 // pred_check_branch
          %1389 = sbr.rel (%p1387) target = $region55
        $region54: #{tpu_custom_call.1} parent=50 // pred_region
          _
        $region55: #{tpu_custom_call.1} parent=50 // pred_fallthru
          _
        %p1390 = pneg %p47
        %p1391 = pneg %p44
        %p1392 = pneg %p68
        %p1393 = pneg %p65
        %s1394 = sand.u32 %s83, 1
        %s1395 = sand.u32 %s83, 1
        %s1396 = smul.addr %s1395, 4800
        %s1397 = scalar_lea.vmem [#allocation3], %s1396
        %p1398 = pneg %p96
        %p1399 = pneg %p93
        %p1400 = pneg %p124
        %p1401 = pneg %p121
        %s1402 = sand.u32 %s111, 1
        %s1403 = scalar_lea.sflag [#allocation5], %s1402
        %s1404 = sand.u32 %s111, 1
        %s1405 = smul.addr %s1404, 24
        %s1406 = scalar_lea.vmem [#allocation4], %s1405
        %s1407 = smul.u32 3, %s24
        %s1408 = smul.u32 3, %s24
        %v1409 = vld [vmem:[%s1386] sm:$0xff]
        %v1410 = vld [vmem:[%s1386 + $0x8] sm:$0xff]
        %v1411 = vld [vmem:[%s1386 + $0x10] sm:$0xff]
        %v1412 = vld [vmem:[%s1386 + $0x18] sm:$0xff]
        %v1413 = vld [vmem:[%s1386 + $0x20] sm:$0xff]
        %v1414 = vld [vmem:[%s1386 + $0x28] sm:$0xff]
        %v1415 = vld [vmem:[%s1386 + $0x30] sm:$0xff]
        %v1416 = vld [vmem:[%s1386 + $0x38] sm:$0xff]
        %v1417 = vld [vmem:[%s1386 + $0x40] sm:$0xff]
        %v1418 = vld [vmem:[%s1386 + $0x48] sm:$0xff]
        %v1419 = vld [vmem:[%s1386 + $0x50] sm:$0xff]
        %v1420 = vld [vmem:[%s1386 + $0x58] sm:$0xff]
        %v1421 = vld [vmem:[%s1386 + $0x60] sm:$0xff]
        %v1422 = vld [vmem:[%s1386 + $0x68] sm:$0xff]
        %v1423 = vld [vmem:[%s1386 + $0x70] sm:$0xff]
        %v1424 = vld [vmem:[%s1386 + $0x78] sm:$0xff]
        %v1425 = vld [vmem:[%s1386 + $0x80] sm:$0xff]
        %v1426 = vld [vmem:[%s1386 + $0x88] sm:$0xff]
        %v1427 = vld [vmem:[%s1386 + $0x90] sm:$0xff]
        %v1428 = vld [vmem:[%s1386 + $0x98] sm:$0xff]
        %v1429 = vld [vmem:[%s1386 + $0xa0] sm:$0xff]
        %v1430 = vld [vmem:[%s1386 + $0xa8] sm:$0xff]
        %v1431 = vld [vmem:[%s1386 + $0xb0] sm:$0xff]
        %v1432 = vld [vmem:[%s1386 + $0xb8] sm:$0xff]
        %v1433 = vld [vmem:[%s1386 + $0xc0] sm:$0xff]
        %v1434 = vld [vmem:[%s1386 + $0xc8] sm:$0xff]
        %v1435 = vld [vmem:[%s1386 + $0xd0] sm:$0xff]
        %v1436 = vld [vmem:[%s1386 + $0xd8] sm:$0xff]
        %v1437 = vld [vmem:[%s1386 + $0xe0] sm:$0xff]
        %v1438 = vld [vmem:[%s1386 + $0xe8] sm:$0xff]
        %v1439 = vld [vmem:[%s1386 + $0xf0] sm:$0xff]
        %v1440 = vld [vmem:[%s1386 + $0xf8] sm:$0xff]
        %v1441 = vld [vmem:[%s1386 + $0x100] sm:$0xff]
        %v1442 = vld [vmem:[%s1386 + $0x108] sm:$0xff]
        %v1443 = vld [vmem:[%s1386 + $0x110] sm:$0xff]
        %v1444 = vld [vmem:[%s1386 + $0x118] sm:$0xff]
        %v1445 = vld [vmem:[%s1386 + $0x120] sm:$0xff]
        %v1446 = vld [vmem:[%s1386 + $0x128] sm:$0xff]
        %v1447 = vld [vmem:[%s1386 + $0x130] sm:$0xff]
        %v1448 = vld [vmem:[%s1386 + $0x138] sm:$0xff]
        %v1449 = vld [vmem:[%s1386 + $0x140] sm:$0xff]
        %v1450 = vld [vmem:[%s1386 + $0x148] sm:$0xff]
        %v1451 = vld [vmem:[%s1386 + $0x150] sm:$0xff]
        %v1452 = vld [vmem:[%s1386 + $0x158] sm:$0xff]
        %v1453 = vld [vmem:[%s1386 + $0x160] sm:$0xff]
        %v1454 = vld [vmem:[%s1386 + $0x168] sm:$0xff]
        %v1455 = vld [vmem:[%s1386 + $0x170] sm:$0xff]
        %v1456 = vld [vmem:[%s1386 + $0x178] sm:$0xff]
        %v1457 = vld [vmem:[%s1386 + $0x180] sm:$0xff]
        %v1458 = vld [vmem:[%s1386 + $0x188] sm:$0xff]
        %v1459 = vld [vmem:[%s1386 + $0x190] sm:$0xff]
        %v1460 = vld [vmem:[%s1386 + $0x198] sm:$0xff]
        %v1461 = vld [vmem:[%s1386 + $0x1a0] sm:$0xff]
        %v1462 = vld [vmem:[%s1386 + $0x1a8] sm:$0xff]
        %v1463 = vld [vmem:[%s1386 + $0x1b0] sm:$0xff]
        %v1464 = vld [vmem:[%s1386 + $0x1b8] sm:$0xff]
        %v1465 = vld [vmem:[%s1386 + $0x1c0] sm:$0xff]
        %v1466 = vld [vmem:[%s1386 + $0x1c8] sm:$0xff]
        %v1467 = vld [vmem:[%s1386 + $0x1d0] sm:$0xff]
        %v1468 = vld [vmem:[%s1386 + $0x1d8] sm:$0xff]
        %v1469 = vld [vmem:[%s1386 + $0x1e0] sm:$0xff]
        %v1470 = vld [vmem:[%s1386 + $0x1e8] sm:$0xff]
        %v1471 = vld [vmem:[%s1386 + $0x1f0] sm:$0xff]
        %v1472 = vld [vmem:[%s1386 + $0x1f8] sm:$0xff]
        %v1473 = vld [vmem:[%s1386 + $0x200] sm:$0xff]
        %v1474 = vld [vmem:[%s1386 + $0x208] sm:$0xff]
        %v1475 = vld [vmem:[%s1386 + $0x210] sm:$0xff]
        %v1476 = vld [vmem:[%s1386 + $0x218] sm:$0xff]
        %v1477 = vld [vmem:[%s1386 + $0x220] sm:$0xff]
        %v1478 = vld [vmem:[%s1386 + $0x228] sm:$0xff]
        %v1479 = vld [vmem:[%s1386 + $0x230] sm:$0xff]
        %v1480 = vld [vmem:[%s1386 + $0x238] sm:$0xff]
        %v1481 = vld [vmem:[%s1386 + $0x240] sm:$0xf]
        %v1482 = vld [vmem:[%s1386 + $0x248] sm:$0xf]
        %v1483 = vld [vmem:[%s1386 + $0x250] sm:$0xf]
        %v1484 = vld [vmem:[%s1386 + $0x258] sm:$0xff]
        %v1485 = vld [vmem:[%s1386 + $0x260] sm:$0xff]
        %v1486 = vld [vmem:[%s1386 + $0x268] sm:$0xff]
        %v1487 = vld [vmem:[%s1386 + $0x270] sm:$0xff]
        %v1488 = vld [vmem:[%s1386 + $0x278] sm:$0xff]
        %v1489 = vld [vmem:[%s1386 + $0x280] sm:$0xff]
        %v1490 = vld [vmem:[%s1386 + $0x288] sm:$0xff]
        %v1491 = vld [vmem:[%s1386 + $0x290] sm:$0xff]
        %v1492 = vld [vmem:[%s1386 + $0x298] sm:$0xff]
        %v1493 = vld [vmem:[%s1386 + $0x2a0] sm:$0xff]
        %v1494 = vld [vmem:[%s1386 + $0x2a8] sm:$0xff]
        %v1495 = vld [vmem:[%s1386 + $0x2b0] sm:$0xff]
        %v1496 = vld [vmem:[%s1386 + $0x2b8] sm:$0xff]
        %v1497 = vld [vmem:[%s1386 + $0x2c0] sm:$0xff]
        %v1498 = vld [vmem:[%s1386 + $0x2c8] sm:$0xff]
        %v1499 = vld [vmem:[%s1386 + $0x2d0] sm:$0xff]
        %v1500 = vld [vmem:[%s1386 + $0x2d8] sm:$0xff]
        %v1501 = vld [vmem:[%s1386 + $0x2e0] sm:$0xff]
        %v1502 = vld [vmem:[%s1386 + $0x2e8] sm:$0xff]
        %v1503 = vld [vmem:[%s1386 + $0x2f0] sm:$0xff]
        %v1504 = vld [vmem:[%s1386 + $0x2f8] sm:$0xff]
        %v1505 = vld [vmem:[%s1386 + $0x300] sm:$0xff]
        %v1506 = vld [vmem:[%s1386 + $0x308] sm:$0xff]
        %v1507 = vld [vmem:[%s1386 + $0x310] sm:$0xff]
        %v1508 = vld [vmem:[%s1386 + $0x318] sm:$0xff]
        %v1509 = vld [vmem:[%s1386 + $0x320] sm:$0xff]
        %v1510 = vld [vmem:[%s1386 + $0x328] sm:$0xff]
        %v1511 = vld [vmem:[%s1386 + $0x330] sm:$0xff]
        %v1512 = vld [vmem:[%s1386 + $0x338] sm:$0xff]
        %v1513 = vld [vmem:[%s1386 + $0x340] sm:$0xff]
        %v1514 = vld [vmem:[%s1386 + $0x348] sm:$0xff]
        %v1515 = vld [vmem:[%s1386 + $0x350] sm:$0xff]
        %v1516 = vld [vmem:[%s1386 + $0x358] sm:$0xff]
        %v1517 = vld [vmem:[%s1386 + $0x360] sm:$0xff]
        %v1518 = vld [vmem:[%s1386 + $0x368] sm:$0xff]
        %v1519 = vld [vmem:[%s1386 + $0x370] sm:$0xff]
        %v1520 = vld [vmem:[%s1386 + $0x378] sm:$0xff]
        %v1521 = vld [vmem:[%s1386 + $0x380] sm:$0xff]
        %v1522 = vld [vmem:[%s1386 + $0x388] sm:$0xff]
        %v1523 = vld [vmem:[%s1386 + $0x390] sm:$0xff]
        %v1524 = vld [vmem:[%s1386 + $0x398] sm:$0xff]
        %v1525 = vld [vmem:[%s1386 + $0x3a0] sm:$0xff]
        %v1526 = vld [vmem:[%s1386 + $0x3a8] sm:$0xff]
        %v1527 = vld [vmem:[%s1386 + $0x3b0] sm:$0xff]
        %v1528 = vld [vmem:[%s1386 + $0x3b8] sm:$0xff]
        %v1529 = vld [vmem:[%s1386 + $0x3c0] sm:$0xff]
        %v1530 = vld [vmem:[%s1386 + $0x3c8] sm:$0xff]
        %v1531 = vld [vmem:[%s1386 + $0x3d0] sm:$0xff]
        %v1532 = vld [vmem:[%s1386 + $0x3d8] sm:$0xff]
        %v1533 = vld [vmem:[%s1386 + $0x3e0] sm:$0xff]
        %v1534 = vld [vmem:[%s1386 + $0x3e8] sm:$0xff]
        %v1535 = vld [vmem:[%s1386 + $0x3f0] sm:$0xff]
        %v1536 = vld [vmem:[%s1386 + $0x3f8] sm:$0xff]
        %v1537 = vld [vmem:[%s1386 + $0x400] sm:$0xff]
        %v1538 = vld [vmem:[%s1386 + $0x408] sm:$0xff]
        %v1539 = vld [vmem:[%s1386 + $0x410] sm:$0xff]
        %v1540 = vld [vmem:[%s1386 + $0x418] sm:$0xff]
        %v1541 = vld [vmem:[%s1386 + $0x420] sm:$0xff]
        %v1542 = vld [vmem:[%s1386 + $0x428] sm:$0xff]
        %v1543 = vld [vmem:[%s1386 + $0x430] sm:$0xff]
        %v1544 = vld [vmem:[%s1386 + $0x438] sm:$0xff]
        %v1545 = vld [vmem:[%s1386 + $0x440] sm:$0xff]
        %v1546 = vld [vmem:[%s1386 + $0x448] sm:$0xff]
        %v1547 = vld [vmem:[%s1386 + $0x450] sm:$0xff]
        %v1548 = vld [vmem:[%s1386 + $0x458] sm:$0xff]
        %v1549 = vld [vmem:[%s1386 + $0x460] sm:$0xff]
        %v1550 = vld [vmem:[%s1386 + $0x468] sm:$0xff]
        %v1551 = vld [vmem:[%s1386 + $0x470] sm:$0xff]
        %v1552 = vld [vmem:[%s1386 + $0x478] sm:$0xff]
        %v1553 = vld [vmem:[%s1386 + $0x480] sm:$0xff]
        %v1554 = vld [vmem:[%s1386 + $0x488] sm:$0xff]
        %v1555 = vld [vmem:[%s1386 + $0x490] sm:$0xff]
        %v1556 = vld [vmem:[%s1386 + $0x498] sm:$0xf]
        %v1557 = vld [vmem:[%s1386 + $0x4a0] sm:$0xf]
        %v1558 = vld [vmem:[%s1386 + $0x4a8] sm:$0xf]
        %v1559 = vld [vmem:[%s1386 + $0x4b0] sm:$0xff]
        %v1560 = vld [vmem:[%s1386 + $0x4b8] sm:$0xff]
        %v1561 = vld [vmem:[%s1386 + $0x4c0] sm:$0xff]
        %v1562 = vld [vmem:[%s1386 + $0x4c8] sm:$0xff]
        %v1563 = vld [vmem:[%s1386 + $0x4d0] sm:$0xff]
        %v1564 = vld [vmem:[%s1386 + $0x4d8] sm:$0xff]
        %v1565 = vld [vmem:[%s1386 + $0x4e0] sm:$0xff]
        %v1566 = vld [vmem:[%s1386 + $0x4e8] sm:$0xff]
        %v1567 = vld [vmem:[%s1386 + $0x4f0] sm:$0xff]
        %v1568 = vld [vmem:[%s1386 + $0x4f8] sm:$0xff]
        %v1569 = vld [vmem:[%s1386 + $0x500] sm:$0xff]
        %v1570 = vld [vmem:[%s1386 + $0x508] sm:$0xff]
        %v1571 = vld [vmem:[%s1386 + $0x510] sm:$0xff]
        %v1572 = vld [vmem:[%s1386 + $0x518] sm:$0xff]
        %v1573 = vld [vmem:[%s1386 + $0x520] sm:$0xff]
        %v1574 = vld [vmem:[%s1386 + $0x528] sm:$0xff]
        %v1575 = vld [vmem:[%s1386 + $0x530] sm:$0xff]
        %v1576 = vld [vmem:[%s1386 + $0x538] sm:$0xff]
        %v1577 = vld [vmem:[%s1386 + $0x540] sm:$0xff]
        %v1578 = vld [vmem:[%s1386 + $0x548] sm:$0xff]
        %v1579 = vld [vmem:[%s1386 + $0x550] sm:$0xff]
        %v1580 = vld [vmem:[%s1386 + $0x558] sm:$0xff]
        %v1581 = vld [vmem:[%s1386 + $0x560] sm:$0xff]
        %v1582 = vld [vmem:[%s1386 + $0x568] sm:$0xff]
        %v1583 = vld [vmem:[%s1386 + $0x570] sm:$0xff]
        %v1584 = vld [vmem:[%s1386 + $0x578] sm:$0xff]
        %v1585 = vld [vmem:[%s1386 + $0x580] sm:$0xff]
        %v1586 = vld [vmem:[%s1386 + $0x588] sm:$0xff]
        %v1587 = vld [vmem:[%s1386 + $0x590] sm:$0xff]
        %v1588 = vld [vmem:[%s1386 + $0x598] sm:$0xff]
        %v1589 = vld [vmem:[%s1386 + $0x5a0] sm:$0xff]
        %v1590 = vld [vmem:[%s1386 + $0x5a8] sm:$0xff]
        %v1591 = vld [vmem:[%s1386 + $0x5b0] sm:$0xff]
        %v1592 = vld [vmem:[%s1386 + $0x5b8] sm:$0xff]
        %v1593 = vld [vmem:[%s1386 + $0x5c0] sm:$0xff]
        %v1594 = vld [vmem:[%s1386 + $0x5c8] sm:$0xff]
        %v1595 = vld [vmem:[%s1386 + $0x5d0] sm:$0xff]
        %v1596 = vld [vmem:[%s1386 + $0x5d8] sm:$0xff]
        %v1597 = vld [vmem:[%s1386 + $0x5e0] sm:$0xff]
        %v1598 = vld [vmem:[%s1386 + $0x5e8] sm:$0xff]
        %v1599 = vld [vmem:[%s1386 + $0x5f0] sm:$0xff]
        %v1600 = vld [vmem:[%s1386 + $0x5f8] sm:$0xff]
        %v1601 = vld [vmem:[%s1386 + $0x600] sm:$0xff]
        %v1602 = vld [vmem:[%s1386 + $0x608] sm:$0xff]
        %v1603 = vld [vmem:[%s1386 + $0x610] sm:$0xff]
        %v1604 = vld [vmem:[%s1386 + $0x618] sm:$0xff]
        %v1605 = vld [vmem:[%s1386 + $0x620] sm:$0xff]
        %v1606 = vld [vmem:[%s1386 + $0x628] sm:$0xff]
        %v1607 = vld [vmem:[%s1386 + $0x630] sm:$0xff]
        %v1608 = vld [vmem:[%s1386 + $0x638] sm:$0xff]
        %v1609 = vld [vmem:[%s1386 + $0x640] sm:$0xff]
        %v1610 = vld [vmem:[%s1386 + $0x648] sm:$0xff]
        %v1611 = vld [vmem:[%s1386 + $0x650] sm:$0xff]
        %v1612 = vld [vmem:[%s1386 + $0x658] sm:$0xff]
        %v1613 = vld [vmem:[%s1386 + $0x660] sm:$0xff]
        %v1614 = vld [vmem:[%s1386 + $0x668] sm:$0xff]
        %v1615 = vld [vmem:[%s1386 + $0x670] sm:$0xff]
        %v1616 = vld [vmem:[%s1386 + $0x678] sm:$0xff]
        %v1617 = vld [vmem:[%s1386 + $0x680] sm:$0xff]
        %v1618 = vld [vmem:[%s1386 + $0x688] sm:$0xff]
        %v1619 = vld [vmem:[%s1386 + $0x690] sm:$0xff]
        %v1620 = vld [vmem:[%s1386 + $0x698] sm:$0xff]
        %v1621 = vld [vmem:[%s1386 + $0x6a0] sm:$0xff]
        %v1622 = vld [vmem:[%s1386 + $0x6a8] sm:$0xff]
        %v1623 = vld [vmem:[%s1386 + $0x6b0] sm:$0xff]
        %v1624 = vld [vmem:[%s1386 + $0x6b8] sm:$0xff]
        %v1625 = vld [vmem:[%s1386 + $0x6c0] sm:$0xff]
        %v1626 = vld [vmem:[%s1386 + $0x6c8] sm:$0xff]
        %v1627 = vld [vmem:[%s1386 + $0x6d0] sm:$0xff]
        %v1628 = vld [vmem:[%s1386 + $0x6d8] sm:$0xff]
        %v1629 = vld [vmem:[%s1386 + $0x6e0] sm:$0xff]
        %v1630 = vld [vmem:[%s1386 + $0x6e8] sm:$0xff]
        %v1631 = vld [vmem:[%s1386 + $0x6f0] sm:$0xf]
        %v1632 = vld [vmem:[%s1386 + $0x6f8] sm:$0xf]
        %v1633 = vld [vmem:[%s1386 + $0x700] sm:$0xf]
        %v1634 = vld [vmem:[%s1386 + $0x708] sm:$0xff]
        %v1635 = vld [vmem:[%s1386 + $0x710] sm:$0xff]
        %v1636 = vld [vmem:[%s1386 + $0x718] sm:$0xff]
        %v1637 = vld [vmem:[%s1386 + $0x720] sm:$0xff]
        %v1638 = vld [vmem:[%s1386 + $0x728] sm:$0xff]
        %v1639 = vld [vmem:[%s1386 + $0x730] sm:$0xff]
        %v1640 = vld [vmem:[%s1386 + $0x738] sm:$0xff]
        %v1641 = vld [vmem:[%s1386 + $0x740] sm:$0xff]
        %v1642 = vld [vmem:[%s1386 + $0x748] sm:$0xff]
        %v1643 = vld [vmem:[%s1386 + $0x750] sm:$0xff]
        %v1644 = vld [vmem:[%s1386 + $0x758] sm:$0xff]
        %v1645 = vld [vmem:[%s1386 + $0x760] sm:$0xff]
        %v1646 = vld [vmem:[%s1386 + $0x768] sm:$0xff]
        %v1647 = vld [vmem:[%s1386 + $0x770] sm:$0xff]
        %v1648 = vld [vmem:[%s1386 + $0x778] sm:$0xff]
        %v1649 = vld [vmem:[%s1386 + $0x780] sm:$0xff]
        %v1650 = vld [vmem:[%s1386 + $0x788] sm:$0xff]
        %v1651 = vld [vmem:[%s1386 + $0x790] sm:$0xff]
        %v1652 = vld [vmem:[%s1386 + $0x798] sm:$0xff]
        %v1653 = vld [vmem:[%s1386 + $0x7a0] sm:$0xff]
        %v1654 = vld [vmem:[%s1386 + $0x7a8] sm:$0xff]
        %v1655 = vld [vmem:[%s1386 + $0x7b0] sm:$0xff]
        %v1656 = vld [vmem:[%s1386 + $0x7b8] sm:$0xff]
        %v1657 = vld [vmem:[%s1386 + $0x7c0] sm:$0xff]
        %v1658 = vld [vmem:[%s1386 + $0x7c8] sm:$0xff]
        %v1659 = vld [vmem:[%s1386 + $0x7d0] sm:$0xff]
        %v1660 = vld [vmem:[%s1386 + $0x7d8] sm:$0xff]
        %v1661 = vld [vmem:[%s1386 + $0x7e0] sm:$0xff]
        %v1662 = vld [vmem:[%s1386 + $0x7e8] sm:$0xff]
        %v1663 = vld [vmem:[%s1386 + $0x7f0] sm:$0xff]
        %v1664 = vld [vmem:[%s1386 + $0x7f8] sm:$0xff]
        %v1665 = vld [vmem:[%s1386 + $0x800] sm:$0xff]
        %v1666 = vld [vmem:[%s1386 + $0x808] sm:$0xff]
        %v1667 = vld [vmem:[%s1386 + $0x810] sm:$0xff]
        %v1668 = vld [vmem:[%s1386 + $0x818] sm:$0xff]
        %v1669 = vld [vmem:[%s1386 + $0x820] sm:$0xff]
        %v1670 = vld [vmem:[%s1386 + $0x828] sm:$0xff]
        %v1671 = vld [vmem:[%s1386 + $0x830] sm:$0xff]
        %v1672 = vld [vmem:[%s1386 + $0x838] sm:$0xff]
        %v1673 = vld [vmem:[%s1386 + $0x840] sm:$0xff]
        %v1674 = vld [vmem:[%s1386 + $0x848] sm:$0xff]
        %v1675 = vld [vmem:[%s1386 + $0x850] sm:$0xff]
        %v1676 = vld [vmem:[%s1386 + $0x858] sm:$0xff]
        %v1677 = vld [vmem:[%s1386 + $0x860] sm:$0xff]
        %v1678 = vld [vmem:[%s1386 + $0x868] sm:$0xff]
        %v1679 = vld [vmem:[%s1386 + $0x870] sm:$0xff]
        %v1680 = vld [vmem:[%s1386 + $0x878] sm:$0xff]
        %v1681 = vld [vmem:[%s1386 + $0x880] sm:$0xff]
        %v1682 = vld [vmem:[%s1386 + $0x888] sm:$0xff]
        %v1683 = vld [vmem:[%s1386 + $0x890] sm:$0xff]
        %v1684 = vld [vmem:[%s1386 + $0x898] sm:$0xff]
        %v1685 = vld [vmem:[%s1386 + $0x8a0] sm:$0xff]
        %v1686 = vld [vmem:[%s1386 + $0x8a8] sm:$0xff]
        %v1687 = vld [vmem:[%s1386 + $0x8b0] sm:$0xff]
        %v1688 = vld [vmem:[%s1386 + $0x8b8] sm:$0xff]
        %v1689 = vld [vmem:[%s1386 + $0x8c0] sm:$0xff]
        %v1690 = vld [vmem:[%s1386 + $0x8c8] sm:$0xff]
        %v1691 = vld [vmem:[%s1386 + $0x8d0] sm:$0xff]
        %v1692 = vld [vmem:[%s1386 + $0x8d8] sm:$0xff]
        %v1693 = vld [vmem:[%s1386 + $0x8e0] sm:$0xff]
        %v1694 = vld [vmem:[%s1386 + $0x8e8] sm:$0xff]
        %v1695 = vld [vmem:[%s1386 + $0x8f0] sm:$0xff]
        %v1696 = vld [vmem:[%s1386 + $0x8f8] sm:$0xff]
        %v1697 = vld [vmem:[%s1386 + $0x900] sm:$0xff]
        %v1698 = vld [vmem:[%s1386 + $0x908] sm:$0xff]
        %v1699 = vld [vmem:[%s1386 + $0x910] sm:$0xff]
        %v1700 = vld [vmem:[%s1386 + $0x918] sm:$0xff]
        %v1701 = vld [vmem:[%s1386 + $0x920] sm:$0xff]
        %v1702 = vld [vmem:[%s1386 + $0x928] sm:$0xff]
        %v1703 = vld [vmem:[%s1386 + $0x930] sm:$0xff]
        %v1704 = vld [vmem:[%s1386 + $0x938] sm:$0xff]
        %v1705 = vld [vmem:[%s1386 + $0x940] sm:$0xff]
        %v1706 = vld [vmem:[%s1386 + $0x948] sm:$0xf]
        %v1707 = vld [vmem:[%s1386 + $0x950] sm:$0xf]
        %v1708 = vld [vmem:[%s1386 + $0x958] sm:$0xf]
        %v1709 = vld [vmem:[%s1386 + $0x960] sm:$0xff]
        %v1710 = vld [vmem:[%s1386 + $0x968] sm:$0xff]
        %v1711 = vld [vmem:[%s1386 + $0x970] sm:$0xff]
        %v1712 = vld [vmem:[%s1386 + $0x978] sm:$0xff]
        %v1713 = vld [vmem:[%s1386 + $0x980] sm:$0xff]
        %v1714 = vld [vmem:[%s1386 + $0x988] sm:$0xff]
        %v1715 = vld [vmem:[%s1386 + $0x990] sm:$0xff]
        %v1716 = vld [vmem:[%s1386 + $0x998] sm:$0xff]
        %v1717 = vld [vmem:[%s1386 + $0x9a0] sm:$0xff]
        %v1718 = vld [vmem:[%s1386 + $0x9a8] sm:$0xff]
        %v1719 = vld [vmem:[%s1386 + $0x9b0] sm:$0xff]
        %v1720 = vld [vmem:[%s1386 + $0x9b8] sm:$0xff]
        %v1721 = vld [vmem:[%s1386 + $0x9c0] sm:$0xff]
        %v1722 = vld [vmem:[%s1386 + $0x9c8] sm:$0xff]
        %v1723 = vld [vmem:[%s1386 + $0x9d0] sm:$0xff]
        %v1724 = vld [vmem:[%s1386 + $0x9d8] sm:$0xff]
        %v1725 = vld [vmem:[%s1386 + $0x9e0] sm:$0xff]
        %v1726 = vld [vmem:[%s1386 + $0x9e8] sm:$0xff]
        %v1727 = vld [vmem:[%s1386 + $0x9f0] sm:$0xff]
        %v1728 = vld [vmem:[%s1386 + $0x9f8] sm:$0xff]
        %v1729 = vld [vmem:[%s1386 + $0xa00] sm:$0xff]
        %v1730 = vld [vmem:[%s1386 + $0xa08] sm:$0xff]
        %v1731 = vld [vmem:[%s1386 + $0xa10] sm:$0xff]
        %v1732 = vld [vmem:[%s1386 + $0xa18] sm:$0xff]
        %v1733 = vld [vmem:[%s1386 + $0xa20] sm:$0xff]
        %v1734 = vld [vmem:[%s1386 + $0xa28] sm:$0xff]
        %v1735 = vld [vmem:[%s1386 + $0xa30] sm:$0xff]
        %v1736 = vld [vmem:[%s1386 + $0xa38] sm:$0xff]
        %v1737 = vld [vmem:[%s1386 + $0xa40] sm:$0xff]
        %v1738 = vld [vmem:[%s1386 + $0xa48] sm:$0xff]
        %v1739 = vld [vmem:[%s1386 + $0xa50] sm:$0xff]
        %v1740 = vld [vmem:[%s1386 + $0xa58] sm:$0xff]
        %v1741 = vld [vmem:[%s1386 + $0xa60] sm:$0xff]
        %v1742 = vld [vmem:[%s1386 + $0xa68] sm:$0xff]
        %v1743 = vld [vmem:[%s1386 + $0xa70] sm:$0xff]
        %v1744 = vld [vmem:[%s1386 + $0xa78] sm:$0xff]
        %v1745 = vld [vmem:[%s1386 + $0xa80] sm:$0xff]
        %v1746 = vld [vmem:[%s1386 + $0xa88] sm:$0xff]
        %v1747 = vld [vmem:[%s1386 + $0xa90] sm:$0xff]
        %v1748 = vld [vmem:[%s1386 + $0xa98] sm:$0xff]
        %v1749 = vld [vmem:[%s1386 + $0xaa0] sm:$0xff]
        %v1750 = vld [vmem:[%s1386 + $0xaa8] sm:$0xff]
        %v1751 = vld [vmem:[%s1386 + $0xab0] sm:$0xff]
        %v1752 = vld [vmem:[%s1386 + $0xab8] sm:$0xff]
        %v1753 = vld [vmem:[%s1386 + $0xac0] sm:$0xff]
        %v1754 = vld [vmem:[%s1386 + $0xac8] sm:$0xff]
        %v1755 = vld [vmem:[%s1386 + $0xad0] sm:$0xff]
        %v1756 = vld [vmem:[%s1386 + $0xad8] sm:$0xff]
        %v1757 = vld [vmem:[%s1386 + $0xae0] sm:$0xff]
        %v1758 = vld [vmem:[%s1386 + $0xae8] sm:$0xff]
        %v1759 = vld [vmem:[%s1386 + $0xaf0] sm:$0xff]
        %v1760 = vld [vmem:[%s1386 + $0xaf8] sm:$0xff]
        %v1761 = vld [vmem:[%s1386 + $0xb00] sm:$0xff]
        %v1762 = vld [vmem:[%s1386 + $0xb08] sm:$0xff]
        %v1763 = vld [vmem:[%s1386 + $0xb10] sm:$0xff]
        %v1764 = vld [vmem:[%s1386 + $0xb18] sm:$0xff]
        %v1765 = vld [vmem:[%s1386 + $0xb20] sm:$0xff]
        %v1766 = vld [vmem:[%s1386 + $0xb28] sm:$0xff]
        %v1767 = vld [vmem:[%s1386 + $0xb30] sm:$0xff]
        %v1768 = vld [vmem:[%s1386 + $0xb38] sm:$0xff]
        %v1769 = vld [vmem:[%s1386 + $0xb40] sm:$0xff]
        %v1770 = vld [vmem:[%s1386 + $0xb48] sm:$0xff]
        %v1771 = vld [vmem:[%s1386 + $0xb50] sm:$0xff]
        %v1772 = vld [vmem:[%s1386 + $0xb58] sm:$0xff]
        %v1773 = vld [vmem:[%s1386 + $0xb60] sm:$0xff]
        %v1774 = vld [vmem:[%s1386 + $0xb68] sm:$0xff]
        %v1775 = vld [vmem:[%s1386 + $0xb70] sm:$0xff]
        %v1776 = vld [vmem:[%s1386 + $0xb78] sm:$0xff]
        %v1777 = vld [vmem:[%s1386 + $0xb80] sm:$0xff]
        %v1778 = vld [vmem:[%s1386 + $0xb88] sm:$0xff]
        %v1779 = vld [vmem:[%s1386 + $0xb90] sm:$0xff]
        %v1780 = vld [vmem:[%s1386 + $0xb98] sm:$0xff]
        %v1781 = vld [vmem:[%s1386 + $0xba0] sm:$0xf]
        %v1782 = vld [vmem:[%s1386 + $0xba8] sm:$0xf]
        %v1783 = vld [vmem:[%s1386 + $0xbb0] sm:$0xf]
        %v1784 = vld [vmem:[%s1386 + $0xbb8] sm:$0xff]
        %v1785 = vld [vmem:[%s1386 + $0xbc0] sm:$0xff]
        %v1786 = vld [vmem:[%s1386 + $0xbc8] sm:$0xff]
        %v1787 = vld [vmem:[%s1386 + $0xbd0] sm:$0xff]
        %v1788 = vld [vmem:[%s1386 + $0xbd8] sm:$0xff]
        %v1789 = vld [vmem:[%s1386 + $0xbe0] sm:$0xff]
        %v1790 = vld [vmem:[%s1386 + $0xbe8] sm:$0xff]
        %v1791 = vld [vmem:[%s1386 + $0xbf0] sm:$0xff]
        %v1792 = vld [vmem:[%s1386 + $0xbf8] sm:$0xff]
        %v1793 = vld [vmem:[%s1386 + $0xc00] sm:$0xff]
        %v1794 = vld [vmem:[%s1386 + $0xc08] sm:$0xff]
        %v1795 = vld [vmem:[%s1386 + $0xc10] sm:$0xff]
        %v1796 = vld [vmem:[%s1386 + $0xc18] sm:$0xff]
        %v1797 = vld [vmem:[%s1386 + $0xc20] sm:$0xff]
        %v1798 = vld [vmem:[%s1386 + $0xc28] sm:$0xff]
        %v1799 = vld [vmem:[%s1386 + $0xc30] sm:$0xff]
        %v1800 = vld [vmem:[%s1386 + $0xc38] sm:$0xff]
        %v1801 = vld [vmem:[%s1386 + $0xc40] sm:$0xff]
        %v1802 = vld [vmem:[%s1386 + $0xc48] sm:$0xff]
        %v1803 = vld [vmem:[%s1386 + $0xc50] sm:$0xff]
        %v1804 = vld [vmem:[%s1386 + $0xc58] sm:$0xff]
        %v1805 = vld [vmem:[%s1386 + $0xc60] sm:$0xff]
        %v1806 = vld [vmem:[%s1386 + $0xc68] sm:$0xff]
        %v1807 = vld [vmem:[%s1386 + $0xc70] sm:$0xff]
        %v1808 = vld [vmem:[%s1386 + $0xc78] sm:$0xff]
        %v1809 = vld [vmem:[%s1386 + $0xc80] sm:$0xff]
        %v1810 = vld [vmem:[%s1386 + $0xc88] sm:$0xff]
        %v1811 = vld [vmem:[%s1386 + $0xc90] sm:$0xff]
        %v1812 = vld [vmem:[%s1386 + $0xc98] sm:$0xff]
        %v1813 = vld [vmem:[%s1386 + $0xca0] sm:$0xff]
        %v1814 = vld [vmem:[%s1386 + $0xca8] sm:$0xff]
        %v1815 = vld [vmem:[%s1386 + $0xcb0] sm:$0xff]
        %v1816 = vld [vmem:[%s1386 + $0xcb8] sm:$0xff]
        %v1817 = vld [vmem:[%s1386 + $0xcc0] sm:$0xff]
        %v1818 = vld [vmem:[%s1386 + $0xcc8] sm:$0xff]
        %v1819 = vld [vmem:[%s1386 + $0xcd0] sm:$0xff]
        %v1820 = vld [vmem:[%s1386 + $0xcd8] sm:$0xff]
        %v1821 = vld [vmem:[%s1386 + $0xce0] sm:$0xff]
        %v1822 = vld [vmem:[%s1386 + $0xce8] sm:$0xff]
        %v1823 = vld [vmem:[%s1386 + $0xcf0] sm:$0xff]
        %v1824 = vld [vmem:[%s1386 + $0xcf8] sm:$0xff]
        %v1825 = vld [vmem:[%s1386 + $0xd00] sm:$0xff]
        %v1826 = vld [vmem:[%s1386 + $0xd08] sm:$0xff]
        %v1827 = vld [vmem:[%s1386 + $0xd10] sm:$0xff]
        %v1828 = vld [vmem:[%s1386 + $0xd18] sm:$0xff]
        %v1829 = vld [vmem:[%s1386 + $0xd20] sm:$0xff]
        %v1830 = vld [vmem:[%s1386 + $0xd28] sm:$0xff]
        %v1831 = vld [vmem:[%s1386 + $0xd30] sm:$0xff]
        %v1832 = vld [vmem:[%s1386 + $0xd38] sm:$0xff]
        %v1833 = vld [vmem:[%s1386 + $0xd40] sm:$0xff]
        %v1834 = vld [vmem:[%s1386 + $0xd48] sm:$0xff]
        %v1835 = vld [vmem:[%s1386 + $0xd50] sm:$0xff]
        %v1836 = vld [vmem:[%s1386 + $0xd58] sm:$0xff]
        %v1837 = vld [vmem:[%s1386 + $0xd60] sm:$0xff]
        %v1838 = vld [vmem:[%s1386 + $0xd68] sm:$0xff]
        %v1839 = vld [vmem:[%s1386 + $0xd70] sm:$0xff]
        %v1840 = vld [vmem:[%s1386 + $0xd78] sm:$0xff]
        %v1841 = vld [vmem:[%s1386 + $0xd80] sm:$0xff]
        %v1842 = vld [vmem:[%s1386 + $0xd88] sm:$0xff]
        %v1843 = vld [vmem:[%s1386 + $0xd90] sm:$0xff]
        %v1844 = vld [vmem:[%s1386 + $0xd98] sm:$0xff]
        %v1845 = vld [vmem:[%s1386 + $0xda0] sm:$0xff]
        %v1846 = vld [vmem:[%s1386 + $0xda8] sm:$0xff]
        %v1847 = vld [vmem:[%s1386 + $0xdb0] sm:$0xff]
        %v1848 = vld [vmem:[%s1386 + $0xdb8] sm:$0xff]
        %v1849 = vld [vmem:[%s1386 + $0xdc0] sm:$0xff]
        %v1850 = vld [vmem:[%s1386 + $0xdc8] sm:$0xff]
        %v1851 = vld [vmem:[%s1386 + $0xdd0] sm:$0xff]
        %v1852 = vld [vmem:[%s1386 + $0xdd8] sm:$0xff]
        %v1853 = vld [vmem:[%s1386 + $0xde0] sm:$0xff]
        %v1854 = vld [vmem:[%s1386 + $0xde8] sm:$0xff]
        %v1855 = vld [vmem:[%s1386 + $0xdf0] sm:$0xff]
        %v1856 = vld [vmem:[%s1386 + $0xdf8] sm:$0xf]
        %v1857 = vld [vmem:[%s1386 + $0xe00] sm:$0xf]
        %v1858 = vld [vmem:[%s1386 + $0xe08] sm:$0xf]
        %v1859 = vld [vmem:[%s1386 + $0xe10] sm:$0xff]
        %v1860 = vld [vmem:[%s1386 + $0xe18] sm:$0xff]
        %v1861 = vld [vmem:[%s1386 + $0xe20] sm:$0xff]
        %v1862 = vld [vmem:[%s1386 + $0xe28] sm:$0xff]
        %v1863 = vld [vmem:[%s1386 + $0xe30] sm:$0xff]
        %v1864 = vld [vmem:[%s1386 + $0xe38] sm:$0xff]
        %v1865 = vld [vmem:[%s1386 + $0xe40] sm:$0xff]
        %v1866 = vld [vmem:[%s1386 + $0xe48] sm:$0xff]
        %v1867 = vld [vmem:[%s1386 + $0xe50] sm:$0xff]
        %v1868 = vld [vmem:[%s1386 + $0xe58] sm:$0xff]
        %v1869 = vld [vmem:[%s1386 + $0xe60] sm:$0xff]
        %v1870 = vld [vmem:[%s1386 + $0xe68] sm:$0xff]
        %v1871 = vld [vmem:[%s1386 + $0xe70] sm:$0xff]
        %v1872 = vld [vmem:[%s1386 + $0xe78] sm:$0xff]
        %v1873 = vld [vmem:[%s1386 + $0xe80] sm:$0xff]
        %v1874 = vld [vmem:[%s1386 + $0xe88] sm:$0xff]
        %v1875 = vld [vmem:[%s1386 + $0xe90] sm:$0xff]
        %v1876 = vld [vmem:[%s1386 + $0xe98] sm:$0xff]
        %v1877 = vld [vmem:[%s1386 + $0xea0] sm:$0xff]
        %v1878 = vld [vmem:[%s1386 + $0xea8] sm:$0xff]
        %v1879 = vld [vmem:[%s1386 + $0xeb0] sm:$0xff]
        %v1880 = vld [vmem:[%s1386 + $0xeb8] sm:$0xff]
        %v1881 = vld [vmem:[%s1386 + $0xec0] sm:$0xff]
        %v1882 = vld [vmem:[%s1386 + $0xec8] sm:$0xff]
        %v1883 = vld [vmem:[%s1386 + $0xed0] sm:$0xff]
        %v1884 = vld [vmem:[%s1386 + $0xed8] sm:$0xff]
        %v1885 = vld [vmem:[%s1386 + $0xee0] sm:$0xff]
        %v1886 = vld [vmem:[%s1386 + $0xee8] sm:$0xff]
        %v1887 = vld [vmem:[%s1386 + $0xef0] sm:$0xff]
        %v1888 = vld [vmem:[%s1386 + $0xef8] sm:$0xff]
        %v1889 = vld [vmem:[%s1386 + $0xf00] sm:$0xff]
        %v1890 = vld [vmem:[%s1386 + $0xf08] sm:$0xff]
        %v1891 = vld [vmem:[%s1386 + $0xf10] sm:$0xff]
        %v1892 = vld [vmem:[%s1386 + $0xf18] sm:$0xff]
        %v1893 = vld [vmem:[%s1386 + $0xf20] sm:$0xff]
        %v1894 = vld [vmem:[%s1386 + $0xf28] sm:$0xff]
        %v1895 = vld [vmem:[%s1386 + $0xf30] sm:$0xff]
        %v1896 = vld [vmem:[%s1386 + $0xf38] sm:$0xff]
        %v1897 = vld [vmem:[%s1386 + $0xf40] sm:$0xff]
        %v1898 = vld [vmem:[%s1386 + $0xf48] sm:$0xff]
        %v1899 = vld [vmem:[%s1386 + $0xf50] sm:$0xff]
        %v1900 = vld [vmem:[%s1386 + $0xf58] sm:$0xff]
        %v1901 = vld [vmem:[%s1386 + $0xf60] sm:$0xff]
        %v1902 = vld [vmem:[%s1386 + $0xf68] sm:$0xff]
        %v1903 = vld [vmem:[%s1386 + $0xf70] sm:$0xff]
        %v1904 = vld [vmem:[%s1386 + $0xf78] sm:$0xff]
        %v1905 = vld [vmem:[%s1386 + $0xf80] sm:$0xff]
        %v1906 = vld [vmem:[%s1386 + $0xf88] sm:$0xff]
        %v1907 = vld [vmem:[%s1386 + $0xf90] sm:$0xff]
        %v1908 = vld [vmem:[%s1386 + $0xf98] sm:$0xff]
        %v1909 = vld [vmem:[%s1386 + $0xfa0] sm:$0xff]
        %v1910 = vld [vmem:[%s1386 + $0xfa8] sm:$0xff]
        %v1911 = vld [vmem:[%s1386 + $0xfb0] sm:$0xff]
        %v1912 = vld [vmem:[%s1386 + $0xfb8] sm:$0xff]
        %v1913 = vld [vmem:[%s1386 + $0xfc0] sm:$0xff]
        %v1914 = vld [vmem:[%s1386 + $0xfc8] sm:$0xff]
        %v1915 = vld [vmem:[%s1386 + $0xfd0] sm:$0xff]
        %v1916 = vld [vmem:[%s1386 + $0xfd8] sm:$0xff]
        %v1917 = vld [vmem:[%s1386 + $0xfe0] sm:$0xff]
        %v1918 = vld [vmem:[%s1386 + $0xfe8] sm:$0xff]
        %v1919 = vld [vmem:[%s1386 + $0xff0] sm:$0xff]
        %v1920 = vld [vmem:[%s1386 + $0xff8] sm:$0xff]
        %v1921 = vld [vmem:[%s1386 + $0x1000] sm:$0xff]
        %v1922 = vld [vmem:[%s1386 + $0x1008] sm:$0xff]
        %v1923 = vld [vmem:[%s1386 + $0x1010] sm:$0xff]
        %v1924 = vld [vmem:[%s1386 + $0x1018] sm:$0xff]
        %v1925 = vld [vmem:[%s1386 + $0x1020] sm:$0xff]
        %v1926 = vld [vmem:[%s1386 + $0x1028] sm:$0xff]
        %v1927 = vld [vmem:[%s1386 + $0x1030] sm:$0xff]
        %v1928 = vld [vmem:[%s1386 + $0x1038] sm:$0xff]
        %v1929 = vld [vmem:[%s1386 + $0x1040] sm:$0xff]
        %v1930 = vld [vmem:[%s1386 + $0x1048] sm:$0xff]
        %v1931 = vld [vmem:[%s1386 + $0x1050] sm:$0xf]
        %v1932 = vld [vmem:[%s1386 + $0x1058] sm:$0xf]
        %v1933 = vld [vmem:[%s1386 + $0x1060] sm:$0xf]
        %v1934 = vld [vmem:[%s1386 + $0x1068] sm:$0xff]
        %v1935 = vld [vmem:[%s1386 + $0x1070] sm:$0xff]
        %v1936 = vld [vmem:[%s1386 + $0x1078] sm:$0xff]
        %v1937 = vld [vmem:[%s1386 + $0x1080] sm:$0xff]
        %v1938 = vld [vmem:[%s1386 + $0x1088] sm:$0xff]
        %v1939 = vld [vmem:[%s1386 + $0x1090] sm:$0xff]
        %v1940 = vld [vmem:[%s1386 + $0x1098] sm:$0xff]
        %v1941 = vld [vmem:[%s1386 + $0x10a0] sm:$0xff]
        %v1942 = vld [vmem:[%s1386 + $0x10a8] sm:$0xff]
        %v1943 = vld [vmem:[%s1386 + $0x10b0] sm:$0xff]
        %v1944 = vld [vmem:[%s1386 + $0x10b8] sm:$0xff]
        %v1945 = vld [vmem:[%s1386 + $0x10c0] sm:$0xff]
        %v1946 = vld [vmem:[%s1386 + $0x10c8] sm:$0xff]
        %v1947 = vld [vmem:[%s1386 + $0x10d0] sm:$0xff]
        %v1948 = vld [vmem:[%s1386 + $0x10d8] sm:$0xff]
        %v1949 = vld [vmem:[%s1386 + $0x10e0] sm:$0xff]
        %v1950 = vld [vmem:[%s1386 + $0x10e8] sm:$0xff]
        %v1951 = vld [vmem:[%s1386 + $0x10f0] sm:$0xff]
        %v1952 = vld [vmem:[%s1386 + $0x10f8] sm:$0xff]
        %v1953 = vld [vmem:[%s1386 + $0x1100] sm:$0xff]
        %v1954 = vld [vmem:[%s1386 + $0x1108] sm:$0xff]
        %v1955 = vld [vmem:[%s1386 + $0x1110] sm:$0xff]
        %v1956 = vld [vmem:[%s1386 + $0x1118] sm:$0xff]
        %v1957 = vld [vmem:[%s1386 + $0x1120] sm:$0xff]
        %v1958 = vld [vmem:[%s1386 + $0x1128] sm:$0xff]
        %v1959 = vld [vmem:[%s1386 + $0x1130] sm:$0xff]
        %v1960 = vld [vmem:[%s1386 + $0x1138] sm:$0xff]
        %v1961 = vld [vmem:[%s1386 + $0x1140] sm:$0xff]
        %v1962 = vld [vmem:[%s1386 + $0x1148] sm:$0xff]
        %v1963 = vld [vmem:[%s1386 + $0x1150] sm:$0xff]
        %v1964 = vld [vmem:[%s1386 + $0x1158] sm:$0xff]
        %v1965 = vld [vmem:[%s1386 + $0x1160] sm:$0xff]
        %v1966 = vld [vmem:[%s1386 + $0x1168] sm:$0xff]
        %v1967 = vld [vmem:[%s1386 + $0x1170] sm:$0xff]
        %v1968 = vld [vmem:[%s1386 + $0x1178] sm:$0xff]
        %v1969 = vld [vmem:[%s1386 + $0x1180] sm:$0xff]
        %v1970 = vld [vmem:[%s1386 + $0x1188] sm:$0xff]
        %v1971 = vld [vmem:[%s1386 + $0x1190] sm:$0xff]
        %v1972 = vld [vmem:[%s1386 + $0x1198] sm:$0xff]
        %v1973 = vld [vmem:[%s1386 + $0x11a0] sm:$0xff]
        %v1974 = vld [vmem:[%s1386 + $0x11a8] sm:$0xff]
        %v1975 = vld [vmem:[%s1386 + $0x11b0] sm:$0xff]
        %v1976 = vld [vmem:[%s1386 + $0x11b8] sm:$0xff]
        %v1977 = vld [vmem:[%s1386 + $0x11c0] sm:$0xff]
        %v1978 = vld [vmem:[%s1386 + $0x11c8] sm:$0xff]
        %v1979 = vld [vmem:[%s1386 + $0x11d0] sm:$0xff]
        %v1980 = vld [vmem:[%s1386 + $0x11d8] sm:$0xff]
        %v1981 = vld [vmem:[%s1386 + $0x11e0] sm:$0xff]
        %v1982 = vld [vmem:[%s1386 + $0x11e8] sm:$0xff]
        %v1983 = vld [vmem:[%s1386 + $0x11f0] sm:$0xff]
        %v1984 = vld [vmem:[%s1386 + $0x11f8] sm:$0xff]
        %v1985 = vld [vmem:[%s1386 + $0x1200] sm:$0xff]
        %v1986 = vld [vmem:[%s1386 + $0x1208] sm:$0xff]
        %v1987 = vld [vmem:[%s1386 + $0x1210] sm:$0xff]
        %v1988 = vld [vmem:[%s1386 + $0x1218] sm:$0xff]
        %v1989 = vld [vmem:[%s1386 + $0x1220] sm:$0xff]
        %v1990 = vld [vmem:[%s1386 + $0x1228] sm:$0xff]
        %v1991 = vld [vmem:[%s1386 + $0x1230] sm:$0xff]
        %v1992 = vld [vmem:[%s1386 + $0x1238] sm:$0xff]
        %v1993 = vld [vmem:[%s1386 + $0x1240] sm:$0xff]
        %v1994 = vld [vmem:[%s1386 + $0x1248] sm:$0xff]
        %v1995 = vld [vmem:[%s1386 + $0x1250] sm:$0xff]
        %v1996 = vld [vmem:[%s1386 + $0x1258] sm:$0xff]
        %v1997 = vld [vmem:[%s1386 + $0x1260] sm:$0xff]
        %v1998 = vld [vmem:[%s1386 + $0x1268] sm:$0xff]
        %v1999 = vld [vmem:[%s1386 + $0x1270] sm:$0xff]
        %v2000 = vld [vmem:[%s1386 + $0x1278] sm:$0xff]
        %v2001 = vld [vmem:[%s1386 + $0x1280] sm:$0xff]
        %v2002 = vld [vmem:[%s1386 + $0x1288] sm:$0xff]
        %v2003 = vld [vmem:[%s1386 + $0x1290] sm:$0xff]
        %v2004 = vld [vmem:[%s1386 + $0x1298] sm:$0xff]
        %v2005 = vld [vmem:[%s1386 + $0x12a0] sm:$0xff]
        %v2006 = vld [vmem:[%s1386 + $0x12a8] sm:$0xf]
        %v2007 = vld [vmem:[%s1386 + $0x12b0] sm:$0xf]
        %v2008 = vld [vmem:[%s1386 + $0x12b8] sm:$0xf]
        %v2009 = vld [vmem:[%s0] sm:$0xff]
        %v2010 = vld [vmem:[%s0 + $0x8] sm:$0xff]
        %v2011 = vld [vmem:[%s0 + $0x10] sm:$0xff]
        %v2012 = vld [vmem:[%s0 + $0x18] sm:$0xff]
        %v2013 = vld [vmem:[%s0 + $0x20] sm:$0xff]
        %v2014 = vld [vmem:[%s0 + $0x28] sm:$0xff]
        %v2015 = vld [vmem:[%s0 + $0x30] sm:$0xff]
        %v2016 = vld [vmem:[%s0 + $0x38] sm:$0xff]
        %v2017 = vld [vmem:[%s0 + $0x40] sm:$0xff]
        %v2018 = vld [vmem:[%s0 + $0x48] sm:$0xff]
        %v2019 = vld [vmem:[%s0 + $0x50] sm:$0xff]
        %v2020 = vld [vmem:[%s0 + $0x58] sm:$0xff]
        %v2021 = vld [vmem:[%s0 + $0x60] sm:$0xff]
        %v2022 = vld [vmem:[%s0 + $0x68] sm:$0xff]
        %v2023 = vld [vmem:[%s0 + $0x70] sm:$0xff]
        %v2024 = vld [vmem:[%s0 + $0x78] sm:$0xff]
        %v2025 = vld [vmem:[%s0 + $0x80] sm:$0xff]
        %v2026 = vld [vmem:[%s0 + $0x88] sm:$0xff]
        %v2027 = vld [vmem:[%s0 + $0x90] sm:$0xff]
        %v2028 = vld [vmem:[%s0 + $0x98] sm:$0xff]
        %v2029 = vld [vmem:[%s0 + $0xa0] sm:$0xff]
        %v2030 = vld [vmem:[%s0 + $0xa8] sm:$0xff]
        %v2031 = vld [vmem:[%s0 + $0xb0] sm:$0xff]
        %v2032 = vld [vmem:[%s0 + $0xb8] sm:$0xff]
        %v2033 = vld [vmem:[%s0 + $0xc0] sm:$0xf]
        %2035 = vset.pattern.permute.xlu0 0
        %2036 = vperm.xlu0 %2035, %v2009
        %v2037 = vpop.permute.xlu0 %2036
        %2040 = vset.pattern.permute.xlu0 0
        %2041 = vperm.xlu0 %2040, %v2010
        %v2042 = vpop.permute.xlu0 %2041
        %2045 = vset.pattern.permute.xlu0 0
        %2046 = vperm.xlu0 %2045, %v2011
        %v2047 = vpop.permute.xlu0 %2046
        %2050 = vset.pattern.permute.xlu0 0
        %2051 = vperm.xlu0 %2050, %v2012
        %v2052 = vpop.permute.xlu0 %2051
        %2055 = vset.pattern.permute.xlu0 0
        %2056 = vperm.xlu0 %2055, %v2013
        %v2057 = vpop.permute.xlu0 %2056
        %2060 = vset.pattern.permute.xlu0 0
        %2061 = vperm.xlu0 %2060, %v2014
        %v2062 = vpop.permute.xlu0 %2061
        %2065 = vset.pattern.permute.xlu0 0
        %2066 = vperm.xlu0 %2065, %v2015
        %v2067 = vpop.permute.xlu0 %2066
        %2070 = vset.pattern.permute.xlu0 0
        %2071 = vperm.xlu0 %2070, %v2016
        %v2072 = vpop.permute.xlu0 %2071
        %2075 = vset.pattern.permute.xlu0 0
        %2076 = vperm.xlu0 %2075, %v2017
        %v2077 = vpop.permute.xlu0 %2076
        %2080 = vset.pattern.permute.xlu0 0
        %2081 = vperm.xlu0 %2080, %v2018
        %v2082 = vpop.permute.xlu0 %2081
        %2085 = vset.pattern.permute.xlu0 0
        %2086 = vperm.xlu0 %2085, %v2019
        %v2087 = vpop.permute.xlu0 %2086
        %2090 = vset.pattern.permute.xlu0 0
        %2091 = vperm.xlu0 %2090, %v2020
        %v2092 = vpop.permute.xlu0 %2091
        %2095 = vset.pattern.permute.xlu0 0
        %2096 = vperm.xlu0 %2095, %v2021
        %v2097 = vpop.permute.xlu0 %2096
        %2100 = vset.pattern.permute.xlu0 0
        %2101 = vperm.xlu0 %2100, %v2022
        %v2102 = vpop.permute.xlu0 %2101
        %2105 = vset.pattern.permute.xlu0 0
        %2106 = vperm.xlu0 %2105, %v2023
        %v2107 = vpop.permute.xlu0 %2106
        %2110 = vset.pattern.permute.xlu0 0
        %2111 = vperm.xlu0 %2110, %v2024
        %v2112 = vpop.permute.xlu0 %2111
        %2115 = vset.pattern.permute.xlu0 0
        %2116 = vperm.xlu0 %2115, %v2025
        %v2117 = vpop.permute.xlu0 %2116
        %2120 = vset.pattern.permute.xlu0 0
        %2121 = vperm.xlu0 %2120, %v2026
        %v2122 = vpop.permute.xlu0 %2121
        %2125 = vset.pattern.permute.xlu0 0
        %2126 = vperm.xlu0 %2125, %v2027
        %v2127 = vpop.permute.xlu0 %2126
        %2130 = vset.pattern.permute.xlu0 0
        %2131 = vperm.xlu0 %2130, %v2028
        %v2132 = vpop.permute.xlu0 %2131
        %2135 = vset.pattern.permute.xlu0 0
        %2136 = vperm.xlu0 %2135, %v2029
        %v2137 = vpop.permute.xlu0 %2136
        %2140 = vset.pattern.permute.xlu0 0
        %2141 = vperm.xlu0 %2140, %v2030
        %v2142 = vpop.permute.xlu0 %2141
        %2145 = vset.pattern.permute.xlu0 0
        %2146 = vperm.xlu0 %2145, %v2031
        %v2147 = vpop.permute.xlu0 %2146
        %2150 = vset.pattern.permute.xlu0 0
        %2151 = vperm.xlu0 %2150, %v2032
        %v2152 = vpop.permute.xlu0 %2151
        %2155 = vset.pattern.permute.xlu0 0
        %2156 = vperm.xlu0 %2155, %v2033
        %v2157 = vpop.permute.xlu0 %2156
        %v2159 = vmul.f32 %v1409, %v2037
        %v2160 = vmul.f32 %v1410, %v2037
        %v2161 = vmul.f32 %v1411, %v2037
        %v2162 = vmul.f32 %v1412, %v2042
        %v2163 = vmul.f32 %v1413, %v2042
        %v2164 = vmul.f32 %v1414, %v2042
        %v2165 = vmul.f32 %v1415, %v2047
        %v2166 = vmul.f32 %v1416, %v2047
        %v2167 = vmul.f32 %v1417, %v2047
        %v2168 = vmul.f32 %v1418, %v2052
        %v2169 = vmul.f32 %v1419, %v2052
        %v2170 = vmul.f32 %v1420, %v2052
        %v2171 = vmul.f32 %v1421, %v2057
        %v2172 = vmul.f32 %v1422, %v2057
        %v2173 = vmul.f32 %v1423, %v2057
        %v2174 = vmul.f32 %v1424, %v2062
        %v2175 = vmul.f32 %v1425, %v2062
        %v2176 = vmul.f32 %v1426, %v2062
        %v2177 = vmul.f32 %v1427, %v2067
        %v2178 = vmul.f32 %v1428, %v2067
        %v2179 = vmul.f32 %v1429, %v2067
        %v2180 = vmul.f32 %v1430, %v2072
        %v2181 = vmul.f32 %v1431, %v2072
        %v2182 = vmul.f32 %v1432, %v2072
        %v2183 = vmul.f32 %v1433, %v2077
        %v2184 = vmul.f32 %v1434, %v2077
        %v2185 = vmul.f32 %v1435, %v2077
        %v2186 = vmul.f32 %v1436, %v2082
        %v2187 = vmul.f32 %v1437, %v2082
        %v2188 = vmul.f32 %v1438, %v2082
        %v2189 = vmul.f32 %v1439, %v2087
        %v2190 = vmul.f32 %v1440, %v2087
        %v2191 = vmul.f32 %v1441, %v2087
        %v2192 = vmul.f32 %v1442, %v2092
        %v2193 = vmul.f32 %v1443, %v2092
        %v2194 = vmul.f32 %v1444, %v2092
        %v2195 = vmul.f32 %v1445, %v2097
        %v2196 = vmul.f32 %v1446, %v2097
        %v2197 = vmul.f32 %v1447, %v2097
        %v2198 = vmul.f32 %v1448, %v2102
        %v2199 = vmul.f32 %v1449, %v2102
        %v2200 = vmul.f32 %v1450, %v2102
        %v2201 = vmul.f32 %v1451, %v2107
        %v2202 = vmul.f32 %v1452, %v2107
        %v2203 = vmul.f32 %v1453, %v2107
        %v2204 = vmul.f32 %v1454, %v2112
        %v2205 = vmul.f32 %v1455, %v2112
        %v2206 = vmul.f32 %v1456, %v2112
        %v2207 = vmul.f32 %v1457, %v2117
        %v2208 = vmul.f32 %v1458, %v2117
        %v2209 = vmul.f32 %v1459, %v2117
        %v2210 = vmul.f32 %v1460, %v2122
        %v2211 = vmul.f32 %v1461, %v2122
        %v2212 = vmul.f32 %v1462, %v2122
        %v2213 = vmul.f32 %v1463, %v2127
        %v2214 = vmul.f32 %v1464, %v2127
        %v2215 = vmul.f32 %v1465, %v2127
        %v2216 = vmul.f32 %v1466, %v2132
        %v2217 = vmul.f32 %v1467, %v2132
        %v2218 = vmul.f32 %v1468, %v2132
        %v2219 = vmul.f32 %v1469, %v2137
        %v2220 = vmul.f32 %v1470, %v2137
        %v2221 = vmul.f32 %v1471, %v2137
        %v2222 = vmul.f32 %v1472, %v2142
        %v2223 = vmul.f32 %v1473, %v2142
        %v2224 = vmul.f32 %v1474, %v2142
        %v2225 = vmul.f32 %v1475, %v2147
        %v2226 = vmul.f32 %v1476, %v2147
        %v2227 = vmul.f32 %v1477, %v2147
        %v2228 = vmul.f32 %v1478, %v2152
        %v2229 = vmul.f32 %v1479, %v2152
        %v2230 = vmul.f32 %v1480, %v2152
        %v2231 = vmul.f32 %v1481, %v2157
        %v2232 = vmul.f32 %v1482, %v2157
        %v2233 = vmul.f32 %v1483, %v2157
        %v2234 = vmul.f32 %v1484, %v2037
        %v2235 = vmul.f32 %v1485, %v2037
        %v2236 = vmul.f32 %v1486, %v2037
        %v2237 = vmul.f32 %v1487, %v2042
        %v2238 = vmul.f32 %v1488, %v2042
        %v2239 = vmul.f32 %v1489, %v2042
        %v2240 = vmul.f32 %v1490, %v2047
        %v2241 = vmul.f32 %v1491, %v2047
        %v2242 = vmul.f32 %v1492, %v2047
        %v2243 = vmul.f32 %v1493, %v2052
        %v2244 = vmul.f32 %v1494, %v2052
        %v2245 = vmul.f32 %v1495, %v2052
        %v2246 = vmul.f32 %v1496, %v2057
        %v2247 = vmul.f32 %v1497, %v2057
        %v2248 = vmul.f32 %v1498, %v2057
        %v2249 = vmul.f32 %v1499, %v2062
        %v2250 = vmul.f32 %v1500, %v2062
        %v2251 = vmul.f32 %v1501, %v2062
        %v2252 = vmul.f32 %v1502, %v2067
        %v2253 = vmul.f32 %v1503, %v2067
        %v2254 = vmul.f32 %v1504, %v2067
        %v2255 = vmul.f32 %v1505, %v2072
        %v2256 = vmul.f32 %v1506, %v2072
        %v2257 = vmul.f32 %v1507, %v2072
        %v2258 = vmul.f32 %v1508, %v2077
        %v2259 = vmul.f32 %v1509, %v2077
        %v2260 = vmul.f32 %v1510, %v2077
        %v2261 = vmul.f32 %v1511, %v2082
        %v2262 = vmul.f32 %v1512, %v2082
        %v2263 = vmul.f32 %v1513, %v2082
        %v2264 = vmul.f32 %v1514, %v2087
        %v2265 = vmul.f32 %v1515, %v2087
        %v2266 = vmul.f32 %v1516, %v2087
        %v2267 = vmul.f32 %v1517, %v2092
        %v2268 = vmul.f32 %v1518, %v2092
        %v2269 = vmul.f32 %v1519, %v2092
        %v2270 = vmul.f32 %v1520, %v2097
        %v2271 = vmul.f32 %v1521, %v2097
        %v2272 = vmul.f32 %v1522, %v2097
        %v2273 = vmul.f32 %v1523, %v2102
        %v2274 = vmul.f32 %v1524, %v2102
        %v2275 = vmul.f32 %v1525, %v2102
        %v2276 = vmul.f32 %v1526, %v2107
        %v2277 = vmul.f32 %v1527, %v2107
        %v2278 = vmul.f32 %v1528, %v2107
        %v2279 = vmul.f32 %v1529, %v2112
        %v2280 = vmul.f32 %v1530, %v2112
        %v2281 = vmul.f32 %v1531, %v2112
        %v2282 = vmul.f32 %v1532, %v2117
        %v2283 = vmul.f32 %v1533, %v2117
        %v2284 = vmul.f32 %v1534, %v2117
        %v2285 = vmul.f32 %v1535, %v2122
        %v2286 = vmul.f32 %v1536, %v2122
        %v2287 = vmul.f32 %v1537, %v2122
        %v2288 = vmul.f32 %v1538, %v2127
        %v2289 = vmul.f32 %v1539, %v2127
        %v2290 = vmul.f32 %v1540, %v2127
        %v2291 = vmul.f32 %v1541, %v2132
        %v2292 = vmul.f32 %v1542, %v2132
        %v2293 = vmul.f32 %v1543, %v2132
        %v2294 = vmul.f32 %v1544, %v2137
        %v2295 = vmul.f32 %v1545, %v2137
        %v2296 = vmul.f32 %v1546, %v2137
        %v2297 = vmul.f32 %v1547, %v2142
        %v2298 = vmul.f32 %v1548, %v2142
        %v2299 = vmul.f32 %v1549, %v2142
        %v2300 = vmul.f32 %v1550, %v2147
        %v2301 = vmul.f32 %v1551, %v2147
        %v2302 = vmul.f32 %v1552, %v2147
        %v2303 = vmul.f32 %v1553, %v2152
        %v2304 = vmul.f32 %v1554, %v2152
        %v2305 = vmul.f32 %v1555, %v2152
        %v2306 = vmul.f32 %v1556, %v2157
        %v2307 = vmul.f32 %v1557, %v2157
        %v2308 = vmul.f32 %v1558, %v2157
        %v2309 = vmul.f32 %v1559, %v2037
        %v2310 = vmul.f32 %v1560, %v2037
        %v2311 = vmul.f32 %v1561, %v2037
        %v2312 = vmul.f32 %v1562, %v2042
        %v2313 = vmul.f32 %v1563, %v2042
        %v2314 = vmul.f32 %v1564, %v2042
        %v2315 = vmul.f32 %v1565, %v2047
        %v2316 = vmul.f32 %v1566, %v2047
        %v2317 = vmul.f32 %v1567, %v2047
        %v2318 = vmul.f32 %v1568, %v2052
        %v2319 = vmul.f32 %v1569, %v2052
        %v2320 = vmul.f32 %v1570, %v2052
        %v2321 = vmul.f32 %v1571, %v2057
        %v2322 = vmul.f32 %v1572, %v2057
        %v2323 = vmul.f32 %v1573, %v2057
        %v2324 = vmul.f32 %v1574, %v2062
        %v2325 = vmul.f32 %v1575, %v2062
        %v2326 = vmul.f32 %v1576, %v2062
        %v2327 = vmul.f32 %v1577, %v2067
        %v2328 = vmul.f32 %v1578, %v2067
        %v2329 = vmul.f32 %v1579, %v2067
        %v2330 = vmul.f32 %v1580, %v2072
        %v2331 = vmul.f32 %v1581, %v2072
        %v2332 = vmul.f32 %v1582, %v2072
        %v2333 = vmul.f32 %v1583, %v2077
        %v2334 = vmul.f32 %v1584, %v2077
        %v2335 = vmul.f32 %v1585, %v2077
        %v2336 = vmul.f32 %v1586, %v2082
        %v2337 = vmul.f32 %v1587, %v2082
        %v2338 = vmul.f32 %v1588, %v2082
        %v2339 = vmul.f32 %v1589, %v2087
        %v2340 = vmul.f32 %v1590, %v2087
        %v2341 = vmul.f32 %v1591, %v2087
        %v2342 = vmul.f32 %v1592, %v2092
        %v2343 = vmul.f32 %v1593, %v2092
        %v2344 = vmul.f32 %v1594, %v2092
        %v2345 = vmul.f32 %v1595, %v2097
        %v2346 = vmul.f32 %v1596, %v2097
        %v2347 = vmul.f32 %v1597, %v2097
        %v2348 = vmul.f32 %v1598, %v2102
        %v2349 = vmul.f32 %v1599, %v2102
        %v2350 = vmul.f32 %v1600, %v2102
        %v2351 = vmul.f32 %v1601, %v2107
        %v2352 = vmul.f32 %v1602, %v2107
        %v2353 = vmul.f32 %v1603, %v2107
        %v2354 = vmul.f32 %v1604, %v2112
        %v2355 = vmul.f32 %v1605, %v2112
        %v2356 = vmul.f32 %v1606, %v2112
        %v2357 = vmul.f32 %v1607, %v2117
        %v2358 = vmul.f32 %v1608, %v2117
        %v2359 = vmul.f32 %v1609, %v2117
        %v2360 = vmul.f32 %v1610, %v2122
        %v2361 = vmul.f32 %v1611, %v2122
        %v2362 = vmul.f32 %v1612, %v2122
        %v2363 = vmul.f32 %v1613, %v2127
        %v2364 = vmul.f32 %v1614, %v2127
        %v2365 = vmul.f32 %v1615, %v2127
        %v2366 = vmul.f32 %v1616, %v2132
        %v2367 = vmul.f32 %v1617, %v2132
        %v2368 = vmul.f32 %v1618, %v2132
        %v2369 = vmul.f32 %v1619, %v2137
        %v2370 = vmul.f32 %v1620, %v2137
        %v2371 = vmul.f32 %v1621, %v2137
        %v2372 = vmul.f32 %v1622, %v2142
        %v2373 = vmul.f32 %v1623, %v2142
        %v2374 = vmul.f32 %v1624, %v2142
        %v2375 = vmul.f32 %v1625, %v2147
        %v2376 = vmul.f32 %v1626, %v2147
        %v2377 = vmul.f32 %v1627, %v2147
        %v2378 = vmul.f32 %v1628, %v2152
        %v2379 = vmul.f32 %v1629, %v2152
        %v2380 = vmul.f32 %v1630, %v2152
        %v2381 = vmul.f32 %v1631, %v2157
        %v2382 = vmul.f32 %v1632, %v2157
        %v2383 = vmul.f32 %v1633, %v2157
        %v2384 = vmul.f32 %v1634, %v2037
        %v2385 = vmul.f32 %v1635, %v2037
        %v2386 = vmul.f32 %v1636, %v2037
        %v2387 = vmul.f32 %v1637, %v2042
        %v2388 = vmul.f32 %v1638, %v2042
        %v2389 = vmul.f32 %v1639, %v2042
        %v2390 = vmul.f32 %v1640, %v2047
        %v2391 = vmul.f32 %v1641, %v2047
        %v2392 = vmul.f32 %v1642, %v2047
        %v2393 = vmul.f32 %v1643, %v2052
        %v2394 = vmul.f32 %v1644, %v2052
        %v2395 = vmul.f32 %v1645, %v2052
        %v2396 = vmul.f32 %v1646, %v2057
        %v2397 = vmul.f32 %v1647, %v2057
        %v2398 = vmul.f32 %v1648, %v2057
        %v2399 = vmul.f32 %v1649, %v2062
        %v2400 = vmul.f32 %v1650, %v2062
        %v2401 = vmul.f32 %v1651, %v2062
        %v2402 = vmul.f32 %v1652, %v2067
        %v2403 = vmul.f32 %v1653, %v2067
        %v2404 = vmul.f32 %v1654, %v2067
        %v2405 = vmul.f32 %v1655, %v2072
        %v2406 = vmul.f32 %v1656, %v2072
        %v2407 = vmul.f32 %v1657, %v2072
        %v2408 = vmul.f32 %v1658, %v2077
        %v2409 = vmul.f32 %v1659, %v2077
        %v2410 = vmul.f32 %v1660, %v2077
        %v2411 = vmul.f32 %v1661, %v2082
        %v2412 = vmul.f32 %v1662, %v2082
        %v2413 = vmul.f32 %v1663, %v2082
        %v2414 = vmul.f32 %v1664, %v2087
        %v2415 = vmul.f32 %v1665, %v2087
        %v2416 = vmul.f32 %v1666, %v2087
        %v2417 = vmul.f32 %v1667, %v2092
        %v2418 = vmul.f32 %v1668, %v2092
        %v2419 = vmul.f32 %v1669, %v2092
        %v2420 = vmul.f32 %v1670, %v2097
        %v2421 = vmul.f32 %v1671, %v2097
        %v2422 = vmul.f32 %v1672, %v2097
        %v2423 = vmul.f32 %v1673, %v2102
        %v2424 = vmul.f32 %v1674, %v2102
        %v2425 = vmul.f32 %v1675, %v2102
        %v2426 = vmul.f32 %v1676, %v2107
        %v2427 = vmul.f32 %v1677, %v2107
        %v2428 = vmul.f32 %v1678, %v2107
        %v2429 = vmul.f32 %v1679, %v2112
        %v2430 = vmul.f32 %v1680, %v2112
        %v2431 = vmul.f32 %v1681, %v2112
        %v2432 = vmul.f32 %v1682, %v2117
        %v2433 = vmul.f32 %v1683, %v2117
        %v2434 = vmul.f32 %v1684, %v2117
        %v2435 = vmul.f32 %v1685, %v2122
        %v2436 = vmul.f32 %v1686, %v2122
        %v2437 = vmul.f32 %v1687, %v2122
        %v2438 = vmul.f32 %v1688, %v2127
        %v2439 = vmul.f32 %v1689, %v2127
        %v2440 = vmul.f32 %v1690, %v2127
        %v2441 = vmul.f32 %v1691, %v2132
        %v2442 = vmul.f32 %v1692, %v2132
        %v2443 = vmul.f32 %v1693, %v2132
        %v2444 = vmul.f32 %v1694, %v2137
        %v2445 = vmul.f32 %v1695, %v2137
        %v2446 = vmul.f32 %v1696, %v2137
        %v2447 = vmul.f32 %v1697, %v2142
        %v2448 = vmul.f32 %v1698, %v2142
        %v2449 = vmul.f32 %v1699, %v2142
        %v2450 = vmul.f32 %v1700, %v2147
        %v2451 = vmul.f32 %v1701, %v2147
        %v2452 = vmul.f32 %v1702, %v2147
        %v2453 = vmul.f32 %v1703, %v2152
        %v2454 = vmul.f32 %v1704, %v2152
        %v2455 = vmul.f32 %v1705, %v2152
        %v2456 = vmul.f32 %v1706, %v2157
        %v2457 = vmul.f32 %v1707, %v2157
        %v2458 = vmul.f32 %v1708, %v2157
        %v2459 = vmul.f32 %v1709, %v2037
        %v2460 = vmul.f32 %v1710, %v2037
        %v2461 = vmul.f32 %v1711, %v2037
        %v2462 = vmul.f32 %v1712, %v2042
        %v2463 = vmul.f32 %v1713, %v2042
        %v2464 = vmul.f32 %v1714, %v2042
        %v2465 = vmul.f32 %v1715, %v2047
        %v2466 = vmul.f32 %v1716, %v2047
        %v2467 = vmul.f32 %v1717, %v2047
        %v2468 = vmul.f32 %v1718, %v2052
        %v2469 = vmul.f32 %v1719, %v2052
        %v2470 = vmul.f32 %v1720, %v2052
        %v2471 = vmul.f32 %v1721, %v2057
        %v2472 = vmul.f32 %v1722, %v2057
        %v2473 = vmul.f32 %v1723, %v2057
        %v2474 = vmul.f32 %v1724, %v2062
        %v2475 = vmul.f32 %v1725, %v2062
        %v2476 = vmul.f32 %v1726, %v2062
        %v2477 = vmul.f32 %v1727, %v2067
        %v2478 = vmul.f32 %v1728, %v2067
        %v2479 = vmul.f32 %v1729, %v2067
        %v2480 = vmul.f32 %v1730, %v2072
        %v2481 = vmul.f32 %v1731, %v2072
        %v2482 = vmul.f32 %v1732, %v2072
        %v2483 = vmul.f32 %v1733, %v2077
        %v2484 = vmul.f32 %v1734, %v2077
        %v2485 = vmul.f32 %v1735, %v2077
        %v2486 = vmul.f32 %v1736, %v2082
        %v2487 = vmul.f32 %v1737, %v2082
        %v2488 = vmul.f32 %v1738, %v2082
        %v2489 = vmul.f32 %v1739, %v2087
        %v2490 = vmul.f32 %v1740, %v2087
        %v2491 = vmul.f32 %v1741, %v2087
        %v2492 = vmul.f32 %v1742, %v2092
        %v2493 = vmul.f32 %v1743, %v2092
        %v2494 = vmul.f32 %v1744, %v2092
        %v2495 = vmul.f32 %v1745, %v2097
        %v2496 = vmul.f32 %v1746, %v2097
        %v2497 = vmul.f32 %v1747, %v2097
        %v2498 = vmul.f32 %v1748, %v2102
        %v2499 = vmul.f32 %v1749, %v2102
        %v2500 = vmul.f32 %v1750, %v2102
        %v2501 = vmul.f32 %v1751, %v2107
        %v2502 = vmul.f32 %v1752, %v2107
        %v2503 = vmul.f32 %v1753, %v2107
        %v2504 = vmul.f32 %v1754, %v2112
        %v2505 = vmul.f32 %v1755, %v2112
        %v2506 = vmul.f32 %v1756, %v2112
        %v2507 = vmul.f32 %v1757, %v2117
        %v2508 = vmul.f32 %v1758, %v2117
        %v2509 = vmul.f32 %v1759, %v2117
        %v2510 = vmul.f32 %v1760, %v2122
        %v2511 = vmul.f32 %v1761, %v2122
        %v2512 = vmul.f32 %v1762, %v2122
        %v2513 = vmul.f32 %v1763, %v2127
        %v2514 = vmul.f32 %v1764, %v2127
        %v2515 = vmul.f32 %v1765, %v2127
        %v2516 = vmul.f32 %v1766, %v2132
        %v2517 = vmul.f32 %v1767, %v2132
        %v2518 = vmul.f32 %v1768, %v2132
        %v2519 = vmul.f32 %v1769, %v2137
        %v2520 = vmul.f32 %v1770, %v2137
        %v2521 = vmul.f32 %v1771, %v2137
        %v2522 = vmul.f32 %v1772, %v2142
        %v2523 = vmul.f32 %v1773, %v2142
        %v2524 = vmul.f32 %v1774, %v2142
        %v2525 = vmul.f32 %v1775, %v2147
        %v2526 = vmul.f32 %v1776, %v2147
        %v2527 = vmul.f32 %v1777, %v2147
        %v2528 = vmul.f32 %v1778, %v2152
        %v2529 = vmul.f32 %v1779, %v2152
        %v2530 = vmul.f32 %v1780, %v2152
        %v2531 = vmul.f32 %v1781, %v2157
        %v2532 = vmul.f32 %v1782, %v2157
        %v2533 = vmul.f32 %v1783, %v2157
        %v2534 = vmul.f32 %v1784, %v2037
        %v2535 = vmul.f32 %v1785, %v2037
        %v2536 = vmul.f32 %v1786, %v2037
        %v2537 = vmul.f32 %v1787, %v2042
        %v2538 = vmul.f32 %v1788, %v2042
        %v2539 = vmul.f32 %v1789, %v2042
        %v2540 = vmul.f32 %v1790, %v2047
        %v2541 = vmul.f32 %v1791, %v2047
        %v2542 = vmul.f32 %v1792, %v2047
        %v2543 = vmul.f32 %v1793, %v2052
        %v2544 = vmul.f32 %v1794, %v2052
        %v2545 = vmul.f32 %v1795, %v2052
        %v2546 = vmul.f32 %v1796, %v2057
        %v2547 = vmul.f32 %v1797, %v2057
        %v2548 = vmul.f32 %v1798, %v2057
        %v2549 = vmul.f32 %v1799, %v2062
        %v2550 = vmul.f32 %v1800, %v2062
        %v2551 = vmul.f32 %v1801, %v2062
        %v2552 = vmul.f32 %v1802, %v2067
        %v2553 = vmul.f32 %v1803, %v2067
        %v2554 = vmul.f32 %v1804, %v2067
        %v2555 = vmul.f32 %v1805, %v2072
        %v2556 = vmul.f32 %v1806, %v2072
        %v2557 = vmul.f32 %v1807, %v2072
        %v2558 = vmul.f32 %v1808, %v2077
        %v2559 = vmul.f32 %v1809, %v2077
        %v2560 = vmul.f32 %v1810, %v2077
        %v2561 = vmul.f32 %v1811, %v2082
        %v2562 = vmul.f32 %v1812, %v2082
        %v2563 = vmul.f32 %v1813, %v2082
        %v2564 = vmul.f32 %v1814, %v2087
        %v2565 = vmul.f32 %v1815, %v2087
        %v2566 = vmul.f32 %v1816, %v2087
        %v2567 = vmul.f32 %v1817, %v2092
        %v2568 = vmul.f32 %v1818, %v2092
        %v2569 = vmul.f32 %v1819, %v2092
        %v2570 = vmul.f32 %v1820, %v2097
        %v2571 = vmul.f32 %v1821, %v2097
        %v2572 = vmul.f32 %v1822, %v2097
        %v2573 = vmul.f32 %v1823, %v2102
        %v2574 = vmul.f32 %v1824, %v2102
        %v2575 = vmul.f32 %v1825, %v2102
        %v2576 = vmul.f32 %v1826, %v2107
        %v2577 = vmul.f32 %v1827, %v2107
        %v2578 = vmul.f32 %v1828, %v2107
        %v2579 = vmul.f32 %v1829, %v2112
        %v2580 = vmul.f32 %v1830, %v2112
        %v2581 = vmul.f32 %v1831, %v2112
        %v2582 = vmul.f32 %v1832, %v2117
        %v2583 = vmul.f32 %v1833, %v2117
        %v2584 = vmul.f32 %v1834, %v2117
        %v2585 = vmul.f32 %v1835, %v2122
        %v2586 = vmul.f32 %v1836, %v2122
        %v2587 = vmul.f32 %v1837, %v2122
        %v2588 = vmul.f32 %v1838, %v2127
        %v2589 = vmul.f32 %v1839, %v2127
        %v2590 = vmul.f32 %v1840, %v2127
        %v2591 = vmul.f32 %v1841, %v2132
        %v2592 = vmul.f32 %v1842, %v2132
        %v2593 = vmul.f32 %v1843, %v2132
        %v2594 = vmul.f32 %v1844, %v2137
        %v2595 = vmul.f32 %v1845, %v2137
        %v2596 = vmul.f32 %v1846, %v2137
        %v2597 = vmul.f32 %v1847, %v2142
        %v2598 = vmul.f32 %v1848, %v2142
        %v2599 = vmul.f32 %v1849, %v2142
        %v2600 = vmul.f32 %v1850, %v2147
        %v2601 = vmul.f32 %v1851, %v2147
        %v2602 = vmul.f32 %v1852, %v2147
        %v2603 = vmul.f32 %v1853, %v2152
        %v2604 = vmul.f32 %v1854, %v2152
        %v2605 = vmul.f32 %v1855, %v2152
        %v2606 = vmul.f32 %v1856, %v2157
        %v2607 = vmul.f32 %v1857, %v2157
        %v2608 = vmul.f32 %v1858, %v2157
        %v2609 = vmul.f32 %v1859, %v2037
        %v2610 = vmul.f32 %v1860, %v2037
        %v2611 = vmul.f32 %v1861, %v2037
        %v2612 = vmul.f32 %v1862, %v2042
        %v2613 = vmul.f32 %v1863, %v2042
        %v2614 = vmul.f32 %v1864, %v2042
        %v2615 = vmul.f32 %v1865, %v2047
        %v2616 = vmul.f32 %v1866, %v2047
        %v2617 = vmul.f32 %v1867, %v2047
        %v2618 = vmul.f32 %v1868, %v2052
        %v2619 = vmul.f32 %v1869, %v2052
        %v2620 = vmul.f32 %v1870, %v2052
        %v2621 = vmul.f32 %v1871, %v2057
        %v2622 = vmul.f32 %v1872, %v2057
        %v2623 = vmul.f32 %v1873, %v2057
        %v2624 = vmul.f32 %v1874, %v2062
        %v2625 = vmul.f32 %v1875, %v2062
        %v2626 = vmul.f32 %v1876, %v2062
        %v2627 = vmul.f32 %v1877, %v2067
        %v2628 = vmul.f32 %v1878, %v2067
        %v2629 = vmul.f32 %v1879, %v2067
        %v2630 = vmul.f32 %v1880, %v2072
        %v2631 = vmul.f32 %v1881, %v2072
        %v2632 = vmul.f32 %v1882, %v2072
        %v2633 = vmul.f32 %v1883, %v2077
        %v2634 = vmul.f32 %v1884, %v2077
        %v2635 = vmul.f32 %v1885, %v2077
        %v2636 = vmul.f32 %v1886, %v2082
        %v2637 = vmul.f32 %v1887, %v2082
        %v2638 = vmul.f32 %v1888, %v2082
        %v2639 = vmul.f32 %v1889, %v2087
        %v2640 = vmul.f32 %v1890, %v2087
        %v2641 = vmul.f32 %v1891, %v2087
        %v2642 = vmul.f32 %v1892, %v2092
        %v2643 = vmul.f32 %v1893, %v2092
        %v2644 = vmul.f32 %v1894, %v2092
        %v2645 = vmul.f32 %v1895, %v2097
        %v2646 = vmul.f32 %v1896, %v2097
        %v2647 = vmul.f32 %v1897, %v2097
        %v2648 = vmul.f32 %v1898, %v2102
        %v2649 = vmul.f32 %v1899, %v2102
        %v2650 = vmul.f32 %v1900, %v2102
        %v2651 = vmul.f32 %v1901, %v2107
        %v2652 = vmul.f32 %v1902, %v2107
        %v2653 = vmul.f32 %v1903, %v2107
        %v2654 = vmul.f32 %v1904, %v2112
        %v2655 = vmul.f32 %v1905, %v2112
        %v2656 = vmul.f32 %v1906, %v2112
        %v2657 = vmul.f32 %v1907, %v2117
        %v2658 = vmul.f32 %v1908, %v2117
        %v2659 = vmul.f32 %v1909, %v2117
        %v2660 = vmul.f32 %v1910, %v2122
        %v2661 = vmul.f32 %v1911, %v2122
        %v2662 = vmul.f32 %v1912, %v2122
        %v2663 = vmul.f32 %v1913, %v2127
        %v2664 = vmul.f32 %v1914, %v2127
        %v2665 = vmul.f32 %v1915, %v2127
        %v2666 = vmul.f32 %v1916, %v2132
        %v2667 = vmul.f32 %v1917, %v2132
        %v2668 = vmul.f32 %v1918, %v2132
        %v2669 = vmul.f32 %v1919, %v2137
        %v2670 = vmul.f32 %v1920, %v2137
        %v2671 = vmul.f32 %v1921, %v2137
        %v2672 = vmul.f32 %v1922, %v2142
        %v2673 = vmul.f32 %v1923, %v2142
        %v2674 = vmul.f32 %v1924, %v2142
        %v2675 = vmul.f32 %v1925, %v2147
        %v2676 = vmul.f32 %v1926, %v2147
        %v2677 = vmul.f32 %v1927, %v2147
        %v2678 = vmul.f32 %v1928, %v2152
        %v2679 = vmul.f32 %v1929, %v2152
        %v2680 = vmul.f32 %v1930, %v2152
        %v2681 = vmul.f32 %v1931, %v2157
        %v2682 = vmul.f32 %v1932, %v2157
        %v2683 = vmul.f32 %v1933, %v2157
        %v2684 = vmul.f32 %v1934, %v2037
        %v2685 = vmul.f32 %v1935, %v2037
        %v2686 = vmul.f32 %v1936, %v2037
        %v2687 = vmul.f32 %v1937, %v2042
        %v2688 = vmul.f32 %v1938, %v2042
        %v2689 = vmul.f32 %v1939, %v2042
        %v2690 = vmul.f32 %v1940, %v2047
        %v2691 = vmul.f32 %v1941, %v2047
        %v2692 = vmul.f32 %v1942, %v2047
        %v2693 = vmul.f32 %v1943, %v2052
        %v2694 = vmul.f32 %v1944, %v2052
        %v2695 = vmul.f32 %v1945, %v2052
        %v2696 = vmul.f32 %v1946, %v2057
        %v2697 = vmul.f32 %v1947, %v2057
        %v2698 = vmul.f32 %v1948, %v2057
        %v2699 = vmul.f32 %v1949, %v2062
        %v2700 = vmul.f32 %v1950, %v2062
        %v2701 = vmul.f32 %v1951, %v2062
        %v2702 = vmul.f32 %v1952, %v2067
        %v2703 = vmul.f32 %v1953, %v2067
        %v2704 = vmul.f32 %v1954, %v2067
        %v2705 = vmul.f32 %v1955, %v2072
        %v2706 = vmul.f32 %v1956, %v2072
        %v2707 = vmul.f32 %v1957, %v2072
        %v2708 = vmul.f32 %v1958, %v2077
        %v2709 = vmul.f32 %v1959, %v2077
        %v2710 = vmul.f32 %v1960, %v2077
        %v2711 = vmul.f32 %v1961, %v2082
        %v2712 = vmul.f32 %v1962, %v2082
        %v2713 = vmul.f32 %v1963, %v2082
        %v2714 = vmul.f32 %v1964, %v2087
        %v2715 = vmul.f32 %v1965, %v2087
        %v2716 = vmul.f32 %v1966, %v2087
        %v2717 = vmul.f32 %v1967, %v2092
        %v2718 = vmul.f32 %v1968, %v2092
        %v2719 = vmul.f32 %v1969, %v2092
        %v2720 = vmul.f32 %v1970, %v2097
        %v2721 = vmul.f32 %v1971, %v2097
        %v2722 = vmul.f32 %v1972, %v2097
        %v2723 = vmul.f32 %v1973, %v2102
        %v2724 = vmul.f32 %v1974, %v2102
        %v2725 = vmul.f32 %v1975, %v2102
        %v2726 = vmul.f32 %v1976, %v2107
        %v2727 = vmul.f32 %v1977, %v2107
        %v2728 = vmul.f32 %v1978, %v2107
        %v2729 = vmul.f32 %v1979, %v2112
        %v2730 = vmul.f32 %v1980, %v2112
        %v2731 = vmul.f32 %v1981, %v2112
        %v2732 = vmul.f32 %v1982, %v2117
        %v2733 = vmul.f32 %v1983, %v2117
        %v2734 = vmul.f32 %v1984, %v2117
        %v2735 = vmul.f32 %v1985, %v2122
        %v2736 = vmul.f32 %v1986, %v2122
        %v2737 = vmul.f32 %v1987, %v2122
        %v2738 = vmul.f32 %v1988, %v2127
        %v2739 = vmul.f32 %v1989, %v2127
        %v2740 = vmul.f32 %v1990, %v2127
        %v2741 = vmul.f32 %v1991, %v2132
        %v2742 = vmul.f32 %v1992, %v2132
        %v2743 = vmul.f32 %v1993, %v2132
        %v2744 = vmul.f32 %v1994, %v2137
        %v2745 = vmul.f32 %v1995, %v2137
        %v2746 = vmul.f32 %v1996, %v2137
        %v2747 = vmul.f32 %v1997, %v2142
        %v2748 = vmul.f32 %v1998, %v2142
        %v2749 = vmul.f32 %v1999, %v2142
        %v2750 = vmul.f32 %v2000, %v2147
        %v2751 = vmul.f32 %v2001, %v2147
        %v2752 = vmul.f32 %v2002, %v2147
        %v2753 = vmul.f32 %v2003, %v2152
        %v2754 = vmul.f32 %v2004, %v2152
        %v2755 = vmul.f32 %v2005, %v2152
        %v2756 = vmul.f32 %v2006, %v2157
        %v2757 = vmul.f32 %v2007, %v2157
        %v2758 = vmul.f32 %v2008, %v2157
        %v2759 = vadd.f32 %v2159, %v2162
        %v2760 = vadd.f32 %v2759, %v2165
        %v2761 = vadd.f32 %v2760, %v2168
        %v2762 = vadd.f32 %v2761, %v2171
        %v2763 = vadd.f32 %v2762, %v2174
        %v2764 = vadd.f32 %v2763, %v2177
        %v2765 = vadd.f32 %v2764, %v2180
        %v2766 = vadd.f32 %v2765, %v2183
        %v2767 = vadd.f32 %v2766, %v2186
        %v2768 = vadd.f32 %v2767, %v2189
        %v2769 = vadd.f32 %v2768, %v2192
        %v2770 = vadd.f32 %v2769, %v2195
        %v2771 = vadd.f32 %v2770, %v2198
        %v2772 = vadd.f32 %v2771, %v2201
        %v2773 = vadd.f32 %v2772, %v2204
        %v2774 = vadd.f32 %v2773, %v2207
        %v2775 = vadd.f32 %v2774, %v2210
        %v2776 = vadd.f32 %v2775, %v2213
        %v2777 = vadd.f32 %v2776, %v2216
        %v2778 = vadd.f32 %v2777, %v2219
        %v2779 = vadd.f32 %v2778, %v2222
        %v2780 = vadd.f32 %v2779, %v2225
        %v2781 = vadd.f32 %v2780, %v2228
        %vm2782 = vcmask 1043456
        %v2783 = vsel %vm2782, %v2231, 0.0
        %v2784 = vadd.f32 %v2781, %v2783
        %v2785 = vrot.slane %v2784, 4
        %v2786 = vadd.f32 %v2784, %v2785
        %v2787 = vrot.slane %v2786, 2
        %v2788 = vadd.f32 %v2786, %v2787
        %v2789 = vrot.slane %v2788, 1
        %v2790 = vadd.f32 %v2788, %v2789
        %v2791 = vadd.f32 %v2160, %v2163
        %v2792 = vadd.f32 %v2791, %v2166
        %v2793 = vadd.f32 %v2792, %v2169
        %v2794 = vadd.f32 %v2793, %v2172
        %v2795 = vadd.f32 %v2794, %v2175
        %v2796 = vadd.f32 %v2795, %v2178
        %v2797 = vadd.f32 %v2796, %v2181
        %v2798 = vadd.f32 %v2797, %v2184
        %v2799 = vadd.f32 %v2798, %v2187
        %v2800 = vadd.f32 %v2799, %v2190
        %v2801 = vadd.f32 %v2800, %v2193
        %v2802 = vadd.f32 %v2801, %v2196
        %v2803 = vadd.f32 %v2802, %v2199
        %v2804 = vadd.f32 %v2803, %v2202
        %v2805 = vadd.f32 %v2804, %v2205
        %v2806 = vadd.f32 %v2805, %v2208
        %v2807 = vadd.f32 %v2806, %v2211
        %v2808 = vadd.f32 %v2807, %v2214
        %v2809 = vadd.f32 %v2808, %v2217
        %v2810 = vadd.f32 %v2809, %v2220
        %v2811 = vadd.f32 %v2810, %v2223
        %v2812 = vadd.f32 %v2811, %v2226
        %v2813 = vadd.f32 %v2812, %v2229
        %v2814 = vsel %vm2782, %v2232, 0.0
        %v2815 = vadd.f32 %v2813, %v2814
        %v2816 = vrot.slane %v2815, 4
        %v2817 = vadd.f32 %v2815, %v2816
        %v2818 = vrot.slane %v2817, 2
        %v2819 = vadd.f32 %v2817, %v2818
        %v2820 = vrot.slane %v2819, 1
        %v2821 = vadd.f32 %v2819, %v2820
        %v2822 = vadd.f32 %v2161, %v2164
        %v2823 = vadd.f32 %v2822, %v2167
        %v2824 = vadd.f32 %v2823, %v2170
        %v2825 = vadd.f32 %v2824, %v2173
        %v2826 = vadd.f32 %v2825, %v2176
        %v2827 = vadd.f32 %v2826, %v2179
        %v2828 = vadd.f32 %v2827, %v2182
        %v2829 = vadd.f32 %v2828, %v2185
        %v2830 = vadd.f32 %v2829, %v2188
        %v2831 = vadd.f32 %v2830, %v2191
        %v2832 = vadd.f32 %v2831, %v2194
        %v2833 = vadd.f32 %v2832, %v2197
        %v2834 = vadd.f32 %v2833, %v2200
        %v2835 = vadd.f32 %v2834, %v2203
        %v2836 = vadd.f32 %v2835, %v2206
        %v2837 = vadd.f32 %v2836, %v2209
        %v2838 = vadd.f32 %v2837, %v2212
        %v2839 = vadd.f32 %v2838, %v2215
        %v2840 = vadd.f32 %v2839, %v2218
        %v2841 = vadd.f32 %v2840, %v2221
        %v2842 = vadd.f32 %v2841, %v2224
        %v2843 = vadd.f32 %v2842, %v2227
        %v2844 = vadd.f32 %v2843, %v2230
        %v2845 = vsel %vm2782, %v2233, 0.0
        %v2846 = vadd.f32 %v2844, %v2845
        %v2847 = vrot.slane %v2846, 4
        %v2848 = vadd.f32 %v2846, %v2847
        %v2849 = vrot.slane %v2848, 2
        %v2850 = vadd.f32 %v2848, %v2849
        %v2851 = vrot.slane %v2850, 1
        %v2852 = vadd.f32 %v2850, %v2851
        %v2853 = vadd.f32 %v2234, %v2237
        %v2854 = vadd.f32 %v2853, %v2240
        %v2855 = vadd.f32 %v2854, %v2243
        %v2856 = vadd.f32 %v2855, %v2246
        %v2857 = vadd.f32 %v2856, %v2249
        %v2858 = vadd.f32 %v2857, %v2252
        %v2859 = vadd.f32 %v2858, %v2255
        %v2860 = vadd.f32 %v2859, %v2258
        %v2861 = vadd.f32 %v2860, %v2261
        %v2862 = vadd.f32 %v2861, %v2264
        %v2863 = vadd.f32 %v2862, %v2267
        %v2864 = vadd.f32 %v2863, %v2270
        %v2865 = vadd.f32 %v2864, %v2273
        %v2866 = vadd.f32 %v2865, %v2276
        %v2867 = vadd.f32 %v2866, %v2279
        %v2868 = vadd.f32 %v2867, %v2282
        %v2869 = vadd.f32 %v2868, %v2285
        %v2870 = vadd.f32 %v2869, %v2288
        %v2871 = vadd.f32 %v2870, %v2291
        %v2872 = vadd.f32 %v2871, %v2294
        %v2873 = vadd.f32 %v2872, %v2297
        %v2874 = vadd.f32 %v2873, %v2300
        %v2875 = vadd.f32 %v2874, %v2303
        %v2876 = vsel %vm2782, %v2306, 0.0
        %v2877 = vadd.f32 %v2875, %v2876
        %v2878 = vrot.slane %v2877, 4
        %v2879 = vadd.f32 %v2877, %v2878
        %v2880 = vrot.slane %v2879, 2
        %v2881 = vadd.f32 %v2879, %v2880
        %v2882 = vrot.slane %v2881, 1
        %v2883 = vadd.f32 %v2881, %v2882
        %v2884 = vadd.f32 %v2235, %v2238
        %v2885 = vadd.f32 %v2884, %v2241
        %v2886 = vadd.f32 %v2885, %v2244
        %v2887 = vadd.f32 %v2886, %v2247
        %v2888 = vadd.f32 %v2887, %v2250
        %v2889 = vadd.f32 %v2888, %v2253
        %v2890 = vadd.f32 %v2889, %v2256
        %v2891 = vadd.f32 %v2890, %v2259
        %v2892 = vadd.f32 %v2891, %v2262
        %v2893 = vadd.f32 %v2892, %v2265
        %v2894 = vadd.f32 %v2893, %v2268
        %v2895 = vadd.f32 %v2894, %v2271
        %v2896 = vadd.f32 %v2895, %v2274
        %v2897 = vadd.f32 %v2896, %v2277
        %v2898 = vadd.f32 %v2897, %v2280
        %v2899 = vadd.f32 %v2898, %v2283
        %v2900 = vadd.f32 %v2899, %v2286
        %v2901 = vadd.f32 %v2900, %v2289
        %v2902 = vadd.f32 %v2901, %v2292
        %v2903 = vadd.f32 %v2902, %v2295
        %v2904 = vadd.f32 %v2903, %v2298
        %v2905 = vadd.f32 %v2904, %v2301
        %v2906 = vadd.f32 %v2905, %v2304
        %v2907 = vsel %vm2782, %v2307, 0.0
        %v2908 = vadd.f32 %v2906, %v2907
        %v2909 = vrot.slane %v2908, 4
        %v2910 = vadd.f32 %v2908, %v2909
        %v2911 = vrot.slane %v2910, 2
        %v2912 = vadd.f32 %v2910, %v2911
        %v2913 = vrot.slane %v2912, 1
        %v2914 = vadd.f32 %v2912, %v2913
        %v2915 = vadd.f32 %v2236, %v2239
        %v2916 = vadd.f32 %v2915, %v2242
        %v2917 = vadd.f32 %v2916, %v2245
        %v2918 = vadd.f32 %v2917, %v2248
        %v2919 = vadd.f32 %v2918, %v2251
        %v2920 = vadd.f32 %v2919, %v2254
        %v2921 = vadd.f32 %v2920, %v2257
        %v2922 = vadd.f32 %v2921, %v2260
        %v2923 = vadd.f32 %v2922, %v2263
        %v2924 = vadd.f32 %v2923, %v2266
        %v2925 = vadd.f32 %v2924, %v2269
        %v2926 = vadd.f32 %v2925, %v2272
        %v2927 = vadd.f32 %v2926, %v2275
        %v2928 = vadd.f32 %v2927, %v2278
        %v2929 = vadd.f32 %v2928, %v2281
        %v2930 = vadd.f32 %v2929, %v2284
        %v2931 = vadd.f32 %v2930, %v2287
        %v2932 = vadd.f32 %v2931, %v2290
        %v2933 = vadd.f32 %v2932, %v2293
        %v2934 = vadd.f32 %v2933, %v2296
        %v2935 = vadd.f32 %v2934, %v2299
        %v2936 = vadd.f32 %v2935, %v2302
        %v2937 = vadd.f32 %v2936, %v2305
        %v2938 = vsel %vm2782, %v2308, 0.0
        %v2939 = vadd.f32 %v2937, %v2938
        %v2940 = vrot.slane %v2939, 4
        %v2941 = vadd.f32 %v2939, %v2940
        %v2942 = vrot.slane %v2941, 2
        %v2943 = vadd.f32 %v2941, %v2942
        %v2944 = vrot.slane %v2943, 1
        %v2945 = vadd.f32 %v2943, %v2944
        %v2946 = vadd.f32 %v2309, %v2312
        %v2947 = vadd.f32 %v2946, %v2315
        %v2948 = vadd.f32 %v2947, %v2318
        %v2949 = vadd.f32 %v2948, %v2321
        %v2950 = vadd.f32 %v2949, %v2324
        %v2951 = vadd.f32 %v2950, %v2327
        %v2952 = vadd.f32 %v2951, %v2330
        %v2953 = vadd.f32 %v2952, %v2333
        %v2954 = vadd.f32 %v2953, %v2336
        %v2955 = vadd.f32 %v2954, %v2339
        %v2956 = vadd.f32 %v2955, %v2342
        %v2957 = vadd.f32 %v2956, %v2345
        %v2958 = vadd.f32 %v2957, %v2348
        %v2959 = vadd.f32 %v2958, %v2351
        %v2960 = vadd.f32 %v2959, %v2354
        %v2961 = vadd.f32 %v2960, %v2357
        %v2962 = vadd.f32 %v2961, %v2360
        %v2963 = vadd.f32 %v2962, %v2363
        %v2964 = vadd.f32 %v2963, %v2366
        %v2965 = vadd.f32 %v2964, %v2369
        %v2966 = vadd.f32 %v2965, %v2372
        %v2967 = vadd.f32 %v2966, %v2375
        %v2968 = vadd.f32 %v2967, %v2378
        %v2969 = vsel %vm2782, %v2381, 0.0
        %v2970 = vadd.f32 %v2968, %v2969
        %v2971 = vrot.slane %v2970, 4
        %v2972 = vadd.f32 %v2970, %v2971
        %v2973 = vrot.slane %v2972, 2
        %v2974 = vadd.f32 %v2972, %v2973
        %v2975 = vrot.slane %v2974, 1
        %v2976 = vadd.f32 %v2974, %v2975
        %v2977 = vadd.f32 %v2310, %v2313
        %v2978 = vadd.f32 %v2977, %v2316
        %v2979 = vadd.f32 %v2978, %v2319
        %v2980 = vadd.f32 %v2979, %v2322
        %v2981 = vadd.f32 %v2980, %v2325
        %v2982 = vadd.f32 %v2981, %v2328
        %v2983 = vadd.f32 %v2982, %v2331
        %v2984 = vadd.f32 %v2983, %v2334
        %v2985 = vadd.f32 %v2984, %v2337
        %v2986 = vadd.f32 %v2985, %v2340
        %v2987 = vadd.f32 %v2986, %v2343
        %v2988 = vadd.f32 %v2987, %v2346
        %v2989 = vadd.f32 %v2988, %v2349
        %v2990 = vadd.f32 %v2989, %v2352
        %v2991 = vadd.f32 %v2990, %v2355
        %v2992 = vadd.f32 %v2991, %v2358
        %v2993 = vadd.f32 %v2992, %v2361
        %v2994 = vadd.f32 %v2993, %v2364
        %v2995 = vadd.f32 %v2994, %v2367
        %v2996 = vadd.f32 %v2995, %v2370
        %v2997 = vadd.f32 %v2996, %v2373
        %v2998 = vadd.f32 %v2997, %v2376
        %v2999 = vadd.f32 %v2998, %v2379
        %v3000 = vsel %vm2782, %v2382, 0.0
        %v3001 = vadd.f32 %v2999, %v3000
        %v3002 = vrot.slane %v3001, 4
        %v3003 = vadd.f32 %v3001, %v3002
        %v3004 = vrot.slane %v3003, 2
        %v3005 = vadd.f32 %v3003, %v3004
        %v3006 = vrot.slane %v3005, 1
        %v3007 = vadd.f32 %v3005, %v3006
        %v3008 = vadd.f32 %v2311, %v2314
        %v3009 = vadd.f32 %v3008, %v2317
        %v3010 = vadd.f32 %v3009, %v2320
        %v3011 = vadd.f32 %v3010, %v2323
        %v3012 = vadd.f32 %v3011, %v2326
        %v3013 = vadd.f32 %v3012, %v2329
        %v3014 = vadd.f32 %v3013, %v2332
        %v3015 = vadd.f32 %v3014, %v2335
        %v3016 = vadd.f32 %v3015, %v2338
        %v3017 = vadd.f32 %v3016, %v2341
        %v3018 = vadd.f32 %v3017, %v2344
        %v3019 = vadd.f32 %v3018, %v2347
        %v3020 = vadd.f32 %v3019, %v2350
        %v3021 = vadd.f32 %v3020, %v2353
        %v3022 = vadd.f32 %v3021, %v2356
        %v3023 = vadd.f32 %v3022, %v2359
        %v3024 = vadd.f32 %v3023, %v2362
        %v3025 = vadd.f32 %v3024, %v2365
        %v3026 = vadd.f32 %v3025, %v2368
        %v3027 = vadd.f32 %v3026, %v2371
        %v3028 = vadd.f32 %v3027, %v2374
        %v3029 = vadd.f32 %v3028, %v2377
        %v3030 = vadd.f32 %v3029, %v2380
        %v3031 = vsel %vm2782, %v2383, 0.0
        %v3032 = vadd.f32 %v3030, %v3031
        %v3033 = vrot.slane %v3032, 4
        %v3034 = vadd.f32 %v3032, %v3033
        %v3035 = vrot.slane %v3034, 2
        %v3036 = vadd.f32 %v3034, %v3035
        %v3037 = vrot.slane %v3036, 1
        %v3038 = vadd.f32 %v3036, %v3037
        %v3039 = vadd.f32 %v2384, %v2387
        %v3040 = vadd.f32 %v3039, %v2390
        %v3041 = vadd.f32 %v3040, %v2393
        %v3042 = vadd.f32 %v3041, %v2396
        %v3043 = vadd.f32 %v3042, %v2399
        %v3044 = vadd.f32 %v3043, %v2402
        %v3045 = vadd.f32 %v3044, %v2405
        %v3046 = vadd.f32 %v3045, %v2408
        %v3047 = vadd.f32 %v3046, %v2411
        %v3048 = vadd.f32 %v3047, %v2414
        %v3049 = vadd.f32 %v3048, %v2417
        %v3050 = vadd.f32 %v3049, %v2420
        %v3051 = vadd.f32 %v3050, %v2423
        %v3052 = vadd.f32 %v3051, %v2426
        %v3053 = vadd.f32 %v3052, %v2429
        %v3054 = vadd.f32 %v3053, %v2432
        %v3055 = vadd.f32 %v3054, %v2435
        %v3056 = vadd.f32 %v3055, %v2438
        %v3057 = vadd.f32 %v3056, %v2441
        %v3058 = vadd.f32 %v3057, %v2444
        %v3059 = vadd.f32 %v3058, %v2447
        %v3060 = vadd.f32 %v3059, %v2450
        %v3061 = vadd.f32 %v3060, %v2453
        %v3062 = vsel %vm2782, %v2456, 0.0
        %v3063 = vadd.f32 %v3061, %v3062
        %v3064 = vrot.slane %v3063, 4
        %v3065 = vadd.f32 %v3063, %v3064
        %v3066 = vrot.slane %v3065, 2
        %v3067 = vadd.f32 %v3065, %v3066
        %v3068 = vrot.slane %v3067, 1
        %v3069 = vadd.f32 %v3067, %v3068
        %v3070 = vadd.f32 %v2385, %v2388
        %v3071 = vadd.f32 %v3070, %v2391
        %v3072 = vadd.f32 %v3071, %v2394
        %v3073 = vadd.f32 %v3072, %v2397
        %v3074 = vadd.f32 %v3073, %v2400
        %v3075 = vadd.f32 %v3074, %v2403
        %v3076 = vadd.f32 %v3075, %v2406
        %v3077 = vadd.f32 %v3076, %v2409
        %v3078 = vadd.f32 %v3077, %v2412
        %v3079 = vadd.f32 %v3078, %v2415
        %v3080 = vadd.f32 %v3079, %v2418
        %v3081 = vadd.f32 %v3080, %v2421
        %v3082 = vadd.f32 %v3081, %v2424
        %v3083 = vadd.f32 %v3082, %v2427
        %v3084 = vadd.f32 %v3083, %v2430
        %v3085 = vadd.f32 %v3084, %v2433
        %v3086 = vadd.f32 %v3085, %v2436
        %v3087 = vadd.f32 %v3086, %v2439
        %v3088 = vadd.f32 %v3087, %v2442
        %v3089 = vadd.f32 %v3088, %v2445
        %v3090 = vadd.f32 %v3089, %v2448
        %v3091 = vadd.f32 %v3090, %v2451
        %v3092 = vadd.f32 %v3091, %v2454
        %v3093 = vsel %vm2782, %v2457, 0.0
        %v3094 = vadd.f32 %v3092, %v3093
        %v3095 = vrot.slane %v3094, 4
        %v3096 = vadd.f32 %v3094, %v3095
        %v3097 = vrot.slane %v3096, 2
        %v3098 = vadd.f32 %v3096, %v3097
        %v3099 = vrot.slane %v3098, 1
        %v3100 = vadd.f32 %v3098, %v3099
        %v3101 = vadd.f32 %v2386, %v2389
        %v3102 = vadd.f32 %v3101, %v2392
        %v3103 = vadd.f32 %v3102, %v2395
        %v3104 = vadd.f32 %v3103, %v2398
        %v3105 = vadd.f32 %v3104, %v2401
        %v3106 = vadd.f32 %v3105, %v2404
        %v3107 = vadd.f32 %v3106, %v2407
        %v3108 = vadd.f32 %v3107, %v2410
        %v3109 = vadd.f32 %v3108, %v2413
        %v3110 = vadd.f32 %v3109, %v2416
        %v3111 = vadd.f32 %v3110, %v2419
        %v3112 = vadd.f32 %v3111, %v2422
        %v3113 = vadd.f32 %v3112, %v2425
        %v3114 = vadd.f32 %v3113, %v2428
        %v3115 = vadd.f32 %v3114, %v2431
        %v3116 = vadd.f32 %v3115, %v2434
        %v3117 = vadd.f32 %v3116, %v2437
        %v3118 = vadd.f32 %v3117, %v2440
        %v3119 = vadd.f32 %v3118, %v2443
        %v3120 = vadd.f32 %v3119, %v2446
        %v3121 = vadd.f32 %v3120, %v2449
        %v3122 = vadd.f32 %v3121, %v2452
        %v3123 = vadd.f32 %v3122, %v2455
        %v3124 = vsel %vm2782, %v2458, 0.0
        %v3125 = vadd.f32 %v3123, %v3124
        %v3126 = vrot.slane %v3125, 4
        %v3127 = vadd.f32 %v3125, %v3126
        %v3128 = vrot.slane %v3127, 2
        %v3129 = vadd.f32 %v3127, %v3128
        %v3130 = vrot.slane %v3129, 1
        %v3131 = vadd.f32 %v3129, %v3130
        %v3132 = vadd.f32 %v2459, %v2462
        %v3133 = vadd.f32 %v3132, %v2465
        %v3134 = vadd.f32 %v3133, %v2468
        %v3135 = vadd.f32 %v3134, %v2471
        %v3136 = vadd.f32 %v3135, %v2474
        %v3137 = vadd.f32 %v3136, %v2477
        %v3138 = vadd.f32 %v3137, %v2480
        %v3139 = vadd.f32 %v3138, %v2483
        %v3140 = vadd.f32 %v3139, %v2486
        %v3141 = vadd.f32 %v3140, %v2489
        %v3142 = vadd.f32 %v3141, %v2492
        %v3143 = vadd.f32 %v3142, %v2495
        %v3144 = vadd.f32 %v3143, %v2498
        %v3145 = vadd.f32 %v3144, %v2501
        %v3146 = vadd.f32 %v3145, %v2504
        %v3147 = vadd.f32 %v3146, %v2507
        %v3148 = vadd.f32 %v3147, %v2510
        %v3149 = vadd.f32 %v3148, %v2513
        %v3150 = vadd.f32 %v3149, %v2516
        %v3151 = vadd.f32 %v3150, %v2519
        %v3152 = vadd.f32 %v3151, %v2522
        %v3153 = vadd.f32 %v3152, %v2525
        %v3154 = vadd.f32 %v3153, %v2528
        %v3155 = vsel %vm2782, %v2531, 0.0
        %v3156 = vadd.f32 %v3154, %v3155
        %v3157 = vrot.slane %v3156, 4
        %v3158 = vadd.f32 %v3156, %v3157
        %v3159 = vrot.slane %v3158, 2
        %v3160 = vadd.f32 %v3158, %v3159
        %v3161 = vrot.slane %v3160, 1
        %v3162 = vadd.f32 %v3160, %v3161
        %v3163 = vadd.f32 %v2460, %v2463
        %v3164 = vadd.f32 %v3163, %v2466
        %v3165 = vadd.f32 %v3164, %v2469
        %v3166 = vadd.f32 %v3165, %v2472
        %v3167 = vadd.f32 %v3166, %v2475
        %v3168 = vadd.f32 %v3167, %v2478
        %v3169 = vadd.f32 %v3168, %v2481
        %v3170 = vadd.f32 %v3169, %v2484
        %v3171 = vadd.f32 %v3170, %v2487
        %v3172 = vadd.f32 %v3171, %v2490
        %v3173 = vadd.f32 %v3172, %v2493
        %v3174 = vadd.f32 %v3173, %v2496
        %v3175 = vadd.f32 %v3174, %v2499
        %v3176 = vadd.f32 %v3175, %v2502
        %v3177 = vadd.f32 %v3176, %v2505
        %v3178 = vadd.f32 %v3177, %v2508
        %v3179 = vadd.f32 %v3178, %v2511
        %v3180 = vadd.f32 %v3179, %v2514
        %v3181 = vadd.f32 %v3180, %v2517
        %v3182 = vadd.f32 %v3181, %v2520
        %v3183 = vadd.f32 %v3182, %v2523
        %v3184 = vadd.f32 %v3183, %v2526
        %v3185 = vadd.f32 %v3184, %v2529
        %v3186 = vsel %vm2782, %v2532, 0.0
        %v3187 = vadd.f32 %v3185, %v3186
        %v3188 = vrot.slane %v3187, 4
        %v3189 = vadd.f32 %v3187, %v3188
        %v3190 = vrot.slane %v3189, 2
        %v3191 = vadd.f32 %v3189, %v3190
        %v3192 = vrot.slane %v3191, 1
        %v3193 = vadd.f32 %v3191, %v3192
        %v3194 = vadd.f32 %v2461, %v2464
        %v3195 = vadd.f32 %v3194, %v2467
        %v3196 = vadd.f32 %v3195, %v2470
        %v3197 = vadd.f32 %v3196, %v2473
        %v3198 = vadd.f32 %v3197, %v2476
        %v3199 = vadd.f32 %v3198, %v2479
        %v3200 = vadd.f32 %v3199, %v2482
        %v3201 = vadd.f32 %v3200, %v2485
        %v3202 = vadd.f32 %v3201, %v2488
        %v3203 = vadd.f32 %v3202, %v2491
        %v3204 = vadd.f32 %v3203, %v2494
        %v3205 = vadd.f32 %v3204, %v2497
        %v3206 = vadd.f32 %v3205, %v2500
        %v3207 = vadd.f32 %v3206, %v2503
        %v3208 = vadd.f32 %v3207, %v2506
        %v3209 = vadd.f32 %v3208, %v2509
        %v3210 = vadd.f32 %v3209, %v2512
        %v3211 = vadd.f32 %v3210, %v2515
        %v3212 = vadd.f32 %v3211, %v2518
        %v3213 = vadd.f32 %v3212, %v2521
        %v3214 = vadd.f32 %v3213, %v2524
        %v3215 = vadd.f32 %v3214, %v2527
        %v3216 = vadd.f32 %v3215, %v2530
        %v3217 = vsel %vm2782, %v2533, 0.0
        %v3218 = vadd.f32 %v3216, %v3217
        %v3219 = vrot.slane %v3218, 4
        %v3220 = vadd.f32 %v3218, %v3219
        %v3221 = vrot.slane %v3220, 2
        %v3222 = vadd.f32 %v3220, %v3221
        %v3223 = vrot.slane %v3222, 1
        %v3224 = vadd.f32 %v3222, %v3223
        %v3225 = vadd.f32 %v2534, %v2537
        %v3226 = vadd.f32 %v3225, %v2540
        %v3227 = vadd.f32 %v3226, %v2543
        %v3228 = vadd.f32 %v3227, %v2546
        %v3229 = vadd.f32 %v3228, %v2549
        %v3230 = vadd.f32 %v3229, %v2552
        %v3231 = vadd.f32 %v3230, %v2555
        %v3232 = vadd.f32 %v3231, %v2558
        %v3233 = vadd.f32 %v3232, %v2561
        %v3234 = vadd.f32 %v3233, %v2564
        %v3235 = vadd.f32 %v3234, %v2567
        %v3236 = vadd.f32 %v3235, %v2570
        %v3237 = vadd.f32 %v3236, %v2573
        %v3238 = vadd.f32 %v3237, %v2576
        %v3239 = vadd.f32 %v3238, %v2579
        %v3240 = vadd.f32 %v3239, %v2582
        %v3241 = vadd.f32 %v3240, %v2585
        %v3242 = vadd.f32 %v3241, %v2588
        %v3243 = vadd.f32 %v3242, %v2591
        %v3244 = vadd.f32 %v3243, %v2594
        %v3245 = vadd.f32 %v3244, %v2597
        %v3246 = vadd.f32 %v3245, %v2600
        %v3247 = vadd.f32 %v3246, %v2603
        %v3248 = vsel %vm2782, %v2606, 0.0
        %v3249 = vadd.f32 %v3247, %v3248
        %v3250 = vrot.slane %v3249, 4
        %v3251 = vadd.f32 %v3249, %v3250
        %v3252 = vrot.slane %v3251, 2
        %v3253 = vadd.f32 %v3251, %v3252
        %v3254 = vrot.slane %v3253, 1
        %v3255 = vadd.f32 %v3253, %v3254
        %v3256 = vadd.f32 %v2535, %v2538
        %v3257 = vadd.f32 %v3256, %v2541
        %v3258 = vadd.f32 %v3257, %v2544
        %v3259 = vadd.f32 %v3258, %v2547
        %v3260 = vadd.f32 %v3259, %v2550
        %v3261 = vadd.f32 %v3260, %v2553
        %v3262 = vadd.f32 %v3261, %v2556
        %v3263 = vadd.f32 %v3262, %v2559
        %v3264 = vadd.f32 %v3263, %v2562
        %v3265 = vadd.f32 %v3264, %v2565
        %v3266 = vadd.f32 %v3265, %v2568
        %v3267 = vadd.f32 %v3266, %v2571
        %v3268 = vadd.f32 %v3267, %v2574
        %v3269 = vadd.f32 %v3268, %v2577
        %v3270 = vadd.f32 %v3269, %v2580
        %v3271 = vadd.f32 %v3270, %v2583
        %v3272 = vadd.f32 %v3271, %v2586
        %v3273 = vadd.f32 %v3272, %v2589
        %v3274 = vadd.f32 %v3273, %v2592
        %v3275 = vadd.f32 %v3274, %v2595
        %v3276 = vadd.f32 %v3275, %v2598
        %v3277 = vadd.f32 %v3276, %v2601
        %v3278 = vadd.f32 %v3277, %v2604
        %v3279 = vsel %vm2782, %v2607, 0.0
        %v3280 = vadd.f32 %v3278, %v3279
        %v3281 = vrot.slane %v3280, 4
        %v3282 = vadd.f32 %v3280, %v3281
        %v3283 = vrot.slane %v3282, 2
        %v3284 = vadd.f32 %v3282, %v3283
        %v3285 = vrot.slane %v3284, 1
        %v3286 = vadd.f32 %v3284, %v3285
        %v3287 = vadd.f32 %v2536, %v2539
        %v3288 = vadd.f32 %v3287, %v2542
        %v3289 = vadd.f32 %v3288, %v2545
        %v3290 = vadd.f32 %v3289, %v2548
        %v3291 = vadd.f32 %v3290, %v2551
        %v3292 = vadd.f32 %v3291, %v2554
        %v3293 = vadd.f32 %v3292, %v2557
        %v3294 = vadd.f32 %v3293, %v2560
        %v3295 = vadd.f32 %v3294, %v2563
        %v3296 = vadd.f32 %v3295, %v2566
        %v3297 = vadd.f32 %v3296, %v2569
        %v3298 = vadd.f32 %v3297, %v2572
        %v3299 = vadd.f32 %v3298, %v2575
        %v3300 = vadd.f32 %v3299, %v2578
        %v3301 = vadd.f32 %v3300, %v2581
        %v3302 = vadd.f32 %v3301, %v2584
        %v3303 = vadd.f32 %v3302, %v2587
        %v3304 = vadd.f32 %v3303, %v2590
        %v3305 = vadd.f32 %v3304, %v2593
        %v3306 = vadd.f32 %v3305, %v2596
        %v3307 = vadd.f32 %v3306, %v2599
        %v3308 = vadd.f32 %v3307, %v2602
        %v3309 = vadd.f32 %v3308, %v2605
        %v3310 = vsel %vm2782, %v2608, 0.0
        %v3311 = vadd.f32 %v3309, %v3310
        %v3312 = vrot.slane %v3311, 4
        %v3313 = vadd.f32 %v3311, %v3312
        %v3314 = vrot.slane %v3313, 2
        %v3315 = vadd.f32 %v3313, %v3314
        %v3316 = vrot.slane %v3315, 1
        %v3317 = vadd.f32 %v3315, %v3316
        %v3318 = vadd.f32 %v2609, %v2612
        %v3319 = vadd.f32 %v3318, %v2615
        %v3320 = vadd.f32 %v3319, %v2618
        %v3321 = vadd.f32 %v3320, %v2621
        %v3322 = vadd.f32 %v3321, %v2624
        %v3323 = vadd.f32 %v3322, %v2627
        %v3324 = vadd.f32 %v3323, %v2630
        %v3325 = vadd.f32 %v3324, %v2633
        %v3326 = vadd.f32 %v3325, %v2636
        %v3327 = vadd.f32 %v3326, %v2639
        %v3328 = vadd.f32 %v3327, %v2642
        %v3329 = vadd.f32 %v3328, %v2645
        %v3330 = vadd.f32 %v3329, %v2648
        %v3331 = vadd.f32 %v3330, %v2651
        %v3332 = vadd.f32 %v3331, %v2654
        %v3333 = vadd.f32 %v3332, %v2657
        %v3334 = vadd.f32 %v3333, %v2660
        %v3335 = vadd.f32 %v3334, %v2663
        %v3336 = vadd.f32 %v3335, %v2666
        %v3337 = vadd.f32 %v3336, %v2669
        %v3338 = vadd.f32 %v3337, %v2672
        %v3339 = vadd.f32 %v3338, %v2675
        %v3340 = vadd.f32 %v3339, %v2678
        %v3341 = vsel %vm2782, %v2681, 0.0
        %v3342 = vadd.f32 %v3340, %v3341
        %v3343 = vrot.slane %v3342, 4
        %v3344 = vadd.f32 %v3342, %v3343
        %v3345 = vrot.slane %v3344, 2
        %v3346 = vadd.f32 %v3344, %v3345
        %v3347 = vrot.slane %v3346, 1
        %v3348 = vadd.f32 %v3346, %v3347
        %v3349 = vadd.f32 %v2610, %v2613
        %v3350 = vadd.f32 %v3349, %v2616
        %v3351 = vadd.f32 %v3350, %v2619
        %v3352 = vadd.f32 %v3351, %v2622
        %v3353 = vadd.f32 %v3352, %v2625
        %v3354 = vadd.f32 %v3353, %v2628
        %v3355 = vadd.f32 %v3354, %v2631
        %v3356 = vadd.f32 %v3355, %v2634
        %v3357 = vadd.f32 %v3356, %v2637
        %v3358 = vadd.f32 %v3357, %v2640
        %v3359 = vadd.f32 %v3358, %v2643
        %v3360 = vadd.f32 %v3359, %v2646
        %v3361 = vadd.f32 %v3360, %v2649
        %v3362 = vadd.f32 %v3361, %v2652
        %v3363 = vadd.f32 %v3362, %v2655
        %v3364 = vadd.f32 %v3363, %v2658
        %v3365 = vadd.f32 %v3364, %v2661
        %v3366 = vadd.f32 %v3365, %v2664
        %v3367 = vadd.f32 %v3366, %v2667
        %v3368 = vadd.f32 %v3367, %v2670
        %v3369 = vadd.f32 %v3368, %v2673
        %v3370 = vadd.f32 %v3369, %v2676
        %v3371 = vadd.f32 %v3370, %v2679
        %v3372 = vsel %vm2782, %v2682, 0.0
        %v3373 = vadd.f32 %v3371, %v3372
        %v3374 = vrot.slane %v3373, 4
        %v3375 = vadd.f32 %v3373, %v3374
        %v3376 = vrot.slane %v3375, 2
        %v3377 = vadd.f32 %v3375, %v3376
        %v3378 = vrot.slane %v3377, 1
        %v3379 = vadd.f32 %v3377, %v3378
        %v3380 = vadd.f32 %v2611, %v2614
        %v3381 = vadd.f32 %v3380, %v2617
        %v3382 = vadd.f32 %v3381, %v2620
        %v3383 = vadd.f32 %v3382, %v2623
        %v3384 = vadd.f32 %v3383, %v2626
        %v3385 = vadd.f32 %v3384, %v2629
        %v3386 = vadd.f32 %v3385, %v2632
        %v3387 = vadd.f32 %v3386, %v2635
        %v3388 = vadd.f32 %v3387, %v2638
        %v3389 = vadd.f32 %v3388, %v2641
        %v3390 = vadd.f32 %v3389, %v2644
        %v3391 = vadd.f32 %v3390, %v2647
        %v3392 = vadd.f32 %v3391, %v2650
        %v3393 = vadd.f32 %v3392, %v2653
        %v3394 = vadd.f32 %v3393, %v2656
        %v3395 = vadd.f32 %v3394, %v2659
        %v3396 = vadd.f32 %v3395, %v2662
        %v3397 = vadd.f32 %v3396, %v2665
        %v3398 = vadd.f32 %v3397, %v2668
        %v3399 = vadd.f32 %v3398, %v2671
        %v3400 = vadd.f32 %v3399, %v2674
        %v3401 = vadd.f32 %v3400, %v2677
        %v3402 = vadd.f32 %v3401, %v2680
        %v3403 = vsel %vm2782, %v2683, 0.0
        %v3404 = vadd.f32 %v3402, %v3403
        %v3405 = vrot.slane %v3404, 4
        %v3406 = vadd.f32 %v3404, %v3405
        %v3407 = vrot.slane %v3406, 2
        %v3408 = vadd.f32 %v3406, %v3407
        %v3409 = vrot.slane %v3408, 1
        %v3410 = vadd.f32 %v3408, %v3409
        %v3411 = vadd.f32 %v2684, %v2687
        %v3412 = vadd.f32 %v3411, %v2690
        %v3413 = vadd.f32 %v3412, %v2693
        %v3414 = vadd.f32 %v3413, %v2696
        %v3415 = vadd.f32 %v3414, %v2699
        %v3416 = vadd.f32 %v3415, %v2702
        %v3417 = vadd.f32 %v3416, %v2705
        %v3418 = vadd.f32 %v3417, %v2708
        %v3419 = vadd.f32 %v3418, %v2711
        %v3420 = vadd.f32 %v3419, %v2714
        %v3421 = vadd.f32 %v3420, %v2717
        %v3422 = vadd.f32 %v3421, %v2720
        %v3423 = vadd.f32 %v3422, %v2723
        %v3424 = vadd.f32 %v3423, %v2726
        %v3425 = vadd.f32 %v3424, %v2729
        %v3426 = vadd.f32 %v3425, %v2732
        %v3427 = vadd.f32 %v3426, %v2735
        %v3428 = vadd.f32 %v3427, %v2738
        %v3429 = vadd.f32 %v3428, %v2741
        %v3430 = vadd.f32 %v3429, %v2744
        %v3431 = vadd.f32 %v3430, %v2747
        %v3432 = vadd.f32 %v3431, %v2750
        %v3433 = vadd.f32 %v3432, %v2753
        %v3434 = vsel %vm2782, %v2756, 0.0
        %v3435 = vadd.f32 %v3433, %v3434
        %v3436 = vrot.slane %v3435, 4
        %v3437 = vadd.f32 %v3435, %v3436
        %v3438 = vrot.slane %v3437, 2
        %v3439 = vadd.f32 %v3437, %v3438
        %v3440 = vrot.slane %v3439, 1
        %v3441 = vadd.f32 %v3439, %v3440
        %v3442 = vadd.f32 %v2685, %v2688
        %v3443 = vadd.f32 %v3442, %v2691
        %v3444 = vadd.f32 %v3443, %v2694
        %v3445 = vadd.f32 %v3444, %v2697
        %v3446 = vadd.f32 %v3445, %v2700
        %v3447 = vadd.f32 %v3446, %v2703
        %v3448 = vadd.f32 %v3447, %v2706
        %v3449 = vadd.f32 %v3448, %v2709
        %v3450 = vadd.f32 %v3449, %v2712
        %v3451 = vadd.f32 %v3450, %v2715
        %v3452 = vadd.f32 %v3451, %v2718
        %v3453 = vadd.f32 %v3452, %v2721
        %v3454 = vadd.f32 %v3453, %v2724
        %v3455 = vadd.f32 %v3454, %v2727
        %v3456 = vadd.f32 %v3455, %v2730
        %v3457 = vadd.f32 %v3456, %v2733
        %v3458 = vadd.f32 %v3457, %v2736
        %v3459 = vadd.f32 %v3458, %v2739
        %v3460 = vadd.f32 %v3459, %v2742
        %v3461 = vadd.f32 %v3460, %v2745
        %v3462 = vadd.f32 %v3461, %v2748
        %v3463 = vadd.f32 %v3462, %v2751
        %v3464 = vadd.f32 %v3463, %v2754
        %v3465 = vsel %vm2782, %v2757, 0.0
        %v3466 = vadd.f32 %v3464, %v3465
        %v3467 = vrot.slane %v3466, 4
        %v3468 = vadd.f32 %v3466, %v3467
        %v3469 = vrot.slane %v3468, 2
        %v3470 = vadd.f32 %v3468, %v3469
        %v3471 = vrot.slane %v3470, 1
        %v3472 = vadd.f32 %v3470, %v3471
        %v3473 = vadd.f32 %v2686, %v2689
        %v3474 = vadd.f32 %v3473, %v2692
        %v3475 = vadd.f32 %v3474, %v2695
        %v3476 = vadd.f32 %v3475, %v2698
        %v3477 = vadd.f32 %v3476, %v2701
        %v3478 = vadd.f32 %v3477, %v2704
        %v3479 = vadd.f32 %v3478, %v2707
        %v3480 = vadd.f32 %v3479, %v2710
        %v3481 = vadd.f32 %v3480, %v2713
        %v3482 = vadd.f32 %v3481, %v2716
        %v3483 = vadd.f32 %v3482, %v2719
        %v3484 = vadd.f32 %v3483, %v2722
        %v3485 = vadd.f32 %v3484, %v2725
        %v3486 = vadd.f32 %v3485, %v2728
        %v3487 = vadd.f32 %v3486, %v2731
        %v3488 = vadd.f32 %v3487, %v2734
        %v3489 = vadd.f32 %v3488, %v2737
        %v3490 = vadd.f32 %v3489, %v2740
        %v3491 = vadd.f32 %v3490, %v2743
        %v3492 = vadd.f32 %v3491, %v2746
        %v3493 = vadd.f32 %v3492, %v2749
        %v3494 = vadd.f32 %v3493, %v2752
        %v3495 = vadd.f32 %v3494, %v2755
        %v3496 = vsel %vm2782, %v2758, 0.0
        %v3497 = vadd.f32 %v3495, %v3496
        %v3498 = vrot.slane %v3497, 4
        %v3499 = vadd.f32 %v3497, %v3498
        %v3500 = vrot.slane %v3499, 2
        %v3501 = vadd.f32 %v3499, %v3500
        %v3502 = vrot.slane %v3501, 1
        %v3503 = vadd.f32 %v3501, %v3502
        %v3504 = vld [vmem:[#allocation2] sm:$0x1]
        %v3506 = vperm.slane %v3504, 0
        %3507 = vset.pattern.permute.xlu0 0
        %3508 = vperm.xlu0 %3507, %v3506
        %v3509 = vpop.permute.xlu0 %3508
        %v3511 = vadd.f32 %v2790, %v3509
        %v3512 = vadd.f32 %v2821, %v3509
        %v3513 = vadd.f32 %v2852, %v3509
        %v3514 = vadd.f32 %v2883, %v3509
        %v3515 = vadd.f32 %v2914, %v3509
        %v3516 = vadd.f32 %v2945, %v3509
        %v3517 = vadd.f32 %v2976, %v3509
        %v3518 = vadd.f32 %v3007, %v3509
        %v3519 = vadd.f32 %v3038, %v3509
        %v3520 = vadd.f32 %v3069, %v3509
        %v3521 = vadd.f32 %v3100, %v3509
        %v3522 = vadd.f32 %v3131, %v3509
        %v3523 = vadd.f32 %v3162, %v3509
        %v3524 = vadd.f32 %v3193, %v3509
        %v3525 = vadd.f32 %v3224, %v3509
        %v3526 = vadd.f32 %v3255, %v3509
        %v3527 = vadd.f32 %v3286, %v3509
        %v3528 = vadd.f32 %v3317, %v3509
        %v3529 = vadd.f32 %v3348, %v3509
        %v3530 = vadd.f32 %v3379, %v3509
        %v3531 = vadd.f32 %v3410, %v3509
        %v3532 = vadd.f32 %v3441, %v3509
        %v3533 = vadd.f32 %v3472, %v3509
        %v3534 = vadd.f32 %v3503, %v3509
        %vm3559 = vcmask 1041409
        %v3560 = vsel %vm3559, %v3514, %v3511
        %vm3561 = vcmask 1042434
        %v3562 = vsel %vm3561, %v3517, %v3560
        %vm3563 = vcmask 1043459
        %v3564 = vsel %vm3563, %v3520, %v3562
        %vm3565 = vcmask 1044484
        %v3566 = vsel %vm3565, %v3523, %v3564
        %vm3567 = vcmask 1045509
        %v3568 = vsel %vm3567, %v3526, %v3566
        %vm3569 = vcmask 1046534
        %v3570 = vsel %vm3569, %v3529, %v3568
        %vm3571 = vcmask 1047559
        %v3572 = vsel %vm3571, %v3532, %v3570
        %v3573 = vsel %vm3559, %v3515, %v3512
        %v3574 = vsel %vm3561, %v3518, %v3573
        %v3575 = vsel %vm3563, %v3521, %v3574
        %v3576 = vsel %vm3565, %v3524, %v3575
        %v3577 = vsel %vm3567, %v3527, %v3576
        %v3578 = vsel %vm3569, %v3530, %v3577
        %v3579 = vsel %vm3571, %v3533, %v3578
        %v3580 = vsel %vm3559, %v3516, %v3513
        %v3581 = vsel %vm3561, %v3519, %v3580
        %v3582 = vsel %vm3563, %v3522, %v3581
        %v3583 = vsel %vm3565, %v3525, %v3582
        %v3584 = vsel %vm3567, %v3528, %v3583
        %v3585 = vsel %vm3569, %v3531, %v3584
        %v3586 = vsel %vm3571, %v3534, %v3585
        %3590 = vst [vmem:[%s1406] sm:$0xff] %v3572
        %3591 = vst [vmem:[%s1406 + $0x8] sm:$0xff] %v3579
        %3592 = vst [vmem:[%s1406 + $0x10] sm:$0xff] %v3586
        %s3593 = sand.u32 %s111, 1
        %s3594 = scalar_lea.sflag [#allocation5], %s3593
        %s3595 = sand.u32 %s111, 1
        %s3596 = smul.addr %s3595, 24
        %s3597 = scalar_lea.vmem [#allocation4], %s3596
        // Predicated region
        $region56: #{tpu_custom_call.1} parent=50 // pred_check
          %p3598 = pneg %p121
        $region57: #{tpu_custom_call.1} parent=50 // pred_check_branch
          %3600 = sbr.rel (%p3598) target = $region59
        $region58: #{tpu_custom_call.1} parent=50 // pred_region
          %s3601 = smul.u32 3, %s24
          %3603 = vsyncadd %s3594, 0
          %s3604 = smul.addr %s23, 6
          %s3605 = sadd.s32 %s3601, %s3604
          %s3606 = smul.addr %s3605, 8
          %s3607 = scalar_lea.hbm %s3, %s3606
          %s3609 = sshll.u32 %s3597, 4
          %s3610 = int_to_ptr.vmem [resolvable:$true] %s3609
          %s3611 = sshll.u32 %s3607, 4
          %s3612 = int_to_ptr.hbm [resolvable:$true] %s3611
          %3614 = dma.vmem_to_hbm [thread:$0]  %s3610, 384, %s3612, %s3594
        $region59: #{tpu_custom_call.1} parent=50 // pred_fallthru
          _
      $region51: #{tpu_custom_call.1} parent=5 // pred_fallthru
        _
      %p3615 = scmp.le.s32.totalorder 2, %s14
      // Predicated region
      $region60: #{tpu_custom_call.1} parent=5 // pred_check
        %p3616 = pneg %p3615
      $region61: #{tpu_custom_call.1} parent=5 // pred_check_branch
        %3618 = sbr.rel (%p3616) target = $region63
      $region62: #{tpu_custom_call.1} parent=5 // pred_region
        %s3619 = ssub.s32 %s14, 2
        // Predicated region
        $region64: #{tpu_custom_call.1} parent=62 // pred_check
          %p3620 = pneg %p127
        $region65: #{tpu_custom_call.1} parent=62 // pred_check_branch
          %3622 = sbr.rel (%p3620) target = $region67
        $region66: #{tpu_custom_call.1} parent=62 // pred_region
          %s3623 = sand.u32 %s112, 1
          %s3624 = scalar_lea.sflag [#allocation5], %s3623
          %s3625 = sand.u32 %s112, 1
          %s3626 = smul.addr %s3625, 24
          %s3627 = scalar_lea.vmem [#allocation4], %s3626
          %3629 = dma.done %s3624, 384
        $region67: #{tpu_custom_call.1} parent=62 // pred_fallthru
          _
      $region63: #{tpu_custom_call.1} parent=5 // pred_fallthru
        _
    $region6: #{tpu_custom_call.1} parent=1 // loop_footer
      %s18 = sadd.s32 1, %s14
    $region7: #{tpu_custom_call.1} parent=1 // loop_footer_branch
      %13 = sbr.rel target = $region3
    $region8: #{tpu_custom_call.1} parent=1 // loop_exit
      _
    %3630 = vsyncpa [#allocation5], 1
    %s3631 = scalar_lea.sflag [#allocation5], 1
    %3632 = vsyncpa %s3631, 1

</llo_original>
